<compile_context>
chip_gen: v7x
topology: tpu7x:2x2x1
jax: 0.10.0
libtpu: 0.0.40
codegen_flags: <defaults>
</compile_context>

<pallas_src>
import jax
import jax.numpy as jnp
from jax.experimental import pallas as pl
from jax.experimental.pallas import tpu as pltpu

# Layer widths of the autoencoder: 57 -> ... -> 16 -> ... -> 57
LAYER_DIMS = [57, 256, 128, 64, 32, 16, 32, 64, 128, 256, 57]
N_LAYERS = len(LAYER_DIMS) - 1                      # 10 Linear layers
# Linear layers followed by BatchNorm1d (0-based index into the 10 Linears).
BN_LAYERS = {0, 1, 2, 5, 6, 7, 8}
# Linear layers followed by ReLU; layer 4 has no activation; layer 9 -> Sigmoid.
RELU_LAYERS = {0, 1, 2, 3, 5, 6, 7, 8}
BN_EPS = 1e-5

PAD_IN = 128          # input features padded 57 -> 128 (lane-dense loads)
PAD_OUT = 128         # output features padded 57 -> 128 (lane-dense stores)
BIAS_WIDTH = 256      # widest layer; biases packed into one (10, 256) array
# Dims as seen by the kernel (first/last padded, hidden dims unchanged).
KERNEL_DIMS = [PAD_IN] + LAYER_DIMS[1:-1] + [PAD_OUT]


def autoencoder_kernel(x_ref, *refs):
    """Full encoder+decoder MLP on one batch tile, entirely in VMEM."""
    w_refs = refs[:N_LAYERS]               # bf16 weights, (in_f, out_f)
    b_ref = refs[N_LAYERS]                 # f32 packed biases, (N_LAYERS, 256)
    out_ref = refs[N_LAYERS + 1]           # f32 output, (batch_tile, PAD_OUT)

    biases = b_ref[...]                    # (10, 256) f32, tiny & resident
    h = x_ref[...]                         # (batch_tile, PAD_IN) bf16
    acc = None
    for li in range(N_LAYERS):
        out_f = KERNEL_DIMS[li + 1]
        # Hot path: bf16 x bf16 MXU matmul with f32 accumulation.
        acc = jnp.dot(h, w_refs[li][...], preferred_element_type=jnp.float32)
        acc = acc + biases[li:li + 1, :out_f]        # (1, out_f) f32 bias
        if li in RELU_LAYERS:
            acc = jnp.maximum(acc, 0.0)
        elif li == N_LAYERS - 1:
            acc = jax.nn.sigmoid(acc)                # final Sigmoid (EUP)
        # (layer 4: encoder output, no activation; Dropout is identity in eval)
        if li < N_LAYERS - 1:
            h = acc.astype(jnp.bfloat16)             # bf16 operands for MXU
    out_ref[...] = acc.astype(out_ref.dtype)


def autoencoder_forward(x, weights, bias_pack, *, batch_tile=256):
    """x: (B, 57) float; weights[i]: (KERNEL_DIMS[i], KERNEL_DIMS[i+1]) bf16
    (BN folded, zero-padded); bias_pack: (N_LAYERS, 256) f32 (BN folded)."""
    B, F_in = x.shape
    assert F_in == LAYER_DIMS[0]
    assert batch_tile % 16 == 0            # bf16 sublane packing alignment

    n_tiles = pl.cdiv(B, batch_tile)
    B_pad = n_tiles * batch_tile
    # Zero-pad batch to a tile multiple and features to PAD_IN; cast to bf16.
    xp = jnp.pad(x.astype(jnp.bfloat16), ((0, B_pad - B), (0, PAD_IN - F_in)))

    grid = (n_tiles,)
    in_specs = [pl.BlockSpec((batch_tile, PAD_IN), lambda i: (i, 0))]
    # Weights: full-array blocks, resident for every grid step.
    for li in range(N_LAYERS):
        in_f, out_f = KERNEL_DIMS[li], KERNEL_DIMS[li + 1]
        in_specs.append(pl.BlockSpec((in_f, out_f), lambda i: (0, 0)))
    # Single packed bias array.
    in_specs.append(pl.BlockSpec((N_LAYERS, BIAS_WIDTH), lambda i: (0, 0)))

    out_spec = pl.BlockSpec((batch_tile, PAD_OUT), lambda i: (i, 0))

    flops = 2 * B_pad * sum(KERNEL_DIMS[i] * KERNEL_DIMS[i + 1]
                            for i in range(N_LAYERS))
    transcendentals = B_pad * PAD_OUT                       # final sigmoid
    bytes_accessed = (xp.size * 2 + B_pad * PAD_OUT * 4
                      + sum(int(w.size) * 2 for w in weights)
                      + int(bias_pack.size) * 4)

    out_padded = pl.pallas_call(
        autoencoder_kernel,
        out_shape=jax.ShapeDtypeStruct((B_pad, PAD_OUT), jnp.float32),
        grid_spec=pltpu.PrefetchScalarGridSpec(
            num_scalar_prefetch=0,
            grid=grid,
            in_specs=in_specs,
            out_specs=out_spec,
        ),
        compiler_params=pltpu.CompilerParams(
            dimension_semantics=("parallel",),
        ),
        cost_estimate=pl.CostEstimate(
            flops=flops,
            transcendentals=transcendentals,
            bytes_accessed=bytes_accessed,
        ),
    )(xp, *weights, bias_pack)

    return out_padded[:B, :LAYER_DIMS[-1]]


def init_params(key):
    """Deterministic init mirroring the PyTorch module's shapes. Returns
    kernel-ready (bf16, padded) weights + packed f32 biases, and unpadded f32
    reference weights/biases (both BN-folded, eval mode)."""
    kernel_weights, ref_weights, ref_biases = [], [], []
    bias_pack = jnp.zeros((N_LAYERS, BIAS_WIDTH), jnp.float32)
    for li in range(N_LAYERS):
        in_f, out_f = LAYER_DIMS[li], LAYER_DIMS[li + 1]
        key, kw, kb, kg, kbe, km, kv = jax.random.split(key, 7)
        bound = 1.0 / jnp.sqrt(in_f)
        # PyTorch Linear stores W as (out_f, in_f); y = x @ W.T + b
        W = jax.random.uniform(kw, (out_f, in_f), jnp.float32, -bound, bound)
        b = jax.random.uniform(kb, (out_f,), jnp.float32, -bound, bound)
        W_k = W.T                      # compute layout: (in_f, out_f)
        b_k = b
        if li in BN_LAYERS:
            gamma = jax.random.uniform(kg, (out_f,), jnp.float32, 0.5, 1.5)
            beta = jax.random.uniform(kbe, (out_f,), jnp.float32, -0.1, 0.1)
            run_mean = 0.1 * jax.random.normal(km, (out_f,), jnp.float32)
            run_var = jax.random.uniform(kv, (out_f,), jnp.float32, 0.5, 1.5)
            scale = gamma / jnp.sqrt(run_var + BN_EPS)
            # BN(x@Wt+b) = (x@Wt + b - mean)*scale + beta  (eval mode, exact)
            W_k = W_k * scale[None, :]
            b_k = (b - run_mean) * scale + beta
        ref_weights.append(W_k)
        ref_biases.append(b_k)
        # Kernel layout: zero-pad first layer's K dim and last layer's N dim.
        kin, kout = KERNEL_DIMS[li], KERNEL_DIMS[li + 1]
        W_pad = jnp.zeros((kin, kout), jnp.float32).at[:in_f, :out_f].set(W_k)
        kernel_weights.append(W_pad.astype(jnp.bfloat16))
        bias_pack = bias_pack.at[li, :out_f].set(b_k)
    return kernel_weights, bias_pack, ref_weights, ref_biases


def reference_forward(x, ref_weights, ref_biases):
    """Pure-JAX reference using the same bf16-MXU / f32-elementwise recipe."""
    h = x.astype(jnp.bfloat16)
    acc = None
    for li in range(N_LAYERS):
        acc = jnp.dot(h, ref_weights[li].astype(jnp.bfloat16),
                      preferred_element_type=jnp.float32)
        acc = acc + ref_biases[li]
        if li in RELU_LAYERS:
            acc = jnp.maximum(acc, 0.0)
        elif li == N_LAYERS - 1:
            acc = jax.nn.sigmoid(acc)
        h = acc.astype(jnp.bfloat16)
    return acc


if __name__ == "__main__":
    key = jax.random.PRNGKey(0)
    key, kx, kp = jax.random.split(key, 3)

    B = 512                                 # 2 grid steps of 256 rows each
    x = jax.random.normal(kx, (B, LAYER_DIMS[0]), jnp.float32)
    kernel_weights, bias_pack, ref_weights, ref_biases = init_params(kp)

    out = autoencoder_forward(x, kernel_weights, bias_pack, batch_tile=256)
    out = jax.block_until_ready(out)

    ref = reference_forward(x, ref_weights, ref_biases)
    assert out.shape == (B, LAYER_DIMS[-1])
    assert jnp.allclose(out, ref, atol=2e-3, rtol=2e-2), (
        "mismatch vs JAX reference: max abs err = %s"
        % float(jnp.max(jnp.abs(out - ref))))

    print("KERNEL_OK")
</pallas_src>

<mosaic_0001>
module attributes {stable_mosaic.version = 11 : i64} {
  func.func @autoencoder_kernel(%arg0: i32, %arg1: memref<256x128xbf16, #tpu.memory_space<vmem>>, %arg2: memref<128x256xbf16, #tpu.memory_space<vmem>>, %arg3: memref<256x128xbf16, #tpu.memory_space<vmem>>, %arg4: memref<128x64xbf16, #tpu.memory_space<vmem>>, %arg5: memref<64x32xbf16, #tpu.memory_space<vmem>>, %arg6: memref<32x16xbf16, #tpu.memory_space<vmem>>, %arg7: memref<16x32xbf16, #tpu.memory_space<vmem>>, %arg8: memref<32x64xbf16, #tpu.memory_space<vmem>>, %arg9: memref<64x128xbf16, #tpu.memory_space<vmem>>, %arg10: memref<128x256xbf16, #tpu.memory_space<vmem>>, %arg11: memref<256x128xbf16, #tpu.memory_space<vmem>>, %arg12: memref<10x256xf32, #tpu.memory_space<vmem>>, %arg13: memref<256x128xf32, #tpu.memory_space<vmem>>) attributes {dimension_semantics = [#tpu.dimension_semantics<parallel>], iteration_bounds = array<i64: 2>, scalar_prefetch = 0 : i64, scratch_operands = 0 : i64, tpu.core_type = #tpu.core_type<tc>, window_params = [{transform_indices = @transform_0, window_bounds = array<i64: 256, 128>}, {pipeline_mode = #tpu.pipeline_mode<synchronous>, transform_indices = @transform_1, window_bounds = array<i64: 128, 256>}, {pipeline_mode = #tpu.pipeline_mode<synchronous>, transform_indices = @transform_2, window_bounds = array<i64: 256, 128>}, {pipeline_mode = #tpu.pipeline_mode<synchronous>, transform_indices = @transform_3, window_bounds = array<i64: 128, 64>}, {pipeline_mode = #tpu.pipeline_mode<synchronous>, transform_indices = @transform_4, window_bounds = array<i64: 64, 32>}, {pipeline_mode = #tpu.pipeline_mode<synchronous>, transform_indices = @transform_5, window_bounds = array<i64: 32, 16>}, {pipeline_mode = #tpu.pipeline_mode<synchronous>, transform_indices = @transform_6, window_bounds = array<i64: 16, 32>}, {pipeline_mode = #tpu.pipeline_mode<synchronous>, transform_indices = @transform_7, window_bounds = array<i64: 32, 64>}, {pipeline_mode = #tpu.pipeline_mode<synchronous>, transform_indices = @transform_8, window_bounds = array<i64: 64, 128>}, {pipeline_mode = #tpu.pipeline_mode<synchronous>, transform_indices = @transform_9, window_bounds = array<i64: 128, 256>}, {pipeline_mode = #tpu.pipeline_mode<synchronous>, transform_indices = @transform_10, window_bounds = array<i64: 256, 128>}, {pipeline_mode = #tpu.pipeline_mode<synchronous>, transform_indices = @transform_11, window_bounds = array<i64: 10, 256>}, {transform_indices = @transform_12, window_bounds = array<i64: 256, 128>}]} {
    %c0 = arith.constant 0 : index
    %c0_0 = arith.constant 0 : index
    %0 = vector.load %arg12[%c0, %c0_0] : memref<10x256xf32, #tpu.memory_space<vmem>>, vector<10x256xf32>
    %c0_1 = arith.constant 0 : index
    %c0_2 = arith.constant 0 : index
    %1 = vector.load %arg1[%c0_1, %c0_2] : memref<256x128xbf16, #tpu.memory_space<vmem>>, vector<256x128xbf16>
    %c0_3 = arith.constant 0 : index
    %c0_4 = arith.constant 0 : index
    %2 = vector.load %arg2[%c0_3, %c0_4] : memref<128x256xbf16, #tpu.memory_space<vmem>>, vector<128x256xbf16>
    %cst = arith.constant dense<0.000000e+00> : vector<256x256xf32>
    %3 = tpu.matmul %1, %2, %cst {dimension_numbers = #tpu.dot_dimension_numbers<[1], [0], [0], [1], [0, 0, 1, 1], [], []>} : vector<256x128xbf16>, vector<128x256xbf16>, vector<256x256xf32> -> vector<256x256xf32>
    %4 = vector.extract_strided_slice %0 {offsets = [0, 0], sizes = [1, 256], strides = [1, 1]} : vector<10x256xf32> to vector<1x256xf32>
    %5 = vector.broadcast %4 : vector<1x256xf32> to vector<256x256xf32>
    %6 = arith.addf %3, %5 : vector<256x256xf32>
    %cst_5 = arith.constant 0.000000e+00 : f32
    %7 = vector.broadcast %cst_5 : f32 to vector<256x256xf32>
    %8 = arith.maximumf %6, %7 : vector<256x256xf32>
    %9 = arith.truncf %8 : vector<256x256xf32> to vector<256x256xbf16>
    %c0_6 = arith.constant 0 : index
    %c0_7 = arith.constant 0 : index
    %10 = vector.load %arg3[%c0_6, %c0_7] : memref<256x128xbf16, #tpu.memory_space<vmem>>, vector<256x128xbf16>
    %cst_8 = arith.constant dense<0.000000e+00> : vector<256x128xf32>
    %11 = tpu.matmul %9, %10, %cst_8 {dimension_numbers = #tpu.dot_dimension_numbers<[1], [0], [0], [1], [0, 0, 1, 1], [], []>} : vector<256x256xbf16>, vector<256x128xbf16>, vector<256x128xf32> -> vector<256x128xf32>
    %12 = vector.extract_strided_slice %0 {offsets = [1, 0], sizes = [1, 128], strides = [1, 1]} : vector<10x256xf32> to vector<1x128xf32>
    %13 = vector.broadcast %12 : vector<1x128xf32> to vector<256x128xf32>
    %14 = arith.addf %11, %13 : vector<256x128xf32>
    %cst_9 = arith.constant 0.000000e+00 : f32
    %15 = vector.broadcast %cst_9 : f32 to vector<256x128xf32>
    %16 = arith.maximumf %14, %15 : vector<256x128xf32>
    %17 = arith.truncf %16 : vector<256x128xf32> to vector<256x128xbf16>
    %c0_10 = arith.constant 0 : index
    %c0_11 = arith.constant 0 : index
    %18 = vector.load %arg4[%c0_10, %c0_11] : memref<128x64xbf16, #tpu.memory_space<vmem>>, vector<128x64xbf16>
    %cst_12 = arith.constant dense<0.000000e+00> : vector<256x64xf32>
    %19 = tpu.matmul %17, %18, %cst_12 {dimension_numbers = #tpu.dot_dimension_numbers<[1], [0], [0], [1], [0, 0, 1, 1], [], []>} : vector<256x128xbf16>, vector<128x64xbf16>, vector<256x64xf32> -> vector<256x64xf32>
    %20 = vector.extract_strided_slice %0 {offsets = [2, 0], sizes = [1, 64], strides = [1, 1]} : vector<10x256xf32> to vector<1x64xf32>
    %21 = vector.broadcast %20 : vector<1x64xf32> to vector<256x64xf32>
    %22 = arith.addf %19, %21 : vector<256x64xf32>
    %cst_13 = arith.constant 0.000000e+00 : f32
    %23 = vector.broadcast %cst_13 : f32 to vector<256x64xf32>
    %24 = arith.maximumf %22, %23 : vector<256x64xf32>
    %25 = arith.truncf %24 : vector<256x64xf32> to vector<256x64xbf16>
    %c0_14 = arith.constant 0 : index
    %c0_15 = arith.constant 0 : index
    %26 = vector.load %arg5[%c0_14, %c0_15] : memref<64x32xbf16, #tpu.memory_space<vmem>>, vector<64x32xbf16>
    %cst_16 = arith.constant dense<0.000000e+00> : vector<256x32xf32>
    %27 = tpu.matmul %25, %26, %cst_16 {dimension_numbers = #tpu.dot_dimension_numbers<[1], [0], [0], [1], [0, 0, 1, 1], [], []>} : vector<256x64xbf16>, vector<64x32xbf16>, vector<256x32xf32> -> vector<256x32xf32>
    %28 = vector.extract_strided_slice %0 {offsets = [3, 0], sizes = [1, 32], strides = [1, 1]} : vector<10x256xf32> to vector<1x32xf32>
    %29 = vector.broadcast %28 : vector<1x32xf32> to vector<256x32xf32>
    %30 = arith.addf %27, %29 : vector<256x32xf32>
    %cst_17 = arith.constant 0.000000e+00 : f32
    %31 = vector.broadcast %cst_17 : f32 to vector<256x32xf32>
    %32 = arith.maximumf %30, %31 : vector<256x32xf32>
    %33 = arith.truncf %32 : vector<256x32xf32> to vector<256x32xbf16>
    %c0_18 = arith.constant 0 : index
    %c0_19 = arith.constant 0 : index
    %34 = vector.load %arg6[%c0_18, %c0_19] : memref<32x16xbf16, #tpu.memory_space<vmem>>, vector<32x16xbf16>
    %cst_20 = arith.constant dense<0.000000e+00> : vector<256x16xf32>
    %35 = tpu.matmul %33, %34, %cst_20 {dimension_numbers = #tpu.dot_dimension_numbers<[1], [0], [0], [1], [0, 0, 1, 1], [], []>} : vector<256x32xbf16>, vector<32x16xbf16>, vector<256x16xf32> -> vector<256x16xf32>
    %36 = vector.extract_strided_slice %0 {offsets = [4, 0], sizes = [1, 16], strides = [1, 1]} : vector<10x256xf32> to vector<1x16xf32>
    %37 = vector.broadcast %36 : vector<1x16xf32> to vector<256x16xf32>
    %38 = arith.addf %35, %37 : vector<256x16xf32>
    %39 = arith.truncf %38 : vector<256x16xf32> to vector<256x16xbf16>
    %c0_21 = arith.constant 0 : index
    %c0_22 = arith.constant 0 : index
    %40 = vector.load %arg7[%c0_21, %c0_22] : memref<16x32xbf16, #tpu.memory_space<vmem>>, vector<16x32xbf16>
    %cst_23 = arith.constant dense<0.000000e+00> : vector<256x32xf32>
    %41 = tpu.matmul %39, %40, %cst_23 {dimension_numbers = #tpu.dot_dimension_numbers<[1], [0], [0], [1], [0, 0, 1, 1], [], []>} : vector<256x16xbf16>, vector<16x32xbf16>, vector<256x32xf32> -> vector<256x32xf32>
    %42 = vector.extract_strided_slice %0 {offsets = [5, 0], sizes = [1, 32], strides = [1, 1]} : vector<10x256xf32> to vector<1x32xf32>
    %43 = vector.broadcast %42 : vector<1x32xf32> to vector<256x32xf32>
    %44 = arith.addf %41, %43 : vector<256x32xf32>
    %cst_24 = arith.constant 0.000000e+00 : f32
    %45 = vector.broadcast %cst_24 : f32 to vector<256x32xf32>
    %46 = arith.maximumf %44, %45 : vector<256x32xf32>
    %47 = arith.truncf %46 : vector<256x32xf32> to vector<256x32xbf16>
    %c0_25 = arith.constant 0 : index
    %c0_26 = arith.constant 0 : index
    %48 = vector.load %arg8[%c0_25, %c0_26] : memref<32x64xbf16, #tpu.memory_space<vmem>>, vector<32x64xbf16>
    %cst_27 = arith.constant dense<0.000000e+00> : vector<256x64xf32>
    %49 = tpu.matmul %47, %48, %cst_27 {dimension_numbers = #tpu.dot_dimension_numbers<[1], [0], [0], [1], [0, 0, 1, 1], [], []>} : vector<256x32xbf16>, vector<32x64xbf16>, vector<256x64xf32> -> vector<256x64xf32>
    %50 = vector.extract_strided_slice %0 {offsets = [6, 0], sizes = [1, 64], strides = [1, 1]} : vector<10x256xf32> to vector<1x64xf32>
    %51 = vector.broadcast %50 : vector<1x64xf32> to vector<256x64xf32>
    %52 = arith.addf %49, %51 : vector<256x64xf32>
    %cst_28 = arith.constant 0.000000e+00 : f32
    %53 = vector.broadcast %cst_28 : f32 to vector<256x64xf32>
    %54 = arith.maximumf %52, %53 : vector<256x64xf32>
    %55 = arith.truncf %54 : vector<256x64xf32> to vector<256x64xbf16>
    %c0_29 = arith.constant 0 : index
    %c0_30 = arith.constant 0 : index
    %56 = vector.load %arg9[%c0_29, %c0_30] : memref<64x128xbf16, #tpu.memory_space<vmem>>, vector<64x128xbf16>
    %cst_31 = arith.constant dense<0.000000e+00> : vector<256x128xf32>
    %57 = tpu.matmul %55, %56, %cst_31 {dimension_numbers = #tpu.dot_dimension_numbers<[1], [0], [0], [1], [0, 0, 1, 1], [], []>} : vector<256x64xbf16>, vector<64x128xbf16>, vector<256x128xf32> -> vector<256x128xf32>
    %58 = vector.extract_strided_slice %0 {offsets = [7, 0], sizes = [1, 128], strides = [1, 1]} : vector<10x256xf32> to vector<1x128xf32>
    %59 = vector.broadcast %58 : vector<1x128xf32> to vector<256x128xf32>
    %60 = arith.addf %57, %59 : vector<256x128xf32>
    %cst_32 = arith.constant 0.000000e+00 : f32
    %61 = vector.broadcast %cst_32 : f32 to vector<256x128xf32>
    %62 = arith.maximumf %60, %61 : vector<256x128xf32>
    %63 = arith.truncf %62 : vector<256x128xf32> to vector<256x128xbf16>
    %c0_33 = arith.constant 0 : index
    %c0_34 = arith.constant 0 : index
    %64 = vector.load %arg10[%c0_33, %c0_34] : memref<128x256xbf16, #tpu.memory_space<vmem>>, vector<128x256xbf16>
    %cst_35 = arith.constant dense<0.000000e+00> : vector<256x256xf32>
    %65 = tpu.matmul %63, %64, %cst_35 {dimension_numbers = #tpu.dot_dimension_numbers<[1], [0], [0], [1], [0, 0, 1, 1], [], []>} : vector<256x128xbf16>, vector<128x256xbf16>, vector<256x256xf32> -> vector<256x256xf32>
    %66 = vector.extract_strided_slice %0 {offsets = [8, 0], sizes = [1, 256], strides = [1, 1]} : vector<10x256xf32> to vector<1x256xf32>
    %67 = vector.broadcast %66 : vector<1x256xf32> to vector<256x256xf32>
    %68 = arith.addf %65, %67 : vector<256x256xf32>
    %cst_36 = arith.constant 0.000000e+00 : f32
    %69 = vector.broadcast %cst_36 : f32 to vector<256x256xf32>
    %70 = arith.maximumf %68, %69 : vector<256x256xf32>
    %71 = arith.truncf %70 : vector<256x256xf32> to vector<256x256xbf16>
    %c0_37 = arith.constant 0 : index
    %c0_38 = arith.constant 0 : index
    %72 = vector.load %arg11[%c0_37, %c0_38] : memref<256x128xbf16, #tpu.memory_space<vmem>>, vector<256x128xbf16>
    %cst_39 = arith.constant dense<0.000000e+00> : vector<256x128xf32>
    %73 = tpu.matmul %71, %72, %cst_39 {dimension_numbers = #tpu.dot_dimension_numbers<[1], [0], [0], [1], [0, 0, 1, 1], [], []>} : vector<256x256xbf16>, vector<256x128xbf16>, vector<256x128xf32> -> vector<256x128xf32>
    %74 = vector.extract_strided_slice %0 {offsets = [9, 0], sizes = [1, 128], strides = [1, 1]} : vector<10x256xf32> to vector<1x128xf32>
    %75 = vector.broadcast %74 : vector<1x128xf32> to vector<256x128xf32>
    %76 = arith.addf %73, %75 : vector<256x128xf32>
    %77 = arith.negf %76 : vector<256x128xf32>
    %78 = math.exp %77 : vector<256x128xf32>
    %cst_40 = arith.constant 1.000000e+00 : f32
    %79 = vector.broadcast %cst_40 : f32 to vector<256x128xf32>
    %80 = arith.addf %79, %78 : vector<256x128xf32>
    %81 = arith.divf %79, %80 : vector<256x128xf32>
    %c0_41 = arith.constant 0 : index
    %c0_42 = arith.constant 0 : index
    %82 = vector.load %arg13[%c0_41, %c0_42] : memref<256x128xf32, #tpu.memory_space<vmem>>, vector<256x128xf32>
    tpu.vector_store %arg13[%c0_41, %c0_42], %81 {strides = array<i32>} : memref<256x128xf32, #tpu.memory_space<vmem>>, vector<256x128xf32>,
    return
  }
  func.func @transform_0(%arg0: i32) -> (i32, i32) {
    %c0_i32 = arith.constant 0 : i32
    %c0_i32_0 = arith.constant 0 : i32
    return %arg0, %c0_i32 : i32, i32
  }
  func.func @transform_1(%arg0: i32) -> (i32, i32) {
    %c0_i32 = arith.constant 0 : i32
    %c0_i32_0 = arith.constant 0 : i32
    %c0_i32_1 = arith.constant 0 : i32
    return %c0_i32, %c0_i32_0 : i32, i32
  }
  func.func @transform_2(%arg0: i32) -> (i32, i32) {
    %c0_i32 = arith.constant 0 : i32
    %c0_i32_0 = arith.constant 0 : i32
    %c0_i32_1 = arith.constant 0 : i32
    return %c0_i32, %c0_i32_0 : i32, i32
  }
  func.func @transform_3(%arg0: i32) -> (i32, i32) {
    %c0_i32 = arith.constant 0 : i32
    %c0_i32_0 = arith.constant 0 : i32
    %c0_i32_1 = arith.constant 0 : i32
    return %c0_i32, %c0_i32_0 : i32, i32
  }
  func.func @transform_4(%arg0: i32) -> (i32, i32) {
    %c0_i32 = arith.constant 0 : i32
    %c0_i32_0 = arith.constant 0 : i32
    %c0_i32_1 = arith.constant 0 : i32
    return %c0_i32, %c0_i32_0 : i32, i32
  }
  func.func @transform_5(%arg0: i32) -> (i32, i32) {
    %c0_i32 = arith.constant 0 : i32
    %c0_i32_0 = arith.constant 0 : i32
    %c0_i32_1 = arith.constant 0 : i32
    return %c0_i32, %c0_i32_0 : i32, i32
  }
  func.func @transform_6(%arg0: i32) -> (i32, i32) {
    %c0_i32 = arith.constant 0 : i32
    %c0_i32_0 = arith.constant 0 : i32
    %c0_i32_1 = arith.constant 0 : i32
    return %c0_i32, %c0_i32_0 : i32, i32
  }
  func.func @transform_7(%arg0: i32) -> (i32, i32) {
    %c0_i32 = arith.constant 0 : i32
    %c0_i32_0 = arith.constant 0 : i32
    %c0_i32_1 = arith.constant 0 : i32
    return %c0_i32, %c0_i32_0 : i32, i32
  }
  func.func @transform_8(%arg0: i32) -> (i32, i32) {
    %c0_i32 = arith.constant 0 : i32
    %c0_i32_0 = arith.constant 0 : i32
    %c0_i32_1 = arith.constant 0 : i32
    return %c0_i32, %c0_i32_0 : i32, i32
  }
  func.func @transform_9(%arg0: i32) -> (i32, i32) {
    %c0_i32 = arith.constant 0 : i32
    %c0_i32_0 = arith.constant 0 : i32
    %c0_i32_1 = arith.constant 0 : i32
    return %c0_i32, %c0_i32_0 : i32, i32
  }
  func.func @transform_10(%arg0: i32) -> (i32, i32) {
    %c0_i32 = arith.constant 0 : i32
    %c0_i32_0 = arith.constant 0 : i32
    %c0_i32_1 = arith.constant 0 : i32
    return %c0_i32, %c0_i32_0 : i32, i32
  }
  func.func @transform_11(%arg0: i32) -> (i32, i32) {
    %c0_i32 = arith.constant 0 : i32
    %c0_i32_0 = arith.constant 0 : i32
    %c0_i32_1 = arith.constant 0 : i32
    return %c0_i32, %c0_i32_0 : i32, i32
  }
  func.func @transform_12(%arg0: i32) -> (i32, i32) {
    %c0_i32 = arith.constant 0 : i32
    %c0_i32_0 = arith.constant 0 : i32
    return %arg0, %c0_i32 : i32, i32
  }
}

</mosaic_0001>

<llo_original>
// kernel: tpu_custom_call.1
$region0: #{tpu_custom_call.1}
  #allocation0 [shape = 'u32[]', space=smem, size = 0x4, offset = 0x4, fixed_abs, tag = 'smem constant byte address 0x4 - core index']
  #allocation1 [shape = 'u32[144,128]{1,0:T(1,128)}', space=vmem, size = 0x12000, scoped, tag = 'internal scratch']
  %s0 = inlined_call_operand.hbm [shape: bf16[512,128], index: 0, kind: input, shape index: {}]
  %s1 = inlined_call_operand.vmem [shape: bf16[128,256], index: 1, kind: input, shape index: {}]
  %s2 = inlined_call_operand.hbm [shape: bf16[256,128], index: 2, kind: input, shape index: {}]
  %s3 = inlined_call_operand.vmem [shape: bf16[128,64], index: 3, kind: input, shape index: {}]
  %s4 = inlined_call_operand.vmem [shape: bf16[64,32], index: 4, kind: input, shape index: {}]
  %s5 = inlined_call_operand.vmem [shape: bf16[32,16], index: 5, kind: input, shape index: {}]
  %s6 = inlined_call_operand.hbm [shape: bf16[16,32], index: 6, kind: input, shape index: {}]
  %s7 = inlined_call_operand.hbm [shape: bf16[32,64], index: 7, kind: input, shape index: {}]
  %s8 = inlined_call_operand.vmem [shape: bf16[64,128], index: 8, kind: input, shape index: {}]
  %s9 = inlined_call_operand.hbm [shape: bf16[128,256], index: 9, kind: input, shape index: {}]
  %s10 = inlined_call_operand.hbm [shape: bf16[256,128], index: 10, kind: input, shape index: {}]
  %s11 = inlined_call_operand.hbm [shape: f32[10,256], index: 11, kind: input, shape index: {}]
  %s12 = inlined_call_operand.hbm [shape: f32[512,128], index: 12, kind: output, shape index: {}]
  %s13 = sld [smem:[#allocation0]]
  $region109: #{tpu_custom_call.1} parent=0
    _
  %s15 = ssub.s32 1, %s13
  %s16 = scalar_select 0, %s15, %s13
  $region1: #{tpu_custom_call.1} parent=0
    #allocation2 [shape = 'u8[131072]{0}', space=vmem, size = 0x20000, scoped, tag = 'input window, operand 0']
    #allocation3 [shape = 's32[2]{0}', space=sflag, size = 0x8, scoped, tag = 'scoped memory for tpu_custom_call.1']
    #allocation4 [shape = 's32[2]{0}', space=sflag, size = 0x8, scoped, tag = 'scoped memory for tpu_custom_call.1']
    #allocation5 [shape = 'u8[65536]{0}', space=vmem, size = 0x10000, scoped, tag = 'input window, operand 2, single buffered']
    #allocation6 [shape = 's32[1]{0}', space=sflag, size = 0x4, scoped, tag = 'scoped memory for tpu_custom_call.1']
    #allocation7 [shape = 'u8[4096]{0}', space=vmem, size = 0x1000, scoped, tag = 'input window, operand 6, single buffered']
    #allocation8 [shape = 'u8[8192]{0}', space=vmem, size = 0x2000, scoped, tag = 'input window, operand 7, single buffered']
    #allocation9 [shape = 's32[1]{0}', space=sflag, size = 0x4, scoped, tag = 'scoped memory for tpu_custom_call.1']
    #allocation10 [shape = 'u8[65536]{0}', space=vmem, size = 0x10000, scoped, tag = 'input window, operand 9, single buffered']
    #allocation11 [shape = 'u8[65536]{0}', space=vmem, size = 0x10000, scoped, tag = 'input window, operand 10, single buffered']
    #allocation12 [shape = 's32[1]{0}', space=sflag, size = 0x4, scoped, tag = 'scoped memory for tpu_custom_call.1']
    #allocation13 [shape = 'u8[16384]{0}', space=vmem, size = 0x4000, scoped, tag = 'input window, operand 11, single buffered']
    #allocation14 [shape = 'u8[262144]{0}', space=vmem, size = 0x40000, scoped, tag = 'output window, operand 0']
    %17 = vsyncpa [#allocation3], 0
    %s18 = scalar_lea.sflag [#allocation3], 1
    %19 = vsyncpa %s18, 0
    %20 = vsyncpa [#allocation6], 0
    %21 = vsyncpa [#allocation9], 0
    %22 = vsyncpa [#allocation12], 0
    %23 = vsyncpa [#allocation4], 0
    %s24 = scalar_lea.sflag [#allocation4], 1
    %25 = vsyncpa %s24, 0
    loop: start=0, step=1, limit=4
    $region2: #{tpu_custom_call.1} parent=1 // loop_pre_header
      _
    $region3: #{tpu_custom_call.1} parent=1 // loop_header
      %s27 = sphi 0, %s31
      %p28 = scmp.ge.s32.totalorder %s27, 4
      %s37 = sphi 0, %s39
      %s40 = sphi 0, %s37
      %s41 = sphi 0, %s40
      %s57 = sphi 0, %s41
      %s61 = sphi 0, %s61
      %s63 = sphi 0, %s61
      %s64 = sphi 0, %s63
      %s78 = sphi 0, %s64
      %s82 = sphi 0, %s82
      %s84 = sphi 0, %s82
      %s85 = sphi 0, %s84
      %s99 = sphi 0, %s85
      %s103 = sphi 0, %s103
      %s105 = sphi 0, %s103
      %s106 = sphi 0, %s105
      %s120 = sphi 0, %s106
      %s124 = sphi 0, %s124
      %s126 = sphi 0, %s124
      %s127 = sphi 0, %s126
      %s141 = sphi 0, %s127
      %s145 = sphi 0, %s145
      %s147 = sphi 0, %s145
      %s148 = sphi 0, %s147
      %s162 = sphi 0, %s148
      %s166 = sphi 0, %s166
      %s168 = sphi 0, %s166
      %s169 = sphi 0, %s168
      %s183 = sphi 0, %s169
      %s187 = sphi 0, %s187
      %s189 = sphi 0, %s187
      %s190 = sphi 0, %s189
      %s204 = sphi 0, %s190
      %s208 = sphi 0, %s208
      %s210 = sphi 0, %s208
      %s211 = sphi 0, %s210
      %s225 = sphi 0, %s211
      %s229 = sphi 0, %s229
      %s231 = sphi 0, %s229
      %s232 = sphi 0, %s231
      %s246 = sphi 0, %s232
      %s250 = sphi 0, %s250
      %s252 = sphi 0, %s250
      %s253 = sphi 0, %s252
      %s267 = sphi 0, %s253
      %s271 = sphi 0, %s271
      %s273 = sphi 0, %s271
      %s274 = sphi 0, %s273
      %s288 = sphi 0, %s274
      %s294 = sphi 0, %s296
      %s297 = sphi 0, %s294
      %s298 = sphi 0, %s297
      %s314 = sphi 0, %s298
    $region4: #{tpu_custom_call.1} parent=1 // loop_header_branch
      %30 = sbr.rel (%p28) target = $region8
    $region5: #{tpu_custom_call.1} parent=1 // loop_body
      %s32 = ssub.s32 %s27, 1
      %s33 = ssub.s32 %s27, 2
      %s34 = sadd.s32 %s27, 1
      %s35 = ssub.s32 %s27, %s34
      %p36 = scmp.eq.s32.totalorder %s35, 0
      %s38 = sadd.s32 %s37, 1
      %s39 = scalar_select %p36, %s37, %s38
      %p42 = pneg %p36
      %p43 = scmp.eq.s32.totalorder %s27, 1
      %p44 = por %p42, %p43
      %p45 = scmp.ne.s32.totalorder %s37, %s40
      %p46 = scmp.eq.s32.totalorder %s27, 0
      %p47 = por %p45, %p46
      %p48 = scmp.ne.s32.totalorder %s37, %s40
      %p49 = scmp.eq.s32.totalorder %s32, 1
      %p50 = por %p48, %p49
      %p51 = scmp.ne.s32.totalorder %s40, %s41
      %p52 = scmp.eq.s32.totalorder %s32, 0
      %p53 = por %p51, %p52
      %p54 = scmp.ne.s32.totalorder %s40, %s41
      %p55 = scmp.eq.s32.totalorder %s33, 1
      %p56 = por %p54, %p55
      %p58 = scmp.ne.s32.totalorder %s41, %s57
      %p59 = scmp.eq.s32.totalorder %s33, 0
      %p60 = por %p58, %p59
      %s62 = sadd.s32 %s61, 1
      %p65 = scmp.eq.s32.totalorder %s27, 1
      %p66 = scmp.ne.s32.totalorder %s61, %s63
      %p67 = scmp.eq.s32.totalorder %s27, 0
      %p68 = por %p66, %p67
      %p69 = scmp.ne.s32.totalorder %s61, %s63
      %p70 = scmp.eq.s32.totalorder %s32, 1
      %p71 = por %p69, %p70
      %p72 = scmp.ne.s32.totalorder %s63, %s64
      %p73 = scmp.eq.s32.totalorder %s32, 0
      %p74 = por %p72, %p73
      %p75 = scmp.ne.s32.totalorder %s63, %s64
      %p76 = scmp.eq.s32.totalorder %s33, 1
      %p77 = por %p75, %p76
      %p79 = scmp.ne.s32.totalorder %s64, %s78
      %p80 = scmp.eq.s32.totalorder %s33, 0
      %p81 = por %p79, %p80
      %s83 = sadd.s32 %s82, 1
      %p86 = scmp.eq.s32.totalorder %s27, 1
      %p87 = scmp.ne.s32.totalorder %s82, %s84
      %p88 = scmp.eq.s32.totalorder %s27, 0
      %p89 = por %p87, %p88
      %p90 = scmp.ne.s32.totalorder %s82, %s84
      %p91 = scmp.eq.s32.totalorder %s32, 1
      %p92 = por %p90, %p91
      %p93 = scmp.ne.s32.totalorder %s84, %s85
      %p94 = scmp.eq.s32.totalorder %s32, 0
      %p95 = por %p93, %p94
      %p96 = scmp.ne.s32.totalorder %s84, %s85
      %p97 = scmp.eq.s32.totalorder %s33, 1
      %p98 = por %p96, %p97
      %p100 = scmp.ne.s32.totalorder %s85, %s99
      %p101 = scmp.eq.s32.totalorder %s33, 0
      %p102 = por %p100, %p101
      %s104 = sadd.s32 %s103, 1
      %p107 = scmp.eq.s32.totalorder %s27, 1
      %p108 = scmp.ne.s32.totalorder %s103, %s105
      %p109 = scmp.eq.s32.totalorder %s27, 0
      %p110 = por %p108, %p109
      %p111 = scmp.ne.s32.totalorder %s103, %s105
      %p112 = scmp.eq.s32.totalorder %s32, 1
      %p113 = por %p111, %p112
      %p114 = scmp.ne.s32.totalorder %s105, %s106
      %p115 = scmp.eq.s32.totalorder %s32, 0
      %p116 = por %p114, %p115
      %p117 = scmp.ne.s32.totalorder %s105, %s106
      %p118 = scmp.eq.s32.totalorder %s33, 1
      %p119 = por %p117, %p118
      %p121 = scmp.ne.s32.totalorder %s106, %s120
      %p122 = scmp.eq.s32.totalorder %s33, 0
      %p123 = por %p121, %p122
      %s125 = sadd.s32 %s124, 1
      %p128 = scmp.eq.s32.totalorder %s27, 1
      %p129 = scmp.ne.s32.totalorder %s124, %s126
      %p130 = scmp.eq.s32.totalorder %s27, 0
      %p131 = por %p129, %p130
      %p132 = scmp.ne.s32.totalorder %s124, %s126
      %p133 = scmp.eq.s32.totalorder %s32, 1
      %p134 = por %p132, %p133
      %p135 = scmp.ne.s32.totalorder %s126, %s127
      %p136 = scmp.eq.s32.totalorder %s32, 0
      %p137 = por %p135, %p136
      %p138 = scmp.ne.s32.totalorder %s126, %s127
      %p139 = scmp.eq.s32.totalorder %s33, 1
      %p140 = por %p138, %p139
      %p142 = scmp.ne.s32.totalorder %s127, %s141
      %p143 = scmp.eq.s32.totalorder %s33, 0
      %p144 = por %p142, %p143
      %s146 = sadd.s32 %s145, 1
      %p149 = scmp.eq.s32.totalorder %s27, 1
      %p150 = scmp.ne.s32.totalorder %s145, %s147
      %p151 = scmp.eq.s32.totalorder %s27, 0
      %p152 = por %p150, %p151
      %p153 = scmp.ne.s32.totalorder %s145, %s147
      %p154 = scmp.eq.s32.totalorder %s32, 1
      %p155 = por %p153, %p154
      %p156 = scmp.ne.s32.totalorder %s147, %s148
      %p157 = scmp.eq.s32.totalorder %s32, 0
      %p158 = por %p156, %p157
      %p159 = scmp.ne.s32.totalorder %s147, %s148
      %p160 = scmp.eq.s32.totalorder %s33, 1
      %p161 = por %p159, %p160
      %p163 = scmp.ne.s32.totalorder %s148, %s162
      %p164 = scmp.eq.s32.totalorder %s33, 0
      %p165 = por %p163, %p164
      %s167 = sadd.s32 %s166, 1
      %p170 = scmp.eq.s32.totalorder %s27, 1
      %p171 = scmp.ne.s32.totalorder %s166, %s168
      %p172 = scmp.eq.s32.totalorder %s27, 0
      %p173 = por %p171, %p172
      %p174 = scmp.ne.s32.totalorder %s166, %s168
      %p175 = scmp.eq.s32.totalorder %s32, 1
      %p176 = por %p174, %p175
      %p177 = scmp.ne.s32.totalorder %s168, %s169
      %p178 = scmp.eq.s32.totalorder %s32, 0
      %p179 = por %p177, %p178
      %p180 = scmp.ne.s32.totalorder %s168, %s169
      %p181 = scmp.eq.s32.totalorder %s33, 1
      %p182 = por %p180, %p181
      %p184 = scmp.ne.s32.totalorder %s169, %s183
      %p185 = scmp.eq.s32.totalorder %s33, 0
      %p186 = por %p184, %p185
      %s188 = sadd.s32 %s187, 1
      %p191 = scmp.eq.s32.totalorder %s27, 1
      %p192 = scmp.ne.s32.totalorder %s187, %s189
      %p193 = scmp.eq.s32.totalorder %s27, 0
      %p194 = por %p192, %p193
      %p195 = scmp.ne.s32.totalorder %s187, %s189
      %p196 = scmp.eq.s32.totalorder %s32, 1
      %p197 = por %p195, %p196
      %p198 = scmp.ne.s32.totalorder %s189, %s190
      %p199 = scmp.eq.s32.totalorder %s32, 0
      %p200 = por %p198, %p199
      %p201 = scmp.ne.s32.totalorder %s189, %s190
      %p202 = scmp.eq.s32.totalorder %s33, 1
      %p203 = por %p201, %p202
      %p205 = scmp.ne.s32.totalorder %s190, %s204
      %p206 = scmp.eq.s32.totalorder %s33, 0
      %p207 = por %p205, %p206
      %s209 = sadd.s32 %s208, 1
      %p212 = scmp.eq.s32.totalorder %s27, 1
      %p213 = scmp.ne.s32.totalorder %s208, %s210
      %p214 = scmp.eq.s32.totalorder %s27, 0
      %p215 = por %p213, %p214
      %p216 = scmp.ne.s32.totalorder %s208, %s210
      %p217 = scmp.eq.s32.totalorder %s32, 1
      %p218 = por %p216, %p217
      %p219 = scmp.ne.s32.totalorder %s210, %s211
      %p220 = scmp.eq.s32.totalorder %s32, 0
      %p221 = por %p219, %p220
      %p222 = scmp.ne.s32.totalorder %s210, %s211
      %p223 = scmp.eq.s32.totalorder %s33, 1
      %p224 = por %p222, %p223
      %p226 = scmp.ne.s32.totalorder %s211, %s225
      %p227 = scmp.eq.s32.totalorder %s33, 0
      %p228 = por %p226, %p227
      %s230 = sadd.s32 %s229, 1
      %p233 = scmp.eq.s32.totalorder %s27, 1
      %p234 = scmp.ne.s32.totalorder %s229, %s231
      %p235 = scmp.eq.s32.totalorder %s27, 0
      %p236 = por %p234, %p235
      %p237 = scmp.ne.s32.totalorder %s229, %s231
      %p238 = scmp.eq.s32.totalorder %s32, 1
      %p239 = por %p237, %p238
      %p240 = scmp.ne.s32.totalorder %s231, %s232
      %p241 = scmp.eq.s32.totalorder %s32, 0
      %p242 = por %p240, %p241
      %p243 = scmp.ne.s32.totalorder %s231, %s232
      %p244 = scmp.eq.s32.totalorder %s33, 1
      %p245 = por %p243, %p244
      %p247 = scmp.ne.s32.totalorder %s232, %s246
      %p248 = scmp.eq.s32.totalorder %s33, 0
      %p249 = por %p247, %p248
      %s251 = sadd.s32 %s250, 1
      %p254 = scmp.eq.s32.totalorder %s27, 1
      %p255 = scmp.ne.s32.totalorder %s250, %s252
      %p256 = scmp.eq.s32.totalorder %s27, 0
      %p257 = por %p255, %p256
      %p258 = scmp.ne.s32.totalorder %s250, %s252
      %p259 = scmp.eq.s32.totalorder %s32, 1
      %p260 = por %p258, %p259
      %p261 = scmp.ne.s32.totalorder %s252, %s253
      %p262 = scmp.eq.s32.totalorder %s32, 0
      %p263 = por %p261, %p262
      %p264 = scmp.ne.s32.totalorder %s252, %s253
      %p265 = scmp.eq.s32.totalorder %s33, 1
      %p266 = por %p264, %p265
      %p268 = scmp.ne.s32.totalorder %s253, %s267
      %p269 = scmp.eq.s32.totalorder %s33, 0
      %p270 = por %p268, %p269
      %s272 = sadd.s32 %s271, 1
      %p275 = scmp.eq.s32.totalorder %s27, 1
      %p276 = scmp.ne.s32.totalorder %s271, %s273
      %p277 = scmp.eq.s32.totalorder %s27, 0
      %p278 = por %p276, %p277
      %p279 = scmp.ne.s32.totalorder %s271, %s273
      %p280 = scmp.eq.s32.totalorder %s32, 1
      %p281 = por %p279, %p280
      %p282 = scmp.ne.s32.totalorder %s273, %s274
      %p283 = scmp.eq.s32.totalorder %s32, 0
      %p284 = por %p282, %p283
      %p285 = scmp.ne.s32.totalorder %s273, %s274
      %p286 = scmp.eq.s32.totalorder %s33, 1
      %p287 = por %p285, %p286
      %p289 = scmp.ne.s32.totalorder %s274, %s288
      %p290 = scmp.eq.s32.totalorder %s33, 0
      %p291 = por %p289, %p290
      %s292 = ssub.s32 %s27, %s34
      %p293 = scmp.eq.s32.totalorder %s292, 0
      %s295 = sadd.s32 %s294, 1
      %s296 = scalar_select %p293, %s294, %s295
      %p299 = pneg %p293
      %p300 = scmp.eq.s32.totalorder %s27, 1
      %p301 = por %p299, %p300
      %p302 = scmp.ne.s32.totalorder %s294, %s297
      %p303 = scmp.eq.s32.totalorder %s27, 0
      %p304 = por %p302, %p303
      %p305 = scmp.ne.s32.totalorder %s294, %s297
      %p306 = scmp.eq.s32.totalorder %s32, 1
      %p307 = por %p305, %p306
      %p308 = scmp.ne.s32.totalorder %s297, %s298
      %p309 = scmp.eq.s32.totalorder %s32, 0
      %p310 = por %p308, %p309
      %p311 = scmp.ne.s32.totalorder %s297, %s298
      %p312 = scmp.eq.s32.totalorder %s33, 1
      %p313 = por %p311, %p312
      %p315 = scmp.ne.s32.totalorder %s298, %s314
      %p316 = scmp.eq.s32.totalorder %s33, 0
      %p317 = por %p315, %p316
      %p318 = scmp.le.s32.totalorder 1, %s27
      %p319 = scmp.lt.s32.totalorder %s27, 3
      %p320 = pnand %p318, %p319
      %p321 = pneg %p320
      // Predicated region
      $region9: #{tpu_custom_call.1} parent=5 // pred_check
        _
      $region10: #{tpu_custom_call.1} parent=5 // pred_check_branch
        %323 = sbr.rel (%p320) target = $region12
      $region11: #{tpu_custom_call.1} parent=5 // pred_region
        %s324 = ssub.s32 %s27, 1
        // Predicated region
        $region13: #{tpu_custom_call.1} parent=11 // pred_check
          %p325 = pneg %p74
        $region14: #{tpu_custom_call.1} parent=11 // pred_check_branch
          %327 = sbr.rel (%p325) target = $region16
        $region15: #{tpu_custom_call.1} parent=11 // pred_region
          _
        $region16: #{tpu_custom_call.1} parent=11 // pred_fallthru
          _
        // Predicated region
        $region17: #{tpu_custom_call.1} parent=11 // pred_check
          %p328 = pneg %p95
        $region18: #{tpu_custom_call.1} parent=11 // pred_check_branch
          %330 = sbr.rel (%p328) target = $region20
        $region19: #{tpu_custom_call.1} parent=11 // pred_region
          %s332 = ssub.s32 2048, 2048
          %333 = vsyncadd [#allocation6], %s332
          %s334 = sshll.u32 [#allocation5], 4
          %s335 = int_to_ptr.vmem [resolvable:$true] %s334
          %340 = dma.hbm_to_vmem [thread:$0]  %s2, 2048, %s335, [#allocation6], 64, 64, 4
        $region20: #{tpu_custom_call.1} parent=11 // pred_fallthru
          _
        // Predicated region
        $region21: #{tpu_custom_call.1} parent=11 // pred_check
          %p341 = pneg %p116
        $region22: #{tpu_custom_call.1} parent=11 // pred_check_branch
          %343 = sbr.rel (%p341) target = $region24
        $region23: #{tpu_custom_call.1} parent=11 // pred_region
          _
        $region24: #{tpu_custom_call.1} parent=11 // pred_fallthru
          _
        // Predicated region
        $region25: #{tpu_custom_call.1} parent=11 // pred_check
          %p344 = pneg %p137
        $region26: #{tpu_custom_call.1} parent=11 // pred_check_branch
          %346 = sbr.rel (%p344) target = $region28
        $region27: #{tpu_custom_call.1} parent=11 // pred_region
          _
        $region28: #{tpu_custom_call.1} parent=11 // pred_fallthru
          _
        // Predicated region
        $region29: #{tpu_custom_call.1} parent=11 // pred_check
          %p347 = pneg %p158
        $region30: #{tpu_custom_call.1} parent=11 // pred_check_branch
          %349 = sbr.rel (%p347) target = $region32
        $region31: #{tpu_custom_call.1} parent=11 // pred_region
          _
        $region32: #{tpu_custom_call.1} parent=11 // pred_fallthru
          _
        // Predicated region
        $region33: #{tpu_custom_call.1} parent=11 // pred_check
          %p350 = pneg %p179
        $region34: #{tpu_custom_call.1} parent=11 // pred_check_branch
          %352 = sbr.rel (%p350) target = $region36
        $region35: #{tpu_custom_call.1} parent=11 // pred_region
          %s354 = ssub.s32 128, 128
          %355 = vsyncadd [#allocation6], %s354
          %s356 = sshll.u32 [#allocation7], 4
          %s357 = int_to_ptr.vmem [resolvable:$true] %s356
          %362 = dma.hbm_to_vmem [thread:$0]  %s6, 128, %s357, [#allocation6], 64, 64, 4
        $region36: #{tpu_custom_call.1} parent=11 // pred_fallthru
          _
        // Predicated region
        $region37: #{tpu_custom_call.1} parent=11 // pred_check
          %p363 = pneg %p200
        $region38: #{tpu_custom_call.1} parent=11 // pred_check_branch
          %365 = sbr.rel (%p363) target = $region40
        $region39: #{tpu_custom_call.1} parent=11 // pred_region
          %s367 = ssub.s32 256, 256
          %368 = vsyncadd [#allocation9], %s367
          %s369 = sshll.u32 [#allocation8], 4
          %s370 = int_to_ptr.vmem [resolvable:$true] %s369
          %375 = dma.hbm_to_vmem [thread:$0]  %s7, 256, %s370, [#allocation9], 64, 64, 4
        $region40: #{tpu_custom_call.1} parent=11 // pred_fallthru
          _
        // Predicated region
        $region41: #{tpu_custom_call.1} parent=11 // pred_check
          %p376 = pneg %p221
        $region42: #{tpu_custom_call.1} parent=11 // pred_check_branch
          %378 = sbr.rel (%p376) target = $region44
        $region43: #{tpu_custom_call.1} parent=11 // pred_region
          _
        $region44: #{tpu_custom_call.1} parent=11 // pred_fallthru
          _
        // Predicated region
        $region45: #{tpu_custom_call.1} parent=11 // pred_check
          %p379 = pneg %p242
        $region46: #{tpu_custom_call.1} parent=11 // pred_check_branch
          %381 = sbr.rel (%p379) target = $region48
        $region47: #{tpu_custom_call.1} parent=11 // pred_region
          %s383 = ssub.s32 2048, 2048
          %384 = vsyncadd [#allocation9], %s383
          %s385 = sshll.u32 [#allocation10], 4
          %s386 = int_to_ptr.vmem [resolvable:$true] %s385
          %391 = dma.hbm_to_vmem [thread:$0]  %s9, 2048, %s386, [#allocation9], 128, 128, 8
        $region48: #{tpu_custom_call.1} parent=11 // pred_fallthru
          _
        // Predicated region
        $region49: #{tpu_custom_call.1} parent=11 // pred_check
          %p392 = pneg %p263
        $region50: #{tpu_custom_call.1} parent=11 // pred_check_branch
          %394 = sbr.rel (%p392) target = $region52
        $region51: #{tpu_custom_call.1} parent=11 // pred_region
          %s396 = ssub.s32 2048, 2048
          %397 = vsyncadd [#allocation12], %s396
          %s398 = sshll.u32 [#allocation11], 4
          %s399 = int_to_ptr.vmem [resolvable:$true] %s398
          %404 = dma.hbm_to_vmem [thread:$0]  %s10, 2048, %s399, [#allocation12], 64, 64, 4
        $region52: #{tpu_custom_call.1} parent=11 // pred_fallthru
          _
        // Predicated region
        $region53: #{tpu_custom_call.1} parent=11 // pred_check
          %p405 = pneg %p284
        $region54: #{tpu_custom_call.1} parent=11 // pred_check_branch
          %407 = sbr.rel (%p405) target = $region56
        $region55: #{tpu_custom_call.1} parent=11 // pred_region
          %s409 = ssub.s32 512, 512
          %410 = vsyncadd [#allocation12], %s409
          %s411 = sshll.u32 [#allocation13], 4
          %s412 = int_to_ptr.vmem [resolvable:$true] %s411
          %417 = dma.hbm_to_vmem [thread:$0]  %s11, 512, %s412, [#allocation12], 256, 256, 16
        $region56: #{tpu_custom_call.1} parent=11 // pred_fallthru
          _
      $region12: #{tpu_custom_call.1} parent=5 // pred_fallthru
        _
      %p418 = scmp.lt.s32.totalorder %s27, 2
      // Predicated region
      $region57: #{tpu_custom_call.1} parent=5 // pred_check
        %p419 = pneg %p418
      $region58: #{tpu_custom_call.1} parent=5 // pred_check_branch
        %421 = sbr.rel (%p419) target = $region60
      $region59: #{tpu_custom_call.1} parent=5 // pred_region
        // Predicated region
        $region61: #{tpu_custom_call.1} parent=59 // pred_check
          %p422 = pneg %p47
        $region62: #{tpu_custom_call.1} parent=59 // pred_check_branch
          %424 = sbr.rel (%p422) target = $region64
        $region63: #{tpu_custom_call.1} parent=59 // pred_region
          %s425 = sand.u32 %s37, 1
          %s426 = scalar_lea.sflag [#allocation3], %s425
          %s427 = sand.u32 %s37, 1
          %s428 = smul.addr %s427, 128
          %s429 = scalar_lea.vmem [#allocation2], %s428
          %s430 = smul.u32 32, %s27
          %s432 = ssub.s32 2048, 2048
          %433 = vsyncadd %s426, %s432
          %s434 = smul.addr %s430, 64
          %s435 = scalar_lea.hbm %s0, %s434
          %s436 = sshll.u32 %s429, 4
          %s437 = int_to_ptr.vmem [resolvable:$true] %s436
          %442 = dma.hbm_to_vmem [thread:$0]  %s435, 2048, %s437, %s426, 64, 64, 4
        $region64: #{tpu_custom_call.1} parent=59 // pred_fallthru
          _
      $region60: #{tpu_custom_call.1} parent=5 // pred_fallthru
        _
      %p443 = scmp.le.s32.totalorder 1, %s27
      %p444 = scmp.lt.s32.totalorder %s27, 3
      %p445 = pnand %p443, %p444
      %p446 = pneg %p445
      // Predicated region
      $region65: #{tpu_custom_call.1} parent=5 // pred_check
        _
      $region66: #{tpu_custom_call.1} parent=5 // pred_check_branch
        %448 = sbr.rel (%p445) target = $region68
      $region67: #{tpu_custom_call.1} parent=5 // pred_region
        %s449 = ssub.s32 %s27, 1
        %s450 = sand.u32 %s40, 1
        %s451 = scalar_lea.sflag [#allocation3], %s450
        %s452 = sand.u32 %s40, 1
        %s453 = smul.addr %s452, 128
        %s454 = scalar_lea.vmem [#allocation2], %s453
        // Predicated region
        $region69: #{tpu_custom_call.1} parent=67 // pred_check
          %p455 = pneg %p53
        $region70: #{tpu_custom_call.1} parent=67 // pred_check_branch
          %457 = sbr.rel (%p455) target = $region72
        $region71: #{tpu_custom_call.1} parent=67 // pred_region
          %458 = dma.done %s451, 2048
        $region72: #{tpu_custom_call.1} parent=67 // pred_fallthru
          _
        // Predicated region
        $region73: #{tpu_custom_call.1} parent=67 // pred_check
          %p459 = pneg %p95
        $region74: #{tpu_custom_call.1} parent=67 // pred_check_branch
          %461 = sbr.rel (%p459) target = $region76
        $region75: #{tpu_custom_call.1} parent=67 // pred_region
          %462 = dma.done [#allocation6], 2048
        $region76: #{tpu_custom_call.1} parent=67 // pred_fallthru
          _
        // Predicated region
        $region77: #{tpu_custom_call.1} parent=67 // pred_check
          %p463 = pneg %p179
        $region78: #{tpu_custom_call.1} parent=67 // pred_check_branch
          %465 = sbr.rel (%p463) target = $region80
        $region79: #{tpu_custom_call.1} parent=67 // pred_region
          %466 = dma.done [#allocation6], 128
        $region80: #{tpu_custom_call.1} parent=67 // pred_fallthru
          _
        // Predicated region
        $region81: #{tpu_custom_call.1} parent=67 // pred_check
          %p467 = pneg %p200
        $region82: #{tpu_custom_call.1} parent=67 // pred_check_branch
          %469 = sbr.rel (%p467) target = $region84
        $region83: #{tpu_custom_call.1} parent=67 // pred_region
          %470 = dma.done [#allocation9], 256
        $region84: #{tpu_custom_call.1} parent=67 // pred_fallthru
          _
        // Predicated region
        $region85: #{tpu_custom_call.1} parent=67 // pred_check
          %p471 = pneg %p242
        $region86: #{tpu_custom_call.1} parent=67 // pred_check_branch
          %473 = sbr.rel (%p471) target = $region88
        $region87: #{tpu_custom_call.1} parent=67 // pred_region
          %474 = dma.done [#allocation9], 2048
        $region88: #{tpu_custom_call.1} parent=67 // pred_fallthru
          _
        // Predicated region
        $region89: #{tpu_custom_call.1} parent=67 // pred_check
          %p475 = pneg %p263
        $region90: #{tpu_custom_call.1} parent=67 // pred_check_branch
          %477 = sbr.rel (%p475) target = $region92
        $region91: #{tpu_custom_call.1} parent=67 // pred_region
          %478 = dma.done [#allocation12], 2048
        $region92: #{tpu_custom_call.1} parent=67 // pred_fallthru
          _
        // Predicated region
        $region93: #{tpu_custom_call.1} parent=67 // pred_check
          %p479 = pneg %p284
        $region94: #{tpu_custom_call.1} parent=67 // pred_check_branch
          %481 = sbr.rel (%p479) target = $region96
        $region95: #{tpu_custom_call.1} parent=67 // pred_region
          %482 = dma.done [#allocation12], 512
        $region96: #{tpu_custom_call.1} parent=67 // pred_fallthru
          _
        %s483 = sand.u32 %s40, 1
        %s484 = scalar_lea.sflag [#allocation3], %s483
        %s485 = sand.u32 %s40, 1
        %s486 = smul.addr %s485, 128
        %s487 = scalar_lea.vmem [#allocation2], %s486
        %p488 = pneg %p53
        %p489 = pneg %p50
        %p490 = pneg %p74
        %p491 = pneg %p71
        %p492 = pneg %p95
        %p493 = pneg %p92
        %p494 = pneg %p116
        %p495 = pneg %p113
        %p496 = pneg %p137
        %p497 = pneg %p134
        %p498 = pneg %p158
        %p499 = pneg %p155
        %p500 = pneg %p179
        %p501 = pneg %p176
        %p502 = pneg %p200
        %p503 = pneg %p197
        %p504 = pneg %p221
        %p505 = pneg %p218
        %p506 = pneg %p242
        %p507 = pneg %p239
        %p508 = pneg %p263
        %p509 = pneg %p260
        %p510 = pneg %p284
        %p511 = pneg %p281
        %p512 = pneg %p310
        %p513 = pneg %p307
        %s514 = sand.u32 %s297, 1
        %s515 = scalar_lea.sflag [#allocation4], %s514
        %s516 = sand.u32 %s297, 1
        %s517 = smul.addr %s516, 256
        %s518 = scalar_lea.vmem [#allocation14], %s517
        %s519 = smul.u32 32, %s32
        %s520 = smul.u32 32, %s32
        %v522 = vld [vmem:[#allocation13] sm:$0xff]
        %v523 = vld [vmem:[#allocation13 + $0x8] sm:$0xff]
        %v524 = vld [vmem:[#allocation13 + $0x10] sm:$0x3]
        %v525 = vld [vmem:[#allocation13 + $0x18] sm:$0x3]
        %v526 = vld [vmem:[%s454] sm:$0xf]
        %v527 = vld [vmem:[%s454 + $0x4] sm:$0xf]
        %v528 = vld [vmem:[%s454 + $0x8] sm:$0xf]
        %v529 = vld [vmem:[%s454 + $0xc] sm:$0xf]
        %v530 = vld [vmem:[%s454 + $0x10] sm:$0xf]
        %v531 = vld [vmem:[%s454 + $0x14] sm:$0xf]
        %v532 = vld [vmem:[%s454 + $0x18] sm:$0xf]
        %v533 = vld [vmem:[%s454 + $0x1c] sm:$0xf]
        %v534 = vld [vmem:[%s454 + $0x20] sm:$0xf]
        %v535 = vld [vmem:[%s454 + $0x24] sm:$0xf]
        %v536 = vld [vmem:[%s454 + $0x28] sm:$0xf]
        %v537 = vld [vmem:[%s454 + $0x2c] sm:$0xf]
        %v538 = vld [vmem:[%s454 + $0x30] sm:$0xf]
        %v539 = vld [vmem:[%s454 + $0x34] sm:$0xf]
        %v540 = vld [vmem:[%s454 + $0x38] sm:$0xf]
        %v541 = vld [vmem:[%s454 + $0x3c] sm:$0xf]
        %v542 = vld [vmem:[%s454 + $0x40] sm:$0xf]
        %v543 = vld [vmem:[%s454 + $0x44] sm:$0xf]
        %v544 = vld [vmem:[%s454 + $0x48] sm:$0xf]
        %v545 = vld [vmem:[%s454 + $0x4c] sm:$0xf]
        %v546 = vld [vmem:[%s454 + $0x50] sm:$0xf]
        %v547 = vld [vmem:[%s454 + $0x54] sm:$0xf]
        %v548 = vld [vmem:[%s454 + $0x58] sm:$0xf]
        %v549 = vld [vmem:[%s454 + $0x5c] sm:$0xf]
        %v550 = vld [vmem:[%s454 + $0x60] sm:$0xf]
        %v551 = vld [vmem:[%s454 + $0x64] sm:$0xf]
        %v552 = vld [vmem:[%s454 + $0x68] sm:$0xf]
        %v553 = vld [vmem:[%s454 + $0x6c] sm:$0xf]
        %v554 = vld [vmem:[%s454 + $0x70] sm:$0xf]
        %v555 = vld [vmem:[%s454 + $0x74] sm:$0xf]
        %v556 = vld [vmem:[%s454 + $0x78] sm:$0xf]
        %v557 = vld [vmem:[%s454 + $0x7c] sm:$0xf]
        %v558 = vld [vmem:[%s1] sm:$0xff]
        %v559 = vld [vmem:[%s1 + $0x8] sm:$0xff]
        %v560 = vld [vmem:[%s1 + $0x10] sm:$0xff]
        %v561 = vld [vmem:[%s1 + $0x18] sm:$0xff]
        %v562 = vld [vmem:[%s1 + $0x20] sm:$0xff]
        %v563 = vld [vmem:[%s1 + $0x28] sm:$0xff]
        %v564 = vld [vmem:[%s1 + $0x30] sm:$0xff]
        %v565 = vld [vmem:[%s1 + $0x38] sm:$0xff]
        %v566 = vld [vmem:[%s1 + $0x40] sm:$0xff]
        %v567 = vld [vmem:[%s1 + $0x48] sm:$0xff]
        %v568 = vld [vmem:[%s1 + $0x50] sm:$0xff]
        %v569 = vld [vmem:[%s1 + $0x58] sm:$0xff]
        %v570 = vld [vmem:[%s1 + $0x60] sm:$0xff]
        %v571 = vld [vmem:[%s1 + $0x68] sm:$0xff]
        %v572 = vld [vmem:[%s1 + $0x70] sm:$0xff]
        %v573 = vld [vmem:[%s1 + $0x78] sm:$0xff]
        %v574 = vlaneseq
        %v575 = vshrl.u32 %v574, 7
        %v576 = vsub.s32 0, %v575
        %v577 = vrot.slane %v522, %v576
        %v578 = vlaneseq
        %v579 = vshrl.u32 %v578, 7
        %v580 = vsub.s32 0, %v579
        %v581 = vrot.slane %v523, %v580
        %v614 = vunpack.c.l.b16 %v526
        %v615 = vunpack.c.l.b16 %v527
        %v616 = vunpack.c.l.b16 %v528
        %v617 = vunpack.c.l.b16 %v529
        %v618 = vunpack.c.l.b16 %v530
        %v619 = vunpack.c.l.b16 %v531
        %v620 = vunpack.c.l.b16 %v532
        %v621 = vunpack.c.l.b16 %v533
        %v622 = vunpack.c.l.b16 %v534
        %v623 = vunpack.c.l.b16 %v535
        %v624 = vunpack.c.l.b16 %v536
        %v625 = vunpack.c.l.b16 %v537
        %v626 = vunpack.c.l.b16 %v538
        %v627 = vunpack.c.l.b16 %v539
        %v628 = vunpack.c.l.b16 %v540
        %v629 = vunpack.c.l.b16 %v541
        %v630 = vunpack.c.l.b16 %v542
        %v631 = vunpack.c.l.b16 %v543
        %v632 = vunpack.c.l.b16 %v544
        %v633 = vunpack.c.l.b16 %v545
        %v634 = vunpack.c.l.b16 %v546
        %v635 = vunpack.c.l.b16 %v547
        %v636 = vunpack.c.l.b16 %v548
        %v637 = vunpack.c.l.b16 %v549
        %v638 = vunpack.c.l.b16 %v550
        %v639 = vunpack.c.l.b16 %v551
        %v640 = vunpack.c.l.b16 %v552
        %v641 = vunpack.c.l.b16 %v553
        %v642 = vunpack.c.l.b16 %v554
        %v643 = vunpack.c.l.b16 %v555
        %v644 = vunpack.c.l.b16 %v556
        %v645 = vunpack.c.l.b16 %v557
        %v646 = vpack.c.b16 %v615, %v614
        %v647 = vpack.c.b16 %v617, %v616
        %v648 = vpack.c.b16 %v619, %v618
        %v649 = vpack.c.b16 %v621, %v620
        %v650 = vpack.c.b16 %v623, %v622
        %v651 = vpack.c.b16 %v625, %v624
        %v652 = vpack.c.b16 %v627, %v626
        %v653 = vpack.c.b16 %v629, %v628
        %v654 = vpack.c.b16 %v631, %v630
        %v655 = vpack.c.b16 %v633, %v632
        %v656 = vpack.c.b16 %v635, %v634
        %v657 = vpack.c.b16 %v637, %v636
        %v658 = vpack.c.b16 %v639, %v638
        %v659 = vpack.c.b16 %v641, %v640
        %v660 = vpack.c.b16 %v643, %v642
        %v661 = vpack.c.b16 %v645, %v644
        %v694 = vunpack.c.l.b16 %v558
        %v695 = vunpack.c.h.b16 %v558
        %v696 = vunpack.c.l.b16 %v559
        %v697 = vunpack.c.h.b16 %v559
        %v698 = vunpack.c.l.b16 %v560
        %v699 = vunpack.c.h.b16 %v560
        %v700 = vunpack.c.l.b16 %v561
        %v701 = vunpack.c.h.b16 %v561
        %v702 = vunpack.c.l.b16 %v562
        %v703 = vunpack.c.h.b16 %v562
        %v704 = vunpack.c.l.b16 %v563
        %v705 = vunpack.c.h.b16 %v563
        %v706 = vunpack.c.l.b16 %v564
        %v707 = vunpack.c.h.b16 %v564
        %v708 = vunpack.c.l.b16 %v565
        %v709 = vunpack.c.h.b16 %v565
        %v710 = vunpack.c.l.b16 %v566
        %v711 = vunpack.c.h.b16 %v566
        %v712 = vunpack.c.l.b16 %v567
        %v713 = vunpack.c.h.b16 %v567
        %v714 = vunpack.c.l.b16 %v568
        %v715 = vunpack.c.h.b16 %v568
        %v716 = vunpack.c.l.b16 %v569
        %v717 = vunpack.c.h.b16 %v569
        %v718 = vunpack.c.l.b16 %v570
        %v719 = vunpack.c.h.b16 %v570
        %v720 = vunpack.c.l.b16 %v571
        %v721 = vunpack.c.h.b16 %v571
        %v722 = vunpack.c.l.b16 %v572
        %v723 = vunpack.c.h.b16 %v572
        %v724 = vunpack.c.l.b16 %v573
        %v725 = vunpack.c.h.b16 %v573
        %v726 = vpack.c.b16 %v696, %v694
        %v727 = vpack.c.b16 %v697, %v695
        %v728 = vpack.c.b16 %v700, %v698
        %v729 = vpack.c.b16 %v701, %v699
        %v730 = vpack.c.b16 %v704, %v702
        %v731 = vpack.c.b16 %v705, %v703
        %v732 = vpack.c.b16 %v708, %v706
        %v733 = vpack.c.b16 %v709, %v707
        %v734 = vpack.c.b16 %v712, %v710
        %v735 = vpack.c.b16 %v713, %v711
        %v736 = vpack.c.b16 %v716, %v714
        %v737 = vpack.c.b16 %v717, %v715
        %v738 = vpack.c.b16 %v720, %v718
        %v739 = vpack.c.b16 %v721, %v719
        %v740 = vpack.c.b16 %v724, %v722
        %v741 = vpack.c.b16 %v725, %v723
        %758 = vmatprep.subr.bf16.mxu0 %v727
        %759 = vmatpush1.bf16.msra.mxu0 %v726
        %760 = vmatprep.subr.bf16.mxu0 %v729
        %761 = vmatpush1.bf16.msra.mxu0 %v728
        %762 = vmatprep.subr.bf16.mxu0 %v731
        %763 = vmatpush1.bf16.msra.mxu0 %v730
        %764 = vmatprep.subr.bf16.mxu0 %v733
        %765 = vmatpush1.bf16.msra.mxu0 %v732
        %766 = vmatprep.subr.bf16.mxu0 %v735
        %767 = vmatpush1.bf16.msra.mxu0 %v734
        %768 = vmatprep.subr.bf16.mxu0 %v737
        %769 = vmatpush1.bf16.msra.mxu0 %v736
        %770 = vmatprep.subr.bf16.mxu0 %v739
        %771 = vmatpush1.bf16.msra.mxu0 %v738
        %772 = vmatprep.subr.bf16.mxu0 %v741
        %773 = vmatpush1.bf16.msra.mxu0 %v740
        %774 = vmatprep.subr.bf16.mxu0 0
        %775 = vmatpush1.bf16.msra.mxu0 0
        %776 = vmatprep.subr.bf16.mxu0 0
        %777 = vmatpush1.bf16.msra.mxu0 0
        %778 = vmatprep.subr.bf16.mxu0 0
        %779 = vmatpush1.bf16.msra.mxu0 0
        %780 = vmatprep.subr.bf16.mxu0 0
        %781 = vmatpush1.bf16.msra.mxu0 0
        %782 = vmatprep.subr.bf16.mxu0 0
        %783 = vmatpush1.bf16.msra.mxu0 0
        %784 = vmatprep.subr.bf16.mxu0 0
        %785 = vmatpush1.bf16.msra.mxu0 0
        %786 = vmatprep.subr.bf16.mxu0 0
        %787 = vmatpush1.bf16.msra.mxu0 0
        %788 = vmatprep.subr.bf16.mxu0 0
        %789 = vmatpush1.bf16.msra.mxu0 0
        %790 = vmatprep.mubr.bf16.mxu0 0
        %791 = vmatmul.mubr.bf16.gmra.mrb[0].mxu0 %v646
        %v792 = vpop.f32.mrb[0].mxu0
        %v793 = vadd.f32 %v577, %v792
        %v794 = vpop.f32.mrb[0].mxu0
        %v795 = vadd.f32 %v581, %v794
        %v796 = vpop.f32.mrb[0].mxu0
        %v797 = vadd.f32 %v577, %v796
        %v798 = vpop.f32.mrb[0].mxu0
        %v799 = vadd.f32 %v581, %v798
        %800 = vmatprep.mubr.bf16.mxu0 0
        %801 = vmatmul.mubr.bf16.gmra.mrb[0].mxu0 %v647
        %v802 = vpop.f32.mrb[0].mxu0
        %v803 = vadd.f32 %v577, %v802
        %v804 = vpop.f32.mrb[0].mxu0
        %v805 = vadd.f32 %v581, %v804
        %v806 = vpop.f32.mrb[0].mxu0
        %v807 = vadd.f32 %v577, %v806
        %v808 = vpop.f32.mrb[0].mxu0
        %v809 = vadd.f32 %v581, %v808
        %810 = vmatprep.mubr.bf16.mxu0 0
        %811 = vmatmul.mubr.bf16.gmra.mrb[0].mxu0 %v648
        %v812 = vpop.f32.mrb[0].mxu0
        %v813 = vadd.f32 %v577, %v812
        %v814 = vpop.f32.mrb[0].mxu0
        %v815 = vadd.f32 %v581, %v814
        %v816 = vpop.f32.mrb[0].mxu0
        %v817 = vadd.f32 %v577, %v816
        %v818 = vpop.f32.mrb[0].mxu0
        %v819 = vadd.f32 %v581, %v818
        %820 = vmatprep.mubr.bf16.mxu0 0
        %821 = vmatmul.mubr.bf16.gmra.mrb[0].mxu0 %v649
        %v822 = vpop.f32.mrb[0].mxu0
        %v823 = vadd.f32 %v577, %v822
        %v824 = vpop.f32.mrb[0].mxu0
        %v825 = vadd.f32 %v581, %v824
        %v826 = vpop.f32.mrb[0].mxu0
        %v827 = vadd.f32 %v577, %v826
        %v828 = vpop.f32.mrb[0].mxu0
        %v829 = vadd.f32 %v581, %v828
        %830 = vmatprep.mubr.bf16.mxu0 0
        %831 = vmatmul.mubr.bf16.gmra.mrb[0].mxu0 %v650
        %v832 = vpop.f32.mrb[0].mxu0
        %v833 = vadd.f32 %v577, %v832
        %v834 = vpop.f32.mrb[0].mxu0
        %v835 = vadd.f32 %v581, %v834
        %v836 = vpop.f32.mrb[0].mxu0
        %v837 = vadd.f32 %v577, %v836
        %v838 = vpop.f32.mrb[0].mxu0
        %v839 = vadd.f32 %v581, %v838
        %840 = vmatprep.mubr.bf16.mxu0 0
        %841 = vmatmul.mubr.bf16.gmra.mrb[0].mxu0 %v651
        %v842 = vpop.f32.mrb[0].mxu0
        %v843 = vadd.f32 %v577, %v842
        %v844 = vpop.f32.mrb[0].mxu0
        %v845 = vadd.f32 %v581, %v844
        %v846 = vpop.f32.mrb[0].mxu0
        %v847 = vadd.f32 %v577, %v846
        %v848 = vpop.f32.mrb[0].mxu0
        %v849 = vadd.f32 %v581, %v848
        %850 = vmatprep.mubr.bf16.mxu0 0
        %851 = vmatmul.mubr.bf16.gmra.mrb[0].mxu0 %v652
        %v852 = vpop.f32.mrb[0].mxu0
        %v853 = vadd.f32 %v577, %v852
        %v854 = vpop.f32.mrb[0].mxu0
        %v855 = vadd.f32 %v581, %v854
        %v856 = vpop.f32.mrb[0].mxu0
        %v857 = vadd.f32 %v577, %v856
        %v858 = vpop.f32.mrb[0].mxu0
        %v859 = vadd.f32 %v581, %v858
        %860 = vmatprep.mubr.bf16.mxu0 0
        %861 = vmatmul.mubr.bf16.gmra.mrb[0].mxu0 %v653
        %v862 = vpop.f32.mrb[0].mxu0
        %v863 = vadd.f32 %v577, %v862
        %v864 = vpop.f32.mrb[0].mxu0
        %v865 = vadd.f32 %v581, %v864
        %v866 = vpop.f32.mrb[0].mxu0
        %v867 = vadd.f32 %v577, %v866
        %v868 = vpop.f32.mrb[0].mxu0
        %v869 = vadd.f32 %v581, %v868
        %870 = vmatprep.mubr.bf16.mxu0 0
        %871 = vmatmul.mubr.bf16.gmra.mrb[0].mxu0 %v654
        %v872 = vpop.f32.mrb[0].mxu0
        %v873 = vadd.f32 %v577, %v872
        %v874 = vpop.f32.mrb[0].mxu0
        %v875 = vadd.f32 %v581, %v874
        %v876 = vpop.f32.mrb[0].mxu0
        %v877 = vadd.f32 %v577, %v876
        %v878 = vpop.f32.mrb[0].mxu0
        %v879 = vadd.f32 %v581, %v878
        %880 = vmatprep.mubr.bf16.mxu0 0
        %881 = vmatmul.mubr.bf16.gmra.mrb[0].mxu0 %v655
        %v882 = vpop.f32.mrb[0].mxu0
        %v883 = vadd.f32 %v577, %v882
        %v884 = vpop.f32.mrb[0].mxu0
        %v885 = vadd.f32 %v581, %v884
        %v886 = vpop.f32.mrb[0].mxu0
        %v887 = vadd.f32 %v577, %v886
        %v888 = vpop.f32.mrb[0].mxu0
        %v889 = vadd.f32 %v581, %v888
        %890 = vmatprep.mubr.bf16.mxu0 0
        %891 = vmatmul.mubr.bf16.gmra.mrb[0].mxu0 %v656
        %v892 = vpop.f32.mrb[0].mxu0
        %v893 = vadd.f32 %v577, %v892
        %v894 = vpop.f32.mrb[0].mxu0
        %v895 = vadd.f32 %v581, %v894
        %v896 = vpop.f32.mrb[0].mxu0
        %v897 = vadd.f32 %v577, %v896
        %v898 = vpop.f32.mrb[0].mxu0
        %v899 = vadd.f32 %v581, %v898
        %900 = vmatprep.mubr.bf16.mxu0 0
        %901 = vmatmul.mubr.bf16.gmra.mrb[0].mxu0 %v657
        %v902 = vpop.f32.mrb[0].mxu0
        %v903 = vadd.f32 %v577, %v902
        %v904 = vpop.f32.mrb[0].mxu0
        %v905 = vadd.f32 %v581, %v904
        %v906 = vpop.f32.mrb[0].mxu0
        %v907 = vadd.f32 %v577, %v906
        %v908 = vpop.f32.mrb[0].mxu0
        %v909 = vadd.f32 %v581, %v908
        %910 = vmatprep.mubr.bf16.mxu0 0
        %911 = vmatmul.mubr.bf16.gmra.mrb[0].mxu0 %v658
        %v912 = vpop.f32.mrb[0].mxu0
        %v913 = vadd.f32 %v577, %v912
        %v914 = vpop.f32.mrb[0].mxu0
        %v915 = vadd.f32 %v581, %v914
        %v916 = vpop.f32.mrb[0].mxu0
        %v917 = vadd.f32 %v577, %v916
        %v918 = vpop.f32.mrb[0].mxu0
        %v919 = vadd.f32 %v581, %v918
        %920 = vmatprep.mubr.bf16.mxu0 0
        %921 = vmatmul.mubr.bf16.gmra.mrb[0].mxu0 %v659
        %v922 = vpop.f32.mrb[0].mxu0
        %v923 = vadd.f32 %v577, %v922
        %v924 = vpop.f32.mrb[0].mxu0
        %v925 = vadd.f32 %v581, %v924
        %v926 = vpop.f32.mrb[0].mxu0
        %v927 = vadd.f32 %v577, %v926
        %v928 = vpop.f32.mrb[0].mxu0
        %v929 = vadd.f32 %v581, %v928
        %930 = vmatprep.mubr.bf16.mxu0 0
        %931 = vmatmul.mubr.bf16.gmra.mrb[0].mxu0 %v660
        %v932 = vpop.f32.mrb[0].mxu0
        %v933 = vadd.f32 %v577, %v932
        %v934 = vpop.f32.mrb[0].mxu0
        %v935 = vadd.f32 %v581, %v934
        %v936 = vpop.f32.mrb[0].mxu0
        %v937 = vadd.f32 %v577, %v936
        %v938 = vpop.f32.mrb[0].mxu0
        %v939 = vadd.f32 %v581, %v938
        %940 = vmatprep.mubr.bf16.mxu0 0
        %941 = vmatmul.mubr.bf16.gmra.mrb[0].mxu0 %v661
        %v942 = vpop.f32.mrb[0].mxu0
        %v943 = vadd.f32 %v577, %v942
        %v944 = vpop.f32.mrb[0].mxu0
        %v945 = vadd.f32 %v581, %v944
        %v946 = vpop.f32.mrb[0].mxu0
        %v947 = vadd.f32 %v577, %v946
        %v948 = vpop.f32.mrb[0].mxu0
        %v949 = vadd.f32 %v581, %v948
        %950 = vdwg.mxu0
        %v951 = vmax.f32 %v793, 0.0
        %v952 = vmax.f32 %v795, 0.0
        %v953 = vmax.f32 %v797, 0.0
        %v954 = vmax.f32 %v799, 0.0
        %v955 = vmax.f32 %v803, 0.0
        %v956 = vmax.f32 %v805, 0.0
        %v957 = vmax.f32 %v807, 0.0
        %v958 = vmax.f32 %v809, 0.0
        %v959 = vmax.f32 %v813, 0.0
        %v960 = vmax.f32 %v815, 0.0
        %v961 = vmax.f32 %v817, 0.0
        %v962 = vmax.f32 %v819, 0.0
        %v963 = vmax.f32 %v823, 0.0
        %v964 = vmax.f32 %v825, 0.0
        %v965 = vmax.f32 %v827, 0.0
        %v966 = vmax.f32 %v829, 0.0
        %v967 = vmax.f32 %v833, 0.0
        %v968 = vmax.f32 %v835, 0.0
        %v969 = vmax.f32 %v837, 0.0
        %v970 = vmax.f32 %v839, 0.0
        %v971 = vmax.f32 %v843, 0.0
        %v972 = vmax.f32 %v845, 0.0
        %v973 = vmax.f32 %v847, 0.0
        %v974 = vmax.f32 %v849, 0.0
        %v975 = vmax.f32 %v853, 0.0
        %v976 = vmax.f32 %v855, 0.0
        %v977 = vmax.f32 %v857, 0.0
        %v978 = vmax.f32 %v859, 0.0
        %v979 = vmax.f32 %v863, 0.0
        %v980 = vmax.f32 %v865, 0.0
        %v981 = vmax.f32 %v867, 0.0
        %v982 = vmax.f32 %v869, 0.0
        %v983 = vmax.f32 %v873, 0.0
        %v984 = vmax.f32 %v875, 0.0
        %v985 = vmax.f32 %v877, 0.0
        %v986 = vmax.f32 %v879, 0.0
        %v987 = vmax.f32 %v883, 0.0
        %v988 = vmax.f32 %v885, 0.0
        %v989 = vmax.f32 %v887, 0.0
        %v990 = vmax.f32 %v889, 0.0
        %v991 = vmax.f32 %v893, 0.0
        %v992 = vmax.f32 %v895, 0.0
        %v993 = vmax.f32 %v897, 0.0
        %v994 = vmax.f32 %v899, 0.0
        %v995 = vmax.f32 %v903, 0.0
        %v996 = vmax.f32 %v905, 0.0
        %v997 = vmax.f32 %v907, 0.0
        %v998 = vmax.f32 %v909, 0.0
        %v999 = vmax.f32 %v913, 0.0
        %v1000 = vmax.f32 %v915, 0.0
        %v1001 = vmax.f32 %v917, 0.0
        %v1002 = vmax.f32 %v919, 0.0
        %v1003 = vmax.f32 %v923, 0.0
        %v1004 = vmax.f32 %v925, 0.0
        %v1005 = vmax.f32 %v927, 0.0
        %v1006 = vmax.f32 %v929, 0.0
        %v1007 = vmax.f32 %v933, 0.0
        %v1008 = vmax.f32 %v935, 0.0
        %v1009 = vmax.f32 %v937, 0.0
        %v1010 = vmax.f32 %v939, 0.0
        %v1011 = vmax.f32 %v943, 0.0
        %v1012 = vmax.f32 %v945, 0.0
        %v1013 = vmax.f32 %v947, 0.0
        %v1014 = vmax.f32 %v949, 0.0
        %v1015 = vpack.c.bf16 %v953, %v951
        %v1016 = vpack.c.bf16 %v954, %v952
        %v1017 = vpack.c.bf16 %v957, %v955
        %v1018 = vpack.c.bf16 %v958, %v956
        %v1019 = vpack.c.bf16 %v961, %v959
        %v1020 = vpack.c.bf16 %v962, %v960
        %v1021 = vpack.c.bf16 %v965, %v963
        %v1022 = vpack.c.bf16 %v966, %v964
        %v1023 = vpack.c.bf16 %v969, %v967
        %v1024 = vpack.c.bf16 %v970, %v968
        %v1025 = vpack.c.bf16 %v973, %v971
        %v1026 = vpack.c.bf16 %v974, %v972
        %v1027 = vpack.c.bf16 %v977, %v975
        %v1028 = vpack.c.bf16 %v978, %v976
        %v1029 = vpack.c.bf16 %v981, %v979
        %v1030 = vpack.c.bf16 %v982, %v980
        %v1031 = vpack.c.bf16 %v985, %v983
        %v1032 = vpack.c.bf16 %v986, %v984
        %v1033 = vpack.c.bf16 %v989, %v987
        %v1034 = vpack.c.bf16 %v990, %v988
        %v1035 = vpack.c.bf16 %v993, %v991
        %v1036 = vpack.c.bf16 %v994, %v992
        %v1037 = vpack.c.bf16 %v997, %v995
        %v1038 = vpack.c.bf16 %v998, %v996
        %v1039 = vpack.c.bf16 %v1001, %v999
        %v1040 = vpack.c.bf16 %v1002, %v1000
        %v1041 = vpack.c.bf16 %v1005, %v1003
        %v1042 = vpack.c.bf16 %v1006, %v1004
        %v1043 = vpack.c.bf16 %v1009, %v1007
        %v1044 = vpack.c.bf16 %v1010, %v1008
        %v1045 = vpack.c.bf16 %v1013, %v1011
        %v1046 = vpack.c.bf16 %v1014, %v1012
        %v1047 = vld [vmem:[#allocation5] sm:$0xf]
        %v1048 = vld [vmem:[#allocation5 + $0x4] sm:$0xf]
        %v1049 = vld [vmem:[#allocation5 + $0x8] sm:$0xf]
        %v1050 = vld [vmem:[#allocation5 + $0xc] sm:$0xf]
        %v1051 = vld [vmem:[#allocation5 + $0x10] sm:$0xf]
        %v1052 = vld [vmem:[#allocation5 + $0x14] sm:$0xf]
        %v1053 = vld [vmem:[#allocation5 + $0x18] sm:$0xf]
        %v1054 = vld [vmem:[#allocation5 + $0x1c] sm:$0xf]
        %v1055 = vld [vmem:[#allocation5 + $0x20] sm:$0xf]
        %v1056 = vld [vmem:[#allocation5 + $0x24] sm:$0xf]
        %v1057 = vld [vmem:[#allocation5 + $0x28] sm:$0xf]
        %v1058 = vld [vmem:[#allocation5 + $0x2c] sm:$0xf]
        %v1059 = vld [vmem:[#allocation5 + $0x30] sm:$0xf]
        %v1060 = vld [vmem:[#allocation5 + $0x34] sm:$0xf]
        %v1061 = vld [vmem:[#allocation5 + $0x38] sm:$0xf]
        %v1062 = vld [vmem:[#allocation5 + $0x3c] sm:$0xf]
        %v1063 = vld [vmem:[#allocation5 + $0x40] sm:$0xf]
        %v1064 = vld [vmem:[#allocation5 + $0x44] sm:$0xf]
        %v1065 = vld [vmem:[#allocation5 + $0x48] sm:$0xf]
        %v1066 = vld [vmem:[#allocation5 + $0x4c] sm:$0xf]
        %v1067 = vld [vmem:[#allocation5 + $0x50] sm:$0xf]
        %v1068 = vld [vmem:[#allocation5 + $0x54] sm:$0xf]
        %v1069 = vld [vmem:[#allocation5 + $0x58] sm:$0xf]
        %v1070 = vld [vmem:[#allocation5 + $0x5c] sm:$0xf]
        %v1071 = vld [vmem:[#allocation5 + $0x60] sm:$0xf]
        %v1072 = vld [vmem:[#allocation5 + $0x64] sm:$0xf]
        %v1073 = vld [vmem:[#allocation5 + $0x68] sm:$0xf]
        %v1074 = vld [vmem:[#allocation5 + $0x6c] sm:$0xf]
        %v1075 = vld [vmem:[#allocation5 + $0x70] sm:$0xf]
        %v1076 = vld [vmem:[#allocation5 + $0x74] sm:$0xf]
        %v1077 = vld [vmem:[#allocation5 + $0x78] sm:$0xf]
        %v1078 = vld [vmem:[#allocation5 + $0x7c] sm:$0xf]
        %v1079 = vlaneseq
        %v1080 = vshrl.u32 %v1079, 7
        %v1081 = vsub.s32 1, %v1080
        %v1082 = vrot.slane %v522, %v1081
        %v1115 = vunpack.c.l.b16 %v1047
        %v1116 = vunpack.c.l.b16 %v1048
        %v1117 = vunpack.c.l.b16 %v1049
        %v1118 = vunpack.c.l.b16 %v1050
        %v1119 = vunpack.c.l.b16 %v1051
        %v1120 = vunpack.c.l.b16 %v1052
        %v1121 = vunpack.c.l.b16 %v1053
        %v1122 = vunpack.c.l.b16 %v1054
        %v1123 = vunpack.c.l.b16 %v1055
        %v1124 = vunpack.c.l.b16 %v1056
        %v1125 = vunpack.c.l.b16 %v1057
        %v1126 = vunpack.c.l.b16 %v1058
        %v1127 = vunpack.c.l.b16 %v1059
        %v1128 = vunpack.c.l.b16 %v1060
        %v1129 = vunpack.c.l.b16 %v1061
        %v1130 = vunpack.c.l.b16 %v1062
        %v1131 = vunpack.c.l.b16 %v1063
        %v1132 = vunpack.c.l.b16 %v1064
        %v1133 = vunpack.c.l.b16 %v1065
        %v1134 = vunpack.c.l.b16 %v1066
        %v1135 = vunpack.c.l.b16 %v1067
        %v1136 = vunpack.c.l.b16 %v1068
        %v1137 = vunpack.c.l.b16 %v1069
        %v1138 = vunpack.c.l.b16 %v1070
        %v1139 = vunpack.c.l.b16 %v1071
        %v1140 = vunpack.c.l.b16 %v1072
        %v1141 = vunpack.c.l.b16 %v1073
        %v1142 = vunpack.c.l.b16 %v1074
        %v1143 = vunpack.c.l.b16 %v1075
        %v1144 = vunpack.c.l.b16 %v1076
        %v1145 = vunpack.c.l.b16 %v1077
        %v1146 = vunpack.c.l.b16 %v1078
        %v1147 = vpack.c.b16 %v1116, %v1115
        %v1148 = vpack.c.b16 %v1118, %v1117
        %v1149 = vpack.c.b16 %v1120, %v1119
        %v1150 = vpack.c.b16 %v1122, %v1121
        %v1151 = vpack.c.b16 %v1124, %v1123
        %v1152 = vpack.c.b16 %v1126, %v1125
        %v1153 = vpack.c.b16 %v1128, %v1127
        %v1154 = vpack.c.b16 %v1130, %v1129
        %v1155 = vpack.c.b16 %v1132, %v1131
        %v1156 = vpack.c.b16 %v1134, %v1133
        %v1157 = vpack.c.b16 %v1136, %v1135
        %v1158 = vpack.c.b16 %v1138, %v1137
        %v1159 = vpack.c.b16 %v1140, %v1139
        %v1160 = vpack.c.b16 %v1142, %v1141
        %v1161 = vpack.c.b16 %v1144, %v1143
        %v1162 = vpack.c.b16 %v1146, %v1145
        %1179 = vmatprep.subr.bf16.mxu0 0
        %1180 = vmatpush1.bf16.msra.mxu0 %v1147
        %1181 = vmatprep.subr.bf16.mxu0 0
        %1182 = vmatpush1.bf16.msra.mxu0 %v1148
        %1183 = vmatprep.subr.bf16.mxu0 0
        %1184 = vmatpush1.bf16.msra.mxu0 %v1149
        %1185 = vmatprep.subr.bf16.mxu0 0
        %1186 = vmatpush1.bf16.msra.mxu0 %v1150
        %1187 = vmatprep.subr.bf16.mxu0 0
        %1188 = vmatpush1.bf16.msra.mxu0 %v1151
        %1189 = vmatprep.subr.bf16.mxu0 0
        %1190 = vmatpush1.bf16.msra.mxu0 %v1152
        %1191 = vmatprep.subr.bf16.mxu0 0
        %1192 = vmatpush1.bf16.msra.mxu0 %v1153
        %1193 = vmatprep.subr.bf16.mxu0 0
        %1194 = vmatpush1.bf16.msra.mxu0 %v1154
        %1195 = vmatprep.subr.bf16.mxu0 0
        %1196 = vmatpush1.bf16.msra.mxu0 %v1155
        %1197 = vmatprep.subr.bf16.mxu0 0
        %1198 = vmatpush1.bf16.msra.mxu0 %v1156
        %1199 = vmatprep.subr.bf16.mxu0 0
        %1200 = vmatpush1.bf16.msra.mxu0 %v1157
        %1201 = vmatprep.subr.bf16.mxu0 0
        %1202 = vmatpush1.bf16.msra.mxu0 %v1158
        %1203 = vmatprep.subr.bf16.mxu0 0
        %1204 = vmatpush1.bf16.msra.mxu0 %v1159
        %1205 = vmatprep.subr.bf16.mxu0 0
        %1206 = vmatpush1.bf16.msra.mxu0 %v1160
        %1207 = vmatprep.subr.bf16.mxu0 0
        %1208 = vmatpush1.bf16.msra.mxu0 %v1161
        %1209 = vmatprep.subr.bf16.mxu0 0
        %1210 = vmatpush1.bf16.msra.mxu0 %v1162
        %1211 = vmatprep.mubr.bf16.mxu0 %v1016
        %1212 = vmatmul.mubr.bf16.gmra.mrb[0].mxu0 %v1015
        %v1213 = vpop.f32.mrb[0].mxu0
        %v1214 = vadd.f32 %v1082, %v1213
        %v1215 = vpop.f32.mrb[0].mxu0
        %v1216 = vpop.f32.mrb[0].mxu0
        %v1217 = vadd.f32 %v1082, %v1216
        %v1218 = vpop.f32.mrb[0].mxu0
        %1219 = vmatprep.mubr.bf16.mxu0 %v1018
        %1220 = vmatmul.mubr.bf16.gmra.mrb[0].mxu0 %v1017
        %v1221 = vpop.f32.mrb[0].mxu0
        %v1222 = vadd.f32 %v1082, %v1221
        %v1223 = vpop.f32.mrb[0].mxu0
        %v1224 = vpop.f32.mrb[0].mxu0
        %v1225 = vadd.f32 %v1082, %v1224
        %v1226 = vpop.f32.mrb[0].mxu0
        %1227 = vmatprep.mubr.bf16.mxu0 %v1020
        %1228 = vmatmul.mubr.bf16.gmra.mrb[0].mxu0 %v1019
        %v1229 = vpop.f32.mrb[0].mxu0
        %v1230 = vadd.f32 %v1082, %v1229
        %v1231 = vpop.f32.mrb[0].mxu0
        %v1232 = vpop.f32.mrb[0].mxu0
        %v1233 = vadd.f32 %v1082, %v1232
        %v1234 = vpop.f32.mrb[0].mxu0
        %1235 = vmatprep.mubr.bf16.mxu0 %v1022
        %1236 = vmatmul.mubr.bf16.gmra.mrb[0].mxu0 %v1021
        %v1237 = vpop.f32.mrb[0].mxu0
        %v1238 = vadd.f32 %v1082, %v1237
        %v1239 = vpop.f32.mrb[0].mxu0
        %v1240 = vpop.f32.mrb[0].mxu0
        %v1241 = vadd.f32 %v1082, %v1240
        %v1242 = vpop.f32.mrb[0].mxu0
        %1243 = vmatprep.mubr.bf16.mxu0 %v1024
        %1244 = vmatmul.mubr.bf16.gmra.mrb[0].mxu0 %v1023
        %v1245 = vpop.f32.mrb[0].mxu0
        %v1246 = vadd.f32 %v1082, %v1245
        %v1247 = vpop.f32.mrb[0].mxu0
        %v1248 = vpop.f32.mrb[0].mxu0
        %v1249 = vadd.f32 %v1082, %v1248
        %v1250 = vpop.f32.mrb[0].mxu0
        %1251 = vmatprep.mubr.bf16.mxu0 %v1026
        %1252 = vmatmul.mubr.bf16.gmra.mrb[0].mxu0 %v1025
        %v1253 = vpop.f32.mrb[0].mxu0
        %v1254 = vadd.f32 %v1082, %v1253
        %v1255 = vpop.f32.mrb[0].mxu0
        %v1256 = vpop.f32.mrb[0].mxu0
        %v1257 = vadd.f32 %v1082, %v1256
        %v1258 = vpop.f32.mrb[0].mxu0
        %1259 = vmatprep.mubr.bf16.mxu0 %v1028
        %1260 = vmatmul.mubr.bf16.gmra.mrb[0].mxu0 %v1027
        %v1261 = vpop.f32.mrb[0].mxu0
        %v1262 = vadd.f32 %v1082, %v1261
        %v1263 = vpop.f32.mrb[0].mxu0
        %v1264 = vpop.f32.mrb[0].mxu0
        %v1265 = vadd.f32 %v1082, %v1264
        %v1266 = vpop.f32.mrb[0].mxu0
        %1267 = vmatprep.mubr.bf16.mxu0 %v1030
        %1268 = vmatmul.mubr.bf16.gmra.mrb[0].mxu0 %v1029
        %v1269 = vpop.f32.mrb[0].mxu0
        %v1270 = vadd.f32 %v1082, %v1269
        %v1271 = vpop.f32.mrb[0].mxu0
        %v1272 = vpop.f32.mrb[0].mxu0
        %v1273 = vadd.f32 %v1082, %v1272
        %v1274 = vpop.f32.mrb[0].mxu0
        %1275 = vmatprep.mubr.bf16.mxu0 %v1032
        %1276 = vmatmul.mubr.bf16.gmra.mrb[0].mxu0 %v1031
        %v1277 = vpop.f32.mrb[0].mxu0
        %v1278 = vadd.f32 %v1082, %v1277
        %v1279 = vpop.f32.mrb[0].mxu0
        %v1280 = vpop.f32.mrb[0].mxu0
        %v1281 = vadd.f32 %v1082, %v1280
        %v1282 = vpop.f32.mrb[0].mxu0
        %1283 = vmatprep.mubr.bf16.mxu0 %v1034
        %1284 = vmatmul.mubr.bf16.gmra.mrb[0].mxu0 %v1033
        %v1285 = vpop.f32.mrb[0].mxu0
        %v1286 = vadd.f32 %v1082, %v1285
        %v1287 = vpop.f32.mrb[0].mxu0
        %v1288 = vpop.f32.mrb[0].mxu0
        %v1289 = vadd.f32 %v1082, %v1288
        %v1290 = vpop.f32.mrb[0].mxu0
        %1291 = vmatprep.mubr.bf16.mxu0 %v1036
        %1292 = vmatmul.mubr.bf16.gmra.mrb[0].mxu0 %v1035
        %v1293 = vpop.f32.mrb[0].mxu0
        %v1294 = vadd.f32 %v1082, %v1293
        %v1295 = vpop.f32.mrb[0].mxu0
        %v1296 = vpop.f32.mrb[0].mxu0
        %v1297 = vadd.f32 %v1082, %v1296
        %v1298 = vpop.f32.mrb[0].mxu0
        %1299 = vmatprep.mubr.bf16.mxu0 %v1038
        %1300 = vmatmul.mubr.bf16.gmra.mrb[0].mxu0 %v1037
        %v1301 = vpop.f32.mrb[0].mxu0
        %v1302 = vadd.f32 %v1082, %v1301
        %v1303 = vpop.f32.mrb[0].mxu0
        %v1304 = vpop.f32.mrb[0].mxu0
        %v1305 = vadd.f32 %v1082, %v1304
        %v1306 = vpop.f32.mrb[0].mxu0
        %1307 = vmatprep.mubr.bf16.mxu0 %v1040
        %1308 = vmatmul.mubr.bf16.gmra.mrb[0].mxu0 %v1039
        %v1309 = vpop.f32.mrb[0].mxu0
        %v1310 = vadd.f32 %v1082, %v1309
        %v1311 = vpop.f32.mrb[0].mxu0
        %v1312 = vpop.f32.mrb[0].mxu0
        %v1313 = vadd.f32 %v1082, %v1312
        %v1314 = vpop.f32.mrb[0].mxu0
        %1315 = vmatprep.mubr.bf16.mxu0 %v1042
        %1316 = vmatmul.mubr.bf16.gmra.mrb[0].mxu0 %v1041
        %v1317 = vpop.f32.mrb[0].mxu0
        %v1318 = vadd.f32 %v1082, %v1317
        %v1319 = vpop.f32.mrb[0].mxu0
        %v1320 = vpop.f32.mrb[0].mxu0
        %v1321 = vadd.f32 %v1082, %v1320
        %v1322 = vpop.f32.mrb[0].mxu0
        %1323 = vmatprep.mubr.bf16.mxu0 %v1044
        %1324 = vmatmul.mubr.bf16.gmra.mrb[0].mxu0 %v1043
        %v1325 = vpop.f32.mrb[0].mxu0
        %v1326 = vadd.f32 %v1082, %v1325
        %v1327 = vpop.f32.mrb[0].mxu0
        %v1328 = vpop.f32.mrb[0].mxu0
        %v1329 = vadd.f32 %v1082, %v1328
        %v1330 = vpop.f32.mrb[0].mxu0
        %1331 = vmatprep.mubr.bf16.mxu0 %v1046
        %1332 = vmatmul.mubr.bf16.gmra.mrb[0].mxu0 %v1045
        %v1333 = vpop.f32.mrb[0].mxu0
        %v1334 = vadd.f32 %v1082, %v1333
        %v1335 = vpop.f32.mrb[0].mxu0
        %v1336 = vpop.f32.mrb[0].mxu0
        %v1337 = vadd.f32 %v1082, %v1336
        %v1338 = vpop.f32.mrb[0].mxu0
        %1339 = vdwg.mxu0
        %v1340 = vmax.f32 %v1214, 0.0
        %v1341 = vmax.f32 %v1217, 0.0
        %v1342 = vmax.f32 %v1222, 0.0
        %v1343 = vmax.f32 %v1225, 0.0
        %v1344 = vmax.f32 %v1230, 0.0
        %v1345 = vmax.f32 %v1233, 0.0
        %v1346 = vmax.f32 %v1238, 0.0
        %v1347 = vmax.f32 %v1241, 0.0
        %v1348 = vmax.f32 %v1246, 0.0
        %v1349 = vmax.f32 %v1249, 0.0
        %v1350 = vmax.f32 %v1254, 0.0
        %v1351 = vmax.f32 %v1257, 0.0
        %v1352 = vmax.f32 %v1262, 0.0
        %v1353 = vmax.f32 %v1265, 0.0
        %v1354 = vmax.f32 %v1270, 0.0
        %v1355 = vmax.f32 %v1273, 0.0
        %v1356 = vmax.f32 %v1278, 0.0
        %v1357 = vmax.f32 %v1281, 0.0
        %v1358 = vmax.f32 %v1286, 0.0
        %v1359 = vmax.f32 %v1289, 0.0
        %v1360 = vmax.f32 %v1294, 0.0
        %v1361 = vmax.f32 %v1297, 0.0
        %v1362 = vmax.f32 %v1302, 0.0
        %v1363 = vmax.f32 %v1305, 0.0
        %v1364 = vmax.f32 %v1310, 0.0
        %v1365 = vmax.f32 %v1313, 0.0
        %v1366 = vmax.f32 %v1318, 0.0
        %v1367 = vmax.f32 %v1321, 0.0
        %v1368 = vmax.f32 %v1326, 0.0
        %v1369 = vmax.f32 %v1329, 0.0
        %v1370 = vmax.f32 %v1334, 0.0
        %v1371 = vmax.f32 %v1337, 0.0
        %v1372 = vpack.c.bf16 %v1341, %v1340
        %v1373 = vpack.c.bf16 %v1343, %v1342
        %v1374 = vpack.c.bf16 %v1345, %v1344
        %v1375 = vpack.c.bf16 %v1347, %v1346
        %v1376 = vpack.c.bf16 %v1349, %v1348
        %v1377 = vpack.c.bf16 %v1351, %v1350
        %v1378 = vpack.c.bf16 %v1353, %v1352
        %v1379 = vpack.c.bf16 %v1355, %v1354
        %v1380 = vpack.c.bf16 %v1357, %v1356
        %v1381 = vpack.c.bf16 %v1359, %v1358
        %v1382 = vpack.c.bf16 %v1361, %v1360
        %v1383 = vpack.c.bf16 %v1363, %v1362
        %v1384 = vpack.c.bf16 %v1365, %v1364
        %v1385 = vpack.c.bf16 %v1367, %v1366
        %v1386 = vpack.c.bf16 %v1369, %v1368
        %v1387 = vpack.c.bf16 %v1371, %v1370
        %v1388 = vld [vmem:[%s3] sm:$0xf]
        %v1389 = vld [vmem:[%s3 + $0x4] sm:$0xf]
        %v1390 = vld [vmem:[%s3 + $0x8] sm:$0xf]
        %v1391 = vld [vmem:[%s3 + $0xc] sm:$0xf]
        %v1392 = vld [vmem:[%s3 + $0x10] sm:$0xf]
        %v1393 = vld [vmem:[%s3 + $0x14] sm:$0xf]
        %v1394 = vld [vmem:[%s3 + $0x18] sm:$0xf]
        %v1395 = vld [vmem:[%s3 + $0x1c] sm:$0xf]
        %v1396 = vld [vmem:[%s3 + $0x20] sm:$0xf]
        %v1397 = vld [vmem:[%s3 + $0x24] sm:$0xf]
        %v1398 = vld [vmem:[%s3 + $0x28] sm:$0xf]
        %v1399 = vld [vmem:[%s3 + $0x2c] sm:$0xf]
        %v1400 = vld [vmem:[%s3 + $0x30] sm:$0xf]
        %v1401 = vld [vmem:[%s3 + $0x34] sm:$0xf]
        %v1402 = vld [vmem:[%s3 + $0x38] sm:$0xf]
        %v1403 = vld [vmem:[%s3 + $0x3c] sm:$0xf]
        %v1404 = vlaneseq
        %v1405 = vshrl.u32 %v1404, 7
        %v1406 = vsub.s32 2, %v1405
        %v1407 = vrot.slane %v522, %v1406
        %v1424 = vunpack.c.l.b16 %v1388
        %v1425 = vunpack.c.l.b16 %v1389
        %v1426 = vunpack.c.l.b16 %v1390
        %v1427 = vunpack.c.l.b16 %v1391
        %v1428 = vunpack.c.l.b16 %v1392
        %v1429 = vunpack.c.l.b16 %v1393
        %v1430 = vunpack.c.l.b16 %v1394
        %v1431 = vunpack.c.l.b16 %v1395
        %v1432 = vunpack.c.l.b16 %v1396
        %v1433 = vunpack.c.l.b16 %v1397
        %v1434 = vunpack.c.l.b16 %v1398
        %v1435 = vunpack.c.l.b16 %v1399
        %v1436 = vunpack.c.l.b16 %v1400
        %v1437 = vunpack.c.l.b16 %v1401
        %v1438 = vunpack.c.l.b16 %v1402
        %v1439 = vunpack.c.l.b16 %v1403
        %v1440 = vpack.c.b16 %v1425, %v1424
        %v1441 = vpack.c.b16 %v1427, %v1426
        %v1442 = vpack.c.b16 %v1429, %v1428
        %v1443 = vpack.c.b16 %v1431, %v1430
        %v1444 = vpack.c.b16 %v1433, %v1432
        %v1445 = vpack.c.b16 %v1435, %v1434
        %v1446 = vpack.c.b16 %v1437, %v1436
        %v1447 = vpack.c.b16 %v1439, %v1438
        %1456 = vmatprep.subr.bf16.mxu0 0
        %1457 = vmatpush1.bf16.msra.mxu0 %v1440
        %1458 = vmatprep.subr.bf16.mxu0 0
        %1459 = vmatpush1.bf16.msra.mxu0 %v1441
        %1460 = vmatprep.subr.bf16.mxu0 0
        %1461 = vmatpush1.bf16.msra.mxu0 %v1442
        %1462 = vmatprep.subr.bf16.mxu0 0
        %1463 = vmatpush1.bf16.msra.mxu0 %v1443
        %1464 = vmatprep.subr.bf16.mxu0 0
        %1465 = vmatpush1.bf16.msra.mxu0 %v1444
        %1466 = vmatprep.subr.bf16.mxu0 0
        %1467 = vmatpush1.bf16.msra.mxu0 %v1445
        %1468 = vmatprep.subr.bf16.mxu0 0
        %1469 = vmatpush1.bf16.msra.mxu0 %v1446
        %1470 = vmatprep.subr.bf16.mxu0 0
        %1471 = vmatpush1.bf16.msra.mxu0 %v1447
        %1472 = vmatprep.subr.bf16.mxu0 0
        %1473 = vmatpush1.bf16.msra.mxu0 0
        %1474 = vmatprep.subr.bf16.mxu0 0
        %1475 = vmatpush1.bf16.msra.mxu0 0
        %1476 = vmatprep.subr.bf16.mxu0 0
        %1477 = vmatpush1.bf16.msra.mxu0 0
        %1478 = vmatprep.subr.bf16.mxu0 0
        %1479 = vmatpush1.bf16.msra.mxu0 0
        %1480 = vmatprep.subr.bf16.mxu0 0
        %1481 = vmatpush1.bf16.msra.mxu0 0
        %1482 = vmatprep.subr.bf16.mxu0 0
        %1483 = vmatpush1.bf16.msra.mxu0 0
        %1484 = vmatprep.subr.bf16.mxu0 0
        %1485 = vmatpush1.bf16.msra.mxu0 0
        %1486 = vmatprep.subr.bf16.mxu0 0
        %1487 = vmatpush1.bf16.msra.mxu0 0
        %1488 = vmatprep.mubr.bf16.mxu0 0
        %1489 = vmatmul.mubr.bf16.gmra.mrb[0].mxu0 %v1372
        %v1490 = vpop.f32.mrb[0].mxu0
        %v1491 = vadd.f32 %v1407, %v1490
        %v1492 = vpop.f32.mrb[0].mxu0
        %v1493 = vpop.f32.mrb[0].mxu0
        %v1494 = vadd.f32 %v1407, %v1493
        %v1495 = vpop.f32.mrb[0].mxu0
        %1496 = vmatprep.mubr.bf16.mxu0 0
        %1497 = vmatmul.mubr.bf16.gmra.mrb[0].mxu0 %v1373
        %v1498 = vpop.f32.mrb[0].mxu0
        %v1499 = vadd.f32 %v1407, %v1498
        %v1500 = vpop.f32.mrb[0].mxu0
        %v1501 = vpop.f32.mrb[0].mxu0
        %v1502 = vadd.f32 %v1407, %v1501
        %v1503 = vpop.f32.mrb[0].mxu0
        %1504 = vmatprep.mubr.bf16.mxu0 0
        %1505 = vmatmul.mubr.bf16.gmra.mrb[0].mxu0 %v1374
        %v1506 = vpop.f32.mrb[0].mxu0
        %v1507 = vadd.f32 %v1407, %v1506
        %v1508 = vpop.f32.mrb[0].mxu0
        %v1509 = vpop.f32.mrb[0].mxu0
        %v1510 = vadd.f32 %v1407, %v1509
        %v1511 = vpop.f32.mrb[0].mxu0
        %1512 = vmatprep.mubr.bf16.mxu0 0
        %1513 = vmatmul.mubr.bf16.gmra.mrb[0].mxu0 %v1375
        %v1514 = vpop.f32.mrb[0].mxu0
        %v1515 = vadd.f32 %v1407, %v1514
        %v1516 = vpop.f32.mrb[0].mxu0
        %v1517 = vpop.f32.mrb[0].mxu0
        %v1518 = vadd.f32 %v1407, %v1517
        %v1519 = vpop.f32.mrb[0].mxu0
        %1520 = vmatprep.mubr.bf16.mxu0 0
        %1521 = vmatmul.mubr.bf16.gmra.mrb[0].mxu0 %v1376
        %v1522 = vpop.f32.mrb[0].mxu0
        %v1523 = vadd.f32 %v1407, %v1522
        %v1524 = vpop.f32.mrb[0].mxu0
        %v1525 = vpop.f32.mrb[0].mxu0
        %v1526 = vadd.f32 %v1407, %v1525
        %v1527 = vpop.f32.mrb[0].mxu0
        %1528 = vmatprep.mubr.bf16.mxu0 0
        %1529 = vmatmul.mubr.bf16.gmra.mrb[0].mxu0 %v1377
        %v1530 = vpop.f32.mrb[0].mxu0
        %v1531 = vadd.f32 %v1407, %v1530
        %v1532 = vpop.f32.mrb[0].mxu0
        %v1533 = vpop.f32.mrb[0].mxu0
        %v1534 = vadd.f32 %v1407, %v1533
        %v1535 = vpop.f32.mrb[0].mxu0
        %1536 = vmatprep.mubr.bf16.mxu0 0
        %1537 = vmatmul.mubr.bf16.gmra.mrb[0].mxu0 %v1378
        %v1538 = vpop.f32.mrb[0].mxu0
        %v1539 = vadd.f32 %v1407, %v1538
        %v1540 = vpop.f32.mrb[0].mxu0
        %v1541 = vpop.f32.mrb[0].mxu0
        %v1542 = vadd.f32 %v1407, %v1541
        %v1543 = vpop.f32.mrb[0].mxu0
        %1544 = vmatprep.mubr.bf16.mxu0 0
        %1545 = vmatmul.mubr.bf16.gmra.mrb[0].mxu0 %v1379
        %v1546 = vpop.f32.mrb[0].mxu0
        %v1547 = vadd.f32 %v1407, %v1546
        %v1548 = vpop.f32.mrb[0].mxu0
        %v1549 = vpop.f32.mrb[0].mxu0
        %v1550 = vadd.f32 %v1407, %v1549
        %v1551 = vpop.f32.mrb[0].mxu0
        %1552 = vmatprep.mubr.bf16.mxu0 0
        %1553 = vmatmul.mubr.bf16.gmra.mrb[0].mxu0 %v1380
        %v1554 = vpop.f32.mrb[0].mxu0
        %v1555 = vadd.f32 %v1407, %v1554
        %v1556 = vpop.f32.mrb[0].mxu0
        %v1557 = vpop.f32.mrb[0].mxu0
        %v1558 = vadd.f32 %v1407, %v1557
        %v1559 = vpop.f32.mrb[0].mxu0
        %1560 = vmatprep.mubr.bf16.mxu0 0
        %1561 = vmatmul.mubr.bf16.gmra.mrb[0].mxu0 %v1381
        %v1562 = vpop.f32.mrb[0].mxu0
        %v1563 = vadd.f32 %v1407, %v1562
        %v1564 = vpop.f32.mrb[0].mxu0
        %v1565 = vpop.f32.mrb[0].mxu0
        %v1566 = vadd.f32 %v1407, %v1565
        %v1567 = vpop.f32.mrb[0].mxu0
        %1568 = vmatprep.mubr.bf16.mxu0 0
        %1569 = vmatmul.mubr.bf16.gmra.mrb[0].mxu0 %v1382
        %v1570 = vpop.f32.mrb[0].mxu0
        %v1571 = vadd.f32 %v1407, %v1570
        %v1572 = vpop.f32.mrb[0].mxu0
        %v1573 = vpop.f32.mrb[0].mxu0
        %v1574 = vadd.f32 %v1407, %v1573
        %v1575 = vpop.f32.mrb[0].mxu0
        %1576 = vmatprep.mubr.bf16.mxu0 0
        %1577 = vmatmul.mubr.bf16.gmra.mrb[0].mxu0 %v1383
        %v1578 = vpop.f32.mrb[0].mxu0
        %v1579 = vadd.f32 %v1407, %v1578
        %v1580 = vpop.f32.mrb[0].mxu0
        %v1581 = vpop.f32.mrb[0].mxu0
        %v1582 = vadd.f32 %v1407, %v1581
        %v1583 = vpop.f32.mrb[0].mxu0
        %1584 = vmatprep.mubr.bf16.mxu0 0
        %1585 = vmatmul.mubr.bf16.gmra.mrb[0].mxu0 %v1384
        %v1586 = vpop.f32.mrb[0].mxu0
        %v1587 = vadd.f32 %v1407, %v1586
        %v1588 = vpop.f32.mrb[0].mxu0
        %v1589 = vpop.f32.mrb[0].mxu0
        %v1590 = vadd.f32 %v1407, %v1589
        %v1591 = vpop.f32.mrb[0].mxu0
        %1592 = vmatprep.mubr.bf16.mxu0 0
        %1593 = vmatmul.mubr.bf16.gmra.mrb[0].mxu0 %v1385
        %v1594 = vpop.f32.mrb[0].mxu0
        %v1595 = vadd.f32 %v1407, %v1594
        %v1596 = vpop.f32.mrb[0].mxu0
        %v1597 = vpop.f32.mrb[0].mxu0
        %v1598 = vadd.f32 %v1407, %v1597
        %v1599 = vpop.f32.mrb[0].mxu0
        %1600 = vmatprep.mubr.bf16.mxu0 0
        %1601 = vmatmul.mubr.bf16.gmra.mrb[0].mxu0 %v1386
        %v1602 = vpop.f32.mrb[0].mxu0
        %v1603 = vadd.f32 %v1407, %v1602
        %v1604 = vpop.f32.mrb[0].mxu0
        %v1605 = vpop.f32.mrb[0].mxu0
        %v1606 = vadd.f32 %v1407, %v1605
        %v1607 = vpop.f32.mrb[0].mxu0
        %1608 = vmatprep.mubr.bf16.mxu0 0
        %1609 = vmatmul.mubr.bf16.gmra.mrb[0].mxu0 %v1387
        %v1610 = vpop.f32.mrb[0].mxu0
        %v1611 = vadd.f32 %v1407, %v1610
        %v1612 = vpop.f32.mrb[0].mxu0
        %v1613 = vpop.f32.mrb[0].mxu0
        %v1614 = vadd.f32 %v1407, %v1613
        %v1615 = vpop.f32.mrb[0].mxu0
        %1616 = vdwg.mxu0
        %v1617 = vmax.f32 %v1491, 0.0
        %v1618 = vmax.f32 %v1494, 0.0
        %v1619 = vmax.f32 %v1499, 0.0
        %v1620 = vmax.f32 %v1502, 0.0
        %v1621 = vmax.f32 %v1507, 0.0
        %v1622 = vmax.f32 %v1510, 0.0
        %v1623 = vmax.f32 %v1515, 0.0
        %v1624 = vmax.f32 %v1518, 0.0
        %v1625 = vmax.f32 %v1523, 0.0
        %v1626 = vmax.f32 %v1526, 0.0
        %v1627 = vmax.f32 %v1531, 0.0
        %v1628 = vmax.f32 %v1534, 0.0
        %v1629 = vmax.f32 %v1539, 0.0
        %v1630 = vmax.f32 %v1542, 0.0
        %v1631 = vmax.f32 %v1547, 0.0
        %v1632 = vmax.f32 %v1550, 0.0
        %v1633 = vmax.f32 %v1555, 0.0
        %v1634 = vmax.f32 %v1558, 0.0
        %v1635 = vmax.f32 %v1563, 0.0
        %v1636 = vmax.f32 %v1566, 0.0
        %v1637 = vmax.f32 %v1571, 0.0
        %v1638 = vmax.f32 %v1574, 0.0
        %v1639 = vmax.f32 %v1579, 0.0
        %v1640 = vmax.f32 %v1582, 0.0
        %v1641 = vmax.f32 %v1587, 0.0
        %v1642 = vmax.f32 %v1590, 0.0
        %v1643 = vmax.f32 %v1595, 0.0
        %v1644 = vmax.f32 %v1598, 0.0
        %v1645 = vmax.f32 %v1603, 0.0
        %v1646 = vmax.f32 %v1606, 0.0
        %v1647 = vmax.f32 %v1611, 0.0
        %v1648 = vmax.f32 %v1614, 0.0
        %v1649 = vpack.c.bf16 %v1618, %v1617
        %v1650 = vpack.c.bf16 %v1620, %v1619
        %v1651 = vpack.c.bf16 %v1622, %v1621
        %v1652 = vpack.c.bf16 %v1624, %v1623
        %v1653 = vpack.c.bf16 %v1626, %v1625
        %v1654 = vpack.c.bf16 %v1628, %v1627
        %v1655 = vpack.c.bf16 %v1630, %v1629
        %v1656 = vpack.c.bf16 %v1632, %v1631
        %v1657 = vpack.c.bf16 %v1634, %v1633
        %v1658 = vpack.c.bf16 %v1636, %v1635
        %v1659 = vpack.c.bf16 %v1638, %v1637
        %v1660 = vpack.c.bf16 %v1640, %v1639
        %v1661 = vpack.c.bf16 %v1642, %v1641
        %v1662 = vpack.c.bf16 %v1644, %v1643
        %v1663 = vpack.c.bf16 %v1646, %v1645
        %v1664 = vpack.c.bf16 %v1648, %v1647
        %v1665 = vld [vmem:[%s4] sm:$0xf]
        %v1666 = vld [vmem:[%s4 + $0x4] sm:$0xf]
        %v1667 = vld [vmem:[%s4 + $0x8] sm:$0xf]
        %v1668 = vld [vmem:[%s4 + $0xc] sm:$0xf]
        %v1669 = vld [vmem:[%s4 + $0x10] sm:$0xf]
        %v1670 = vld [vmem:[%s4 + $0x14] sm:$0xf]
        %v1671 = vld [vmem:[%s4 + $0x18] sm:$0xf]
        %v1672 = vld [vmem:[%s4 + $0x1c] sm:$0xf]
        %v1673 = vlaneseq
        %v1674 = vshrl.u32 %v1673, 7
        %v1675 = vsub.s32 3, %v1674
        %v1676 = vrot.slane %v522, %v1675
        %v1685 = vunpack.c.l.b16 %v1665
        %v1686 = vunpack.c.l.b16 %v1666
        %v1687 = vunpack.c.l.b16 %v1667
        %v1688 = vunpack.c.l.b16 %v1668
        %v1689 = vunpack.c.l.b16 %v1669
        %v1690 = vunpack.c.l.b16 %v1670
        %v1691 = vunpack.c.l.b16 %v1671
        %v1692 = vunpack.c.l.b16 %v1672
        %v1693 = vpack.c.b16 %v1686, %v1685
        %v1694 = vpack.c.b16 %v1688, %v1687
        %v1695 = vpack.c.b16 %v1690, %v1689
        %v1696 = vpack.c.b16 %v1692, %v1691
        %vm1701 = vcmask 523264
        %v1703 = vsel %vm1701, %v1649, 0
        %v1706 = vsel %vm1701, %v1650, 0
        %v1709 = vsel %vm1701, %v1651, 0
        %v1712 = vsel %vm1701, %v1652, 0
        %v1715 = vsel %vm1701, %v1653, 0
        %v1718 = vsel %vm1701, %v1654, 0
        %v1721 = vsel %vm1701, %v1655, 0
        %v1724 = vsel %vm1701, %v1656, 0
        %v1727 = vsel %vm1701, %v1657, 0
        %v1730 = vsel %vm1701, %v1658, 0
        %v1733 = vsel %vm1701, %v1659, 0
        %v1736 = vsel %vm1701, %v1660, 0
        %v1739 = vsel %vm1701, %v1661, 0
        %v1742 = vsel %vm1701, %v1662, 0
        %v1745 = vsel %vm1701, %v1663, 0
        %v1748 = vsel %vm1701, %v1664, 0
        %1750 = vmatprep.subr.bf16.mxu0 0
        %1751 = vmatpush1.bf16.msra.mxu0 %v1693
        %1752 = vmatprep.subr.bf16.mxu0 0
        %1753 = vmatpush1.bf16.msra.mxu0 %v1694
        %1754 = vmatprep.subr.bf16.mxu0 0
        %1755 = vmatpush1.bf16.msra.mxu0 %v1695
        %1756 = vmatprep.subr.bf16.mxu0 0
        %1757 = vmatpush1.bf16.msra.mxu0 %v1696
        %1758 = vmatprep.subr.bf16.mxu0 0
        %1759 = vmatpush1.bf16.msra.mxu0 0
        %1760 = vmatprep.subr.bf16.mxu0 0
        %1761 = vmatpush1.bf16.msra.mxu0 0
        %1762 = vmatprep.subr.bf16.mxu0 0
        %1763 = vmatpush1.bf16.msra.mxu0 0
        %1764 = vmatprep.subr.bf16.mxu0 0
        %1765 = vmatpush1.bf16.msra.mxu0 0
        %1766 = vmatprep.subr.bf16.mxu0 0
        %1767 = vmatpush1.bf16.msra.mxu0 0
        %1768 = vmatprep.subr.bf16.mxu0 0
        %1769 = vmatpush1.bf16.msra.mxu0 0
        %1770 = vmatprep.subr.bf16.mxu0 0
        %1771 = vmatpush1.bf16.msra.mxu0 0
        %1772 = vmatprep.subr.bf16.mxu0 0
        %1773 = vmatpush1.bf16.msra.mxu0 0
        %1774 = vmatprep.subr.bf16.mxu0 0
        %1775 = vmatpush1.bf16.msra.mxu0 0
        %1776 = vmatprep.subr.bf16.mxu0 0
        %1777 = vmatpush1.bf16.msra.mxu0 0
        %1778 = vmatprep.subr.bf16.mxu0 0
        %1779 = vmatpush1.bf16.msra.mxu0 0
        %1780 = vmatprep.subr.bf16.mxu0 0
        %1781 = vmatpush1.bf16.msra.mxu0 0
        %1782 = vmatprep.mubr.bf16.mxu0 0
        %1783 = vmatmul.mubr.bf16.gmra.mrb[0].mxu0 %v1703
        %v1784 = vpop.f32.mrb[0].mxu0
        %v1785 = vadd.f32 %v1676, %v1784
        %v1786 = vpop.f32.mrb[0].mxu0
        %v1787 = vpop.f32.mrb[0].mxu0
        %v1788 = vadd.f32 %v1676, %v1787
        %v1789 = vpop.f32.mrb[0].mxu0
        %1790 = vmatprep.mubr.bf16.mxu0 0
        %1791 = vmatmul.mubr.bf16.gmra.mrb[0].mxu0 %v1706
        %v1792 = vpop.f32.mrb[0].mxu0
        %v1793 = vadd.f32 %v1676, %v1792
        %v1794 = vpop.f32.mrb[0].mxu0
        %v1795 = vpop.f32.mrb[0].mxu0
        %v1796 = vadd.f32 %v1676, %v1795
        %v1797 = vpop.f32.mrb[0].mxu0
        %1798 = vmatprep.mubr.bf16.mxu0 0
        %1799 = vmatmul.mubr.bf16.gmra.mrb[0].mxu0 %v1709
        %v1800 = vpop.f32.mrb[0].mxu0
        %v1801 = vadd.f32 %v1676, %v1800
        %v1802 = vpop.f32.mrb[0].mxu0
        %v1803 = vpop.f32.mrb[0].mxu0
        %v1804 = vadd.f32 %v1676, %v1803
        %v1805 = vpop.f32.mrb[0].mxu0
        %1806 = vmatprep.mubr.bf16.mxu0 0
        %1807 = vmatmul.mubr.bf16.gmra.mrb[0].mxu0 %v1712
        %v1808 = vpop.f32.mrb[0].mxu0
        %v1809 = vadd.f32 %v1676, %v1808
        %v1810 = vpop.f32.mrb[0].mxu0
        %v1811 = vpop.f32.mrb[0].mxu0
        %v1812 = vadd.f32 %v1676, %v1811
        %v1813 = vpop.f32.mrb[0].mxu0
        %1814 = vmatprep.mubr.bf16.mxu0 0
        %1815 = vmatmul.mubr.bf16.gmra.mrb[0].mxu0 %v1715
        %v1816 = vpop.f32.mrb[0].mxu0
        %v1817 = vadd.f32 %v1676, %v1816
        %v1818 = vpop.f32.mrb[0].mxu0
        %v1819 = vpop.f32.mrb[0].mxu0
        %v1820 = vadd.f32 %v1676, %v1819
        %v1821 = vpop.f32.mrb[0].mxu0
        %1822 = vmatprep.mubr.bf16.mxu0 0
        %1823 = vmatmul.mubr.bf16.gmra.mrb[0].mxu0 %v1718
        %v1824 = vpop.f32.mrb[0].mxu0
        %v1825 = vadd.f32 %v1676, %v1824
        %v1826 = vpop.f32.mrb[0].mxu0
        %v1827 = vpop.f32.mrb[0].mxu0
        %v1828 = vadd.f32 %v1676, %v1827
        %v1829 = vpop.f32.mrb[0].mxu0
        %1830 = vmatprep.mubr.bf16.mxu0 0
        %1831 = vmatmul.mubr.bf16.gmra.mrb[0].mxu0 %v1721
        %v1832 = vpop.f32.mrb[0].mxu0
        %v1833 = vadd.f32 %v1676, %v1832
        %v1834 = vpop.f32.mrb[0].mxu0
        %v1835 = vpop.f32.mrb[0].mxu0
        %v1836 = vadd.f32 %v1676, %v1835
        %v1837 = vpop.f32.mrb[0].mxu0
        %1838 = vmatprep.mubr.bf16.mxu0 0
        %1839 = vmatmul.mubr.bf16.gmra.mrb[0].mxu0 %v1724
        %v1840 = vpop.f32.mrb[0].mxu0
        %v1841 = vadd.f32 %v1676, %v1840
        %v1842 = vpop.f32.mrb[0].mxu0
        %v1843 = vpop.f32.mrb[0].mxu0
        %v1844 = vadd.f32 %v1676, %v1843
        %v1845 = vpop.f32.mrb[0].mxu0
        %1846 = vmatprep.mubr.bf16.mxu0 0
        %1847 = vmatmul.mubr.bf16.gmra.mrb[0].mxu0 %v1727
        %v1848 = vpop.f32.mrb[0].mxu0
        %v1849 = vadd.f32 %v1676, %v1848
        %v1850 = vpop.f32.mrb[0].mxu0
        %v1851 = vpop.f32.mrb[0].mxu0
        %v1852 = vadd.f32 %v1676, %v1851
        %v1853 = vpop.f32.mrb[0].mxu0
        %1854 = vmatprep.mubr.bf16.mxu0 0
        %1855 = vmatmul.mubr.bf16.gmra.mrb[0].mxu0 %v1730
        %v1856 = vpop.f32.mrb[0].mxu0
        %v1857 = vadd.f32 %v1676, %v1856
        %v1858 = vpop.f32.mrb[0].mxu0
        %v1859 = vpop.f32.mrb[0].mxu0
        %v1860 = vadd.f32 %v1676, %v1859
        %v1861 = vpop.f32.mrb[0].mxu0
        %1862 = vmatprep.mubr.bf16.mxu0 0
        %1863 = vmatmul.mubr.bf16.gmra.mrb[0].mxu0 %v1733
        %v1864 = vpop.f32.mrb[0].mxu0
        %v1865 = vadd.f32 %v1676, %v1864
        %v1866 = vpop.f32.mrb[0].mxu0
        %v1867 = vpop.f32.mrb[0].mxu0
        %v1868 = vadd.f32 %v1676, %v1867
        %v1869 = vpop.f32.mrb[0].mxu0
        %1870 = vmatprep.mubr.bf16.mxu0 0
        %1871 = vmatmul.mubr.bf16.gmra.mrb[0].mxu0 %v1736
        %v1872 = vpop.f32.mrb[0].mxu0
        %v1873 = vadd.f32 %v1676, %v1872
        %v1874 = vpop.f32.mrb[0].mxu0
        %v1875 = vpop.f32.mrb[0].mxu0
        %v1876 = vadd.f32 %v1676, %v1875
        %v1877 = vpop.f32.mrb[0].mxu0
        %1878 = vmatprep.mubr.bf16.mxu0 0
        %1879 = vmatmul.mubr.bf16.gmra.mrb[0].mxu0 %v1739
        %v1880 = vpop.f32.mrb[0].mxu0
        %v1881 = vadd.f32 %v1676, %v1880
        %v1882 = vpop.f32.mrb[0].mxu0
        %v1883 = vpop.f32.mrb[0].mxu0
        %v1884 = vadd.f32 %v1676, %v1883
        %v1885 = vpop.f32.mrb[0].mxu0
        %1886 = vmatprep.mubr.bf16.mxu0 0
        %1887 = vmatmul.mubr.bf16.gmra.mrb[0].mxu0 %v1742
        %v1888 = vpop.f32.mrb[0].mxu0
        %v1889 = vadd.f32 %v1676, %v1888
        %v1890 = vpop.f32.mrb[0].mxu0
        %v1891 = vpop.f32.mrb[0].mxu0
        %v1892 = vadd.f32 %v1676, %v1891
        %v1893 = vpop.f32.mrb[0].mxu0
        %1894 = vmatprep.mubr.bf16.mxu0 0
        %1895 = vmatmul.mubr.bf16.gmra.mrb[0].mxu0 %v1745
        %v1896 = vpop.f32.mrb[0].mxu0
        %v1897 = vadd.f32 %v1676, %v1896
        %v1898 = vpop.f32.mrb[0].mxu0
        %v1899 = vpop.f32.mrb[0].mxu0
        %v1900 = vadd.f32 %v1676, %v1899
        %v1901 = vpop.f32.mrb[0].mxu0
        %1902 = vmatprep.mubr.bf16.mxu0 0
        %1903 = vmatmul.mubr.bf16.gmra.mrb[0].mxu0 %v1748
        %v1904 = vpop.f32.mrb[0].mxu0
        %v1905 = vadd.f32 %v1676, %v1904
        %v1906 = vpop.f32.mrb[0].mxu0
        %v1907 = vpop.f32.mrb[0].mxu0
        %v1908 = vadd.f32 %v1676, %v1907
        %v1909 = vpop.f32.mrb[0].mxu0
        %1910 = vdwg.mxu0
        %v1911 = vmax.f32 %v1785, 0.0
        %v1912 = vmax.f32 %v1788, 0.0
        %v1913 = vmax.f32 %v1793, 0.0
        %v1914 = vmax.f32 %v1796, 0.0
        %v1915 = vmax.f32 %v1801, 0.0
        %v1916 = vmax.f32 %v1804, 0.0
        %v1917 = vmax.f32 %v1809, 0.0
        %v1918 = vmax.f32 %v1812, 0.0
        %v1919 = vmax.f32 %v1817, 0.0
        %v1920 = vmax.f32 %v1820, 0.0
        %v1921 = vmax.f32 %v1825, 0.0
        %v1922 = vmax.f32 %v1828, 0.0
        %v1923 = vmax.f32 %v1833, 0.0
        %v1924 = vmax.f32 %v1836, 0.0
        %v1925 = vmax.f32 %v1841, 0.0
        %v1926 = vmax.f32 %v1844, 0.0
        %v1927 = vmax.f32 %v1849, 0.0
        %v1928 = vmax.f32 %v1852, 0.0
        %v1929 = vmax.f32 %v1857, 0.0
        %v1930 = vmax.f32 %v1860, 0.0
        %v1931 = vmax.f32 %v1865, 0.0
        %v1932 = vmax.f32 %v1868, 0.0
        %v1933 = vmax.f32 %v1873, 0.0
        %v1934 = vmax.f32 %v1876, 0.0
        %v1935 = vmax.f32 %v1881, 0.0
        %v1936 = vmax.f32 %v1884, 0.0
        %v1937 = vmax.f32 %v1889, 0.0
        %v1938 = vmax.f32 %v1892, 0.0
        %v1939 = vmax.f32 %v1897, 0.0
        %v1940 = vmax.f32 %v1900, 0.0
        %v1941 = vmax.f32 %v1905, 0.0
        %v1942 = vmax.f32 %v1908, 0.0
        %v1943 = vpack.c.bf16 %v1912, %v1911
        %v1944 = vpack.c.bf16 %v1914, %v1913
        %v1945 = vpack.c.bf16 %v1916, %v1915
        %v1946 = vpack.c.bf16 %v1918, %v1917
        %v1947 = vpack.c.bf16 %v1920, %v1919
        %v1948 = vpack.c.bf16 %v1922, %v1921
        %v1949 = vpack.c.bf16 %v1924, %v1923
        %v1950 = vpack.c.bf16 %v1926, %v1925
        %v1951 = vpack.c.bf16 %v1928, %v1927
        %v1952 = vpack.c.bf16 %v1930, %v1929
        %v1953 = vpack.c.bf16 %v1932, %v1931
        %v1954 = vpack.c.bf16 %v1934, %v1933
        %v1955 = vpack.c.bf16 %v1936, %v1935
        %v1956 = vpack.c.bf16 %v1938, %v1937
        %v1957 = vpack.c.bf16 %v1940, %v1939
        %v1958 = vpack.c.bf16 %v1942, %v1941
        %v1959 = vld [vmem:[%s5] sm:$0xf]
        %v1960 = vld [vmem:[%s5 + $0x4] sm:$0xf]
        %v1961 = vld [vmem:[%s5 + $0x8] sm:$0xf]
        %v1962 = vld [vmem:[%s5 + $0xc] sm:$0xf]
        %v1963 = vlaneseq
        %v1964 = vshrl.u32 %v1963, 7
        %v1965 = vsub.s32 4, %v1964
        %v1966 = vrot.slane %v522, %v1965
        %v1971 = vunpack.c.l.b16 %v1959
        %v1972 = vunpack.c.l.b16 %v1960
        %v1973 = vunpack.c.l.b16 %v1961
        %v1974 = vunpack.c.l.b16 %v1962
        %v1975 = vpack.c.b16 %v1972, %v1971
        %v1976 = vpack.c.b16 %v1974, %v1973
        %vm1979 = vcmask 261120
        %v1981 = vsel %vm1979, %v1943, 0
        %v1984 = vsel %vm1979, %v1944, 0
        %v1987 = vsel %vm1979, %v1945, 0
        %v1990 = vsel %vm1979, %v1946, 0
        %v1993 = vsel %vm1979, %v1947, 0
        %v1996 = vsel %vm1979, %v1948, 0
        %v1999 = vsel %vm1979, %v1949, 0
        %v2002 = vsel %vm1979, %v1950, 0
        %v2005 = vsel %vm1979, %v1951, 0
        %v2008 = vsel %vm1979, %v1952, 0
        %v2011 = vsel %vm1979, %v1953, 0
        %v2014 = vsel %vm1979, %v1954, 0
        %v2017 = vsel %vm1979, %v1955, 0
        %v2020 = vsel %vm1979, %v1956, 0
        %v2023 = vsel %vm1979, %v1957, 0
        %v2026 = vsel %vm1979, %v1958, 0
        %2028 = vmatprep.subr.bf16.mxu0 0
        %2029 = vmatpush1.bf16.msra.mxu0 %v1975
        %2030 = vmatprep.subr.bf16.mxu0 0
        %2031 = vmatpush1.bf16.msra.mxu0 %v1976
        %2032 = vmatprep.subr.bf16.mxu0 0
        %2033 = vmatpush1.bf16.msra.mxu0 0
        %2034 = vmatprep.subr.bf16.mxu0 0
        %2035 = vmatpush1.bf16.msra.mxu0 0
        %2036 = vmatprep.subr.bf16.mxu0 0
        %2037 = vmatpush1.bf16.msra.mxu0 0
        %2038 = vmatprep.subr.bf16.mxu0 0
        %2039 = vmatpush1.bf16.msra.mxu0 0
        %2040 = vmatprep.subr.bf16.mxu0 0
        %2041 = vmatpush1.bf16.msra.mxu0 0
        %2042 = vmatprep.subr.bf16.mxu0 0
        %2043 = vmatpush1.bf16.msra.mxu0 0
        %2044 = vmatprep.subr.bf16.mxu0 0
        %2045 = vmatpush1.bf16.msra.mxu0 0
        %2046 = vmatprep.subr.bf16.mxu0 0
        %2047 = vmatpush1.bf16.msra.mxu0 0
        %2048 = vmatprep.subr.bf16.mxu0 0
        %2049 = vmatpush1.bf16.msra.mxu0 0
        %2050 = vmatprep.subr.bf16.mxu0 0
        %2051 = vmatpush1.bf16.msra.mxu0 0
        %2052 = vmatprep.subr.bf16.mxu0 0
        %2053 = vmatpush1.bf16.msra.mxu0 0
        %2054 = vmatprep.subr.bf16.mxu0 0
        %2055 = vmatpush1.bf16.msra.mxu0 0
        %2056 = vmatprep.subr.bf16.mxu0 0
        %2057 = vmatpush1.bf16.msra.mxu0 0
        %2058 = vmatprep.subr.bf16.mxu0 0
        %2059 = vmatpush1.bf16.msra.mxu0 0
        %2060 = vmatprep.mubr.bf16.mxu0 0
        %2061 = vmatmul.mubr.bf16.gmra.mrb[0].mxu0 %v1981
        %v2062 = vpop.f32.mrb[0].mxu0
        %v2063 = vadd.f32 %v1966, %v2062
        %v2064 = vpop.f32.mrb[0].mxu0
        %v2065 = vpop.f32.mrb[0].mxu0
        %v2066 = vadd.f32 %v1966, %v2065
        %v2067 = vpop.f32.mrb[0].mxu0
        %2068 = vmatprep.mubr.bf16.mxu0 0
        %2069 = vmatmul.mubr.bf16.gmra.mrb[0].mxu0 %v1984
        %v2070 = vpop.f32.mrb[0].mxu0
        %v2071 = vadd.f32 %v1966, %v2070
        %v2072 = vpop.f32.mrb[0].mxu0
        %v2073 = vpop.f32.mrb[0].mxu0
        %v2074 = vadd.f32 %v1966, %v2073
        %v2075 = vpop.f32.mrb[0].mxu0
        %2076 = vmatprep.mubr.bf16.mxu0 0
        %2077 = vmatmul.mubr.bf16.gmra.mrb[0].mxu0 %v1987
        %v2078 = vpop.f32.mrb[0].mxu0
        %v2079 = vadd.f32 %v1966, %v2078
        %v2080 = vpop.f32.mrb[0].mxu0
        %v2081 = vpop.f32.mrb[0].mxu0
        %v2082 = vadd.f32 %v1966, %v2081
        %v2083 = vpop.f32.mrb[0].mxu0
        %2084 = vmatprep.mubr.bf16.mxu0 0
        %2085 = vmatmul.mubr.bf16.gmra.mrb[0].mxu0 %v1990
        %v2086 = vpop.f32.mrb[0].mxu0
        %v2087 = vadd.f32 %v1966, %v2086
        %v2088 = vpop.f32.mrb[0].mxu0
        %v2089 = vpop.f32.mrb[0].mxu0
        %v2090 = vadd.f32 %v1966, %v2089
        %v2091 = vpop.f32.mrb[0].mxu0
        %2092 = vmatprep.mubr.bf16.mxu0 0
        %2093 = vmatmul.mubr.bf16.gmra.mrb[0].mxu0 %v1993
        %v2094 = vpop.f32.mrb[0].mxu0
        %v2095 = vadd.f32 %v1966, %v2094
        %v2096 = vpop.f32.mrb[0].mxu0
        %v2097 = vpop.f32.mrb[0].mxu0
        %v2098 = vadd.f32 %v1966, %v2097
        %v2099 = vpop.f32.mrb[0].mxu0
        %2100 = vmatprep.mubr.bf16.mxu0 0
        %2101 = vmatmul.mubr.bf16.gmra.mrb[0].mxu0 %v1996
        %v2102 = vpop.f32.mrb[0].mxu0
        %v2103 = vadd.f32 %v1966, %v2102
        %v2104 = vpop.f32.mrb[0].mxu0
        %v2105 = vpop.f32.mrb[0].mxu0
        %v2106 = vadd.f32 %v1966, %v2105
        %v2107 = vpop.f32.mrb[0].mxu0
        %2108 = vmatprep.mubr.bf16.mxu0 0
        %2109 = vmatmul.mubr.bf16.gmra.mrb[0].mxu0 %v1999
        %v2110 = vpop.f32.mrb[0].mxu0
        %v2111 = vadd.f32 %v1966, %v2110
        %v2112 = vpop.f32.mrb[0].mxu0
        %v2113 = vpop.f32.mrb[0].mxu0
        %v2114 = vadd.f32 %v1966, %v2113
        %v2115 = vpop.f32.mrb[0].mxu0
        %2116 = vmatprep.mubr.bf16.mxu0 0
        %2117 = vmatmul.mubr.bf16.gmra.mrb[0].mxu0 %v2002
        %v2118 = vpop.f32.mrb[0].mxu0
        %v2119 = vadd.f32 %v1966, %v2118
        %v2120 = vpop.f32.mrb[0].mxu0
        %v2121 = vpop.f32.mrb[0].mxu0
        %v2122 = vadd.f32 %v1966, %v2121
        %v2123 = vpop.f32.mrb[0].mxu0
        %2124 = vmatprep.mubr.bf16.mxu0 0
        %2125 = vmatmul.mubr.bf16.gmra.mrb[0].mxu0 %v2005
        %v2126 = vpop.f32.mrb[0].mxu0
        %v2127 = vadd.f32 %v1966, %v2126
        %v2128 = vpop.f32.mrb[0].mxu0
        %v2129 = vpop.f32.mrb[0].mxu0
        %v2130 = vadd.f32 %v1966, %v2129
        %v2131 = vpop.f32.mrb[0].mxu0
        %2132 = vmatprep.mubr.bf16.mxu0 0
        %2133 = vmatmul.mubr.bf16.gmra.mrb[0].mxu0 %v2008
        %v2134 = vpop.f32.mrb[0].mxu0
        %v2135 = vadd.f32 %v1966, %v2134
        %v2136 = vpop.f32.mrb[0].mxu0
        %v2137 = vpop.f32.mrb[0].mxu0
        %v2138 = vadd.f32 %v1966, %v2137
        %v2139 = vpop.f32.mrb[0].mxu0
        %2140 = vmatprep.mubr.bf16.mxu0 0
        %2141 = vmatmul.mubr.bf16.gmra.mrb[0].mxu0 %v2011
        %v2142 = vpop.f32.mrb[0].mxu0
        %v2143 = vadd.f32 %v1966, %v2142
        %v2144 = vpop.f32.mrb[0].mxu0
        %v2145 = vpop.f32.mrb[0].mxu0
        %v2146 = vadd.f32 %v1966, %v2145
        %v2147 = vpop.f32.mrb[0].mxu0
        %2148 = vmatprep.mubr.bf16.mxu0 0
        %2149 = vmatmul.mubr.bf16.gmra.mrb[0].mxu0 %v2014
        %v2150 = vpop.f32.mrb[0].mxu0
        %v2151 = vadd.f32 %v1966, %v2150
        %v2152 = vpop.f32.mrb[0].mxu0
        %v2153 = vpop.f32.mrb[0].mxu0
        %v2154 = vadd.f32 %v1966, %v2153
        %v2155 = vpop.f32.mrb[0].mxu0
        %2156 = vmatprep.mubr.bf16.mxu0 0
        %2157 = vmatmul.mubr.bf16.gmra.mrb[0].mxu0 %v2017
        %v2158 = vpop.f32.mrb[0].mxu0
        %v2159 = vadd.f32 %v1966, %v2158
        %v2160 = vpop.f32.mrb[0].mxu0
        %v2161 = vpop.f32.mrb[0].mxu0
        %v2162 = vadd.f32 %v1966, %v2161
        %v2163 = vpop.f32.mrb[0].mxu0
        %2164 = vmatprep.mubr.bf16.mxu0 0
        %2165 = vmatmul.mubr.bf16.gmra.mrb[0].mxu0 %v2020
        %v2166 = vpop.f32.mrb[0].mxu0
        %v2167 = vadd.f32 %v1966, %v2166
        %v2168 = vpop.f32.mrb[0].mxu0
        %v2169 = vpop.f32.mrb[0].mxu0
        %v2170 = vadd.f32 %v1966, %v2169
        %v2171 = vpop.f32.mrb[0].mxu0
        %2172 = vmatprep.mubr.bf16.mxu0 0
        %2173 = vmatmul.mubr.bf16.gmra.mrb[0].mxu0 %v2023
        %v2174 = vpop.f32.mrb[0].mxu0
        %v2175 = vadd.f32 %v1966, %v2174
        %v2176 = vpop.f32.mrb[0].mxu0
        %v2177 = vpop.f32.mrb[0].mxu0
        %v2178 = vadd.f32 %v1966, %v2177
        %v2179 = vpop.f32.mrb[0].mxu0
        %2180 = vmatprep.mubr.bf16.mxu0 0
        %2181 = vmatmul.mubr.bf16.gmra.mrb[0].mxu0 %v2026
        %v2182 = vpop.f32.mrb[0].mxu0
        %v2183 = vadd.f32 %v1966, %v2182
        %v2184 = vpop.f32.mrb[0].mxu0
        %v2185 = vpop.f32.mrb[0].mxu0
        %v2186 = vadd.f32 %v1966, %v2185
        %v2187 = vpop.f32.mrb[0].mxu0
        %2188 = vdwg.mxu0
        %v2189 = vpack.c.bf16 %v2066, %v2063
        %v2190 = vpack.c.bf16 %v2074, %v2071
        %v2191 = vpack.c.bf16 %v2082, %v2079
        %v2192 = vpack.c.bf16 %v2090, %v2087
        %v2193 = vpack.c.bf16 %v2098, %v2095
        %v2194 = vpack.c.bf16 %v2106, %v2103
        %v2195 = vpack.c.bf16 %v2114, %v2111
        %v2196 = vpack.c.bf16 %v2122, %v2119
        %v2197 = vpack.c.bf16 %v2130, %v2127
        %v2198 = vpack.c.bf16 %v2138, %v2135
        %v2199 = vpack.c.bf16 %v2146, %v2143
        %v2200 = vpack.c.bf16 %v2154, %v2151
        %v2201 = vpack.c.bf16 %v2162, %v2159
        %v2202 = vpack.c.bf16 %v2170, %v2167
        %v2203 = vpack.c.bf16 %v2178, %v2175
        %v2204 = vpack.c.bf16 %v2186, %v2183
        %v2205 = vld [vmem:[#allocation7] sm:$0xf]
        %v2206 = vld [vmem:[#allocation7 + $0x4] sm:$0xf]
        %v2207 = vlaneseq
        %v2208 = vshrl.u32 %v2207, 7
        %v2209 = vsub.s32 5, %v2208
        %v2210 = vrot.slane %v522, %v2209
        %v2213 = vunpack.c.l.b16 %v2205
        %v2214 = vunpack.c.l.b16 %v2206
        %v2215 = vpack.c.b16 %v2214, %v2213
        %vm2217 = vcmask 130048
        %v2219 = vsel %vm2217, %v2189, 0
        %v2222 = vsel %vm2217, %v2190, 0
        %v2225 = vsel %vm2217, %v2191, 0
        %v2228 = vsel %vm2217, %v2192, 0
        %v2231 = vsel %vm2217, %v2193, 0
        %v2234 = vsel %vm2217, %v2194, 0
        %v2237 = vsel %vm2217, %v2195, 0
        %v2240 = vsel %vm2217, %v2196, 0
        %v2243 = vsel %vm2217, %v2197, 0
        %v2246 = vsel %vm2217, %v2198, 0
        %v2249 = vsel %vm2217, %v2199, 0
        %v2252 = vsel %vm2217, %v2200, 0
        %v2255 = vsel %vm2217, %v2201, 0
        %v2258 = vsel %vm2217, %v2202, 0
        %v2261 = vsel %vm2217, %v2203, 0
        %v2264 = vsel %vm2217, %v2204, 0
        %2266 = vmatprep.subr.bf16.mxu0 0
        %2267 = vmatpush1.bf16.msra.mxu0 %v2215
        %2268 = vmatprep.subr.bf16.mxu0 0
        %2269 = vmatpush1.bf16.msra.mxu0 0
        %2270 = vmatprep.subr.bf16.mxu0 0
        %2271 = vmatpush1.bf16.msra.mxu0 0
        %2272 = vmatprep.subr.bf16.mxu0 0
        %2273 = vmatpush1.bf16.msra.mxu0 0
        %2274 = vmatprep.subr.bf16.mxu0 0
        %2275 = vmatpush1.bf16.msra.mxu0 0
        %2276 = vmatprep.subr.bf16.mxu0 0
        %2277 = vmatpush1.bf16.msra.mxu0 0
        %2278 = vmatprep.subr.bf16.mxu0 0
        %2279 = vmatpush1.bf16.msra.mxu0 0
        %2280 = vmatprep.subr.bf16.mxu0 0
        %2281 = vmatpush1.bf16.msra.mxu0 0
        %2282 = vmatprep.subr.bf16.mxu0 0
        %2283 = vmatpush1.bf16.msra.mxu0 0
        %2284 = vmatprep.subr.bf16.mxu0 0
        %2285 = vmatpush1.bf16.msra.mxu0 0
        %2286 = vmatprep.subr.bf16.mxu0 0
        %2287 = vmatpush1.bf16.msra.mxu0 0
        %2288 = vmatprep.subr.bf16.mxu0 0
        %2289 = vmatpush1.bf16.msra.mxu0 0
        %2290 = vmatprep.subr.bf16.mxu0 0
        %2291 = vmatpush1.bf16.msra.mxu0 0
        %2292 = vmatprep.subr.bf16.mxu0 0
        %2293 = vmatpush1.bf16.msra.mxu0 0
        %2294 = vmatprep.subr.bf16.mxu0 0
        %2295 = vmatpush1.bf16.msra.mxu0 0
        %2296 = vmatprep.subr.bf16.mxu0 0
        %2297 = vmatpush1.bf16.msra.mxu0 0
        %2298 = vmatprep.mubr.bf16.mxu0 0
        %2299 = vmatmul.mubr.bf16.gmra.mrb[0].mxu0 %v2219
        %v2300 = vpop.f32.mrb[0].mxu0
        %v2301 = vadd.f32 %v2210, %v2300
        %v2302 = vpop.f32.mrb[0].mxu0
        %v2303 = vpop.f32.mrb[0].mxu0
        %v2304 = vadd.f32 %v2210, %v2303
        %v2305 = vpop.f32.mrb[0].mxu0
        %2306 = vmatprep.mubr.bf16.mxu0 0
        %2307 = vmatmul.mubr.bf16.gmra.mrb[0].mxu0 %v2222
        %v2308 = vpop.f32.mrb[0].mxu0
        %v2309 = vadd.f32 %v2210, %v2308
        %v2310 = vpop.f32.mrb[0].mxu0
        %v2311 = vpop.f32.mrb[0].mxu0
        %v2312 = vadd.f32 %v2210, %v2311
        %v2313 = vpop.f32.mrb[0].mxu0
        %2314 = vmatprep.mubr.bf16.mxu0 0
        %2315 = vmatmul.mubr.bf16.gmra.mrb[0].mxu0 %v2225
        %v2316 = vpop.f32.mrb[0].mxu0
        %v2317 = vadd.f32 %v2210, %v2316
        %v2318 = vpop.f32.mrb[0].mxu0
        %v2319 = vpop.f32.mrb[0].mxu0
        %v2320 = vadd.f32 %v2210, %v2319
        %v2321 = vpop.f32.mrb[0].mxu0
        %2322 = vmatprep.mubr.bf16.mxu0 0
        %2323 = vmatmul.mubr.bf16.gmra.mrb[0].mxu0 %v2228
        %v2324 = vpop.f32.mrb[0].mxu0
        %v2325 = vadd.f32 %v2210, %v2324
        %v2326 = vpop.f32.mrb[0].mxu0
        %v2327 = vpop.f32.mrb[0].mxu0
        %v2328 = vadd.f32 %v2210, %v2327
        %v2329 = vpop.f32.mrb[0].mxu0
        %2330 = vmatprep.mubr.bf16.mxu0 0
        %2331 = vmatmul.mubr.bf16.gmra.mrb[0].mxu0 %v2231
        %v2332 = vpop.f32.mrb[0].mxu0
        %v2333 = vadd.f32 %v2210, %v2332
        %v2334 = vpop.f32.mrb[0].mxu0
        %v2335 = vpop.f32.mrb[0].mxu0
        %v2336 = vadd.f32 %v2210, %v2335
        %v2337 = vpop.f32.mrb[0].mxu0
        %2338 = vmatprep.mubr.bf16.mxu0 0
        %2339 = vmatmul.mubr.bf16.gmra.mrb[0].mxu0 %v2234
        %v2340 = vpop.f32.mrb[0].mxu0
        %v2341 = vadd.f32 %v2210, %v2340
        %v2342 = vpop.f32.mrb[0].mxu0
        %v2343 = vpop.f32.mrb[0].mxu0
        %v2344 = vadd.f32 %v2210, %v2343
        %v2345 = vpop.f32.mrb[0].mxu0
        %2346 = vmatprep.mubr.bf16.mxu0 0
        %2347 = vmatmul.mubr.bf16.gmra.mrb[0].mxu0 %v2237
        %v2348 = vpop.f32.mrb[0].mxu0
        %v2349 = vadd.f32 %v2210, %v2348
        %v2350 = vpop.f32.mrb[0].mxu0
        %v2351 = vpop.f32.mrb[0].mxu0
        %v2352 = vadd.f32 %v2210, %v2351
        %v2353 = vpop.f32.mrb[0].mxu0
        %2354 = vmatprep.mubr.bf16.mxu0 0
        %2355 = vmatmul.mubr.bf16.gmra.mrb[0].mxu0 %v2240
        %v2356 = vpop.f32.mrb[0].mxu0
        %v2357 = vadd.f32 %v2210, %v2356
        %v2358 = vpop.f32.mrb[0].mxu0
        %v2359 = vpop.f32.mrb[0].mxu0
        %v2360 = vadd.f32 %v2210, %v2359
        %v2361 = vpop.f32.mrb[0].mxu0
        %2362 = vmatprep.mubr.bf16.mxu0 0
        %2363 = vmatmul.mubr.bf16.gmra.mrb[0].mxu0 %v2243
        %v2364 = vpop.f32.mrb[0].mxu0
        %v2365 = vadd.f32 %v2210, %v2364
        %v2366 = vpop.f32.mrb[0].mxu0
        %v2367 = vpop.f32.mrb[0].mxu0
        %v2368 = vadd.f32 %v2210, %v2367
        %v2369 = vpop.f32.mrb[0].mxu0
        %2370 = vmatprep.mubr.bf16.mxu0 0
        %2371 = vmatmul.mubr.bf16.gmra.mrb[0].mxu0 %v2246
        %v2372 = vpop.f32.mrb[0].mxu0
        %v2373 = vadd.f32 %v2210, %v2372
        %v2374 = vpop.f32.mrb[0].mxu0
        %v2375 = vpop.f32.mrb[0].mxu0
        %v2376 = vadd.f32 %v2210, %v2375
        %v2377 = vpop.f32.mrb[0].mxu0
        %2378 = vmatprep.mubr.bf16.mxu0 0
        %2379 = vmatmul.mubr.bf16.gmra.mrb[0].mxu0 %v2249
        %v2380 = vpop.f32.mrb[0].mxu0
        %v2381 = vadd.f32 %v2210, %v2380
        %v2382 = vpop.f32.mrb[0].mxu0
        %v2383 = vpop.f32.mrb[0].mxu0
        %v2384 = vadd.f32 %v2210, %v2383
        %v2385 = vpop.f32.mrb[0].mxu0
        %2386 = vmatprep.mubr.bf16.mxu0 0
        %2387 = vmatmul.mubr.bf16.gmra.mrb[0].mxu0 %v2252
        %v2388 = vpop.f32.mrb[0].mxu0
        %v2389 = vadd.f32 %v2210, %v2388
        %v2390 = vpop.f32.mrb[0].mxu0
        %v2391 = vpop.f32.mrb[0].mxu0
        %v2392 = vadd.f32 %v2210, %v2391
        %v2393 = vpop.f32.mrb[0].mxu0
        %2394 = vmatprep.mubr.bf16.mxu0 0
        %2395 = vmatmul.mubr.bf16.gmra.mrb[0].mxu0 %v2255
        %v2396 = vpop.f32.mrb[0].mxu0
        %v2397 = vadd.f32 %v2210, %v2396
        %v2398 = vpop.f32.mrb[0].mxu0
        %v2399 = vpop.f32.mrb[0].mxu0
        %v2400 = vadd.f32 %v2210, %v2399
        %v2401 = vpop.f32.mrb[0].mxu0
        %2402 = vmatprep.mubr.bf16.mxu0 0
        %2403 = vmatmul.mubr.bf16.gmra.mrb[0].mxu0 %v2258
        %v2404 = vpop.f32.mrb[0].mxu0
        %v2405 = vadd.f32 %v2210, %v2404
        %v2406 = vpop.f32.mrb[0].mxu0
        %v2407 = vpop.f32.mrb[0].mxu0
        %v2408 = vadd.f32 %v2210, %v2407
        %v2409 = vpop.f32.mrb[0].mxu0
        %2410 = vmatprep.mubr.bf16.mxu0 0
        %2411 = vmatmul.mubr.bf16.gmra.mrb[0].mxu0 %v2261
        %v2412 = vpop.f32.mrb[0].mxu0
        %v2413 = vadd.f32 %v2210, %v2412
        %v2414 = vpop.f32.mrb[0].mxu0
        %v2415 = vpop.f32.mrb[0].mxu0
        %v2416 = vadd.f32 %v2210, %v2415
        %v2417 = vpop.f32.mrb[0].mxu0
        %2418 = vmatprep.mubr.bf16.mxu0 0
        %2419 = vmatmul.mubr.bf16.gmra.mrb[0].mxu0 %v2264
        %v2420 = vpop.f32.mrb[0].mxu0
        %v2421 = vadd.f32 %v2210, %v2420
        %v2422 = vpop.f32.mrb[0].mxu0
        %v2423 = vpop.f32.mrb[0].mxu0
        %v2424 = vadd.f32 %v2210, %v2423
        %v2425 = vpop.f32.mrb[0].mxu0
        %2426 = vdwg.mxu0
        %v2427 = vmax.f32 %v2301, 0.0
        %v2428 = vmax.f32 %v2304, 0.0
        %v2429 = vmax.f32 %v2309, 0.0
        %v2430 = vmax.f32 %v2312, 0.0
        %v2431 = vmax.f32 %v2317, 0.0
        %v2432 = vmax.f32 %v2320, 0.0
        %v2433 = vmax.f32 %v2325, 0.0
        %v2434 = vmax.f32 %v2328, 0.0
        %v2435 = vmax.f32 %v2333, 0.0
        %v2436 = vmax.f32 %v2336, 0.0
        %v2437 = vmax.f32 %v2341, 0.0
        %v2438 = vmax.f32 %v2344, 0.0
        %v2439 = vmax.f32 %v2349, 0.0
        %v2440 = vmax.f32 %v2352, 0.0
        %v2441 = vmax.f32 %v2357, 0.0
        %v2442 = vmax.f32 %v2360, 0.0
        %v2443 = vmax.f32 %v2365, 0.0
        %v2444 = vmax.f32 %v2368, 0.0
        %v2445 = vmax.f32 %v2373, 0.0
        %v2446 = vmax.f32 %v2376, 0.0
        %v2447 = vmax.f32 %v2381, 0.0
        %v2448 = vmax.f32 %v2384, 0.0
        %v2449 = vmax.f32 %v2389, 0.0
        %v2450 = vmax.f32 %v2392, 0.0
        %v2451 = vmax.f32 %v2397, 0.0
        %v2452 = vmax.f32 %v2400, 0.0
        %v2453 = vmax.f32 %v2405, 0.0
        %v2454 = vmax.f32 %v2408, 0.0
        %v2455 = vmax.f32 %v2413, 0.0
        %v2456 = vmax.f32 %v2416, 0.0
        %v2457 = vmax.f32 %v2421, 0.0
        %v2458 = vmax.f32 %v2424, 0.0
        %v2459 = vpack.c.bf16 %v2428, %v2427
        %v2460 = vpack.c.bf16 %v2430, %v2429
        %v2461 = vpack.c.bf16 %v2432, %v2431
        %v2462 = vpack.c.bf16 %v2434, %v2433
        %v2463 = vpack.c.bf16 %v2436, %v2435
        %v2464 = vpack.c.bf16 %v2438, %v2437
        %v2465 = vpack.c.bf16 %v2440, %v2439
        %v2466 = vpack.c.bf16 %v2442, %v2441
        %v2467 = vpack.c.bf16 %v2444, %v2443
        %v2468 = vpack.c.bf16 %v2446, %v2445
        %v2469 = vpack.c.bf16 %v2448, %v2447
        %v2470 = vpack.c.bf16 %v2450, %v2449
        %v2471 = vpack.c.bf16 %v2452, %v2451
        %v2472 = vpack.c.bf16 %v2454, %v2453
        %v2473 = vpack.c.bf16 %v2456, %v2455
        %v2474 = vpack.c.bf16 %v2458, %v2457
        %v2475 = vld [vmem:[#allocation8] sm:$0xf]
        %v2476 = vld [vmem:[#allocation8 + $0x4] sm:$0xf]
        %v2477 = vld [vmem:[#allocation8 + $0x8] sm:$0xf]
        %v2478 = vld [vmem:[#allocation8 + $0xc] sm:$0xf]
        %v2479 = vlaneseq
        %v2480 = vshrl.u32 %v2479, 7
        %v2481 = vsub.s32 6, %v2480
        %v2482 = vrot.slane %v522, %v2481
        %v2487 = vunpack.c.l.b16 %v2475
        %v2488 = vunpack.c.l.b16 %v2476
        %v2489 = vunpack.c.l.b16 %v2477
        %v2490 = vunpack.c.l.b16 %v2478
        %v2491 = vpack.c.b16 %v2488, %v2487
        %v2492 = vpack.c.b16 %v2490, %v2489
        %v2496 = vsel %vm1979, %v2459, 0
        %v2499 = vsel %vm1979, %v2460, 0
        %v2502 = vsel %vm1979, %v2461, 0
        %v2505 = vsel %vm1979, %v2462, 0
        %v2508 = vsel %vm1979, %v2463, 0
        %v2511 = vsel %vm1979, %v2464, 0
        %v2514 = vsel %vm1979, %v2465, 0
        %v2517 = vsel %vm1979, %v2466, 0
        %v2520 = vsel %vm1979, %v2467, 0
        %v2523 = vsel %vm1979, %v2468, 0
        %v2526 = vsel %vm1979, %v2469, 0
        %v2529 = vsel %vm1979, %v2470, 0
        %v2532 = vsel %vm1979, %v2471, 0
        %v2535 = vsel %vm1979, %v2472, 0
        %v2538 = vsel %vm1979, %v2473, 0
        %v2541 = vsel %vm1979, %v2474, 0
        %2543 = vmatprep.subr.bf16.mxu0 0
        %2544 = vmatpush1.bf16.msra.mxu0 %v2491
        %2545 = vmatprep.subr.bf16.mxu0 0
        %2546 = vmatpush1.bf16.msra.mxu0 %v2492
        %2547 = vmatprep.subr.bf16.mxu0 0
        %2548 = vmatpush1.bf16.msra.mxu0 0
        %2549 = vmatprep.subr.bf16.mxu0 0
        %2550 = vmatpush1.bf16.msra.mxu0 0
        %2551 = vmatprep.subr.bf16.mxu0 0
        %2552 = vmatpush1.bf16.msra.mxu0 0
        %2553 = vmatprep.subr.bf16.mxu0 0
        %2554 = vmatpush1.bf16.msra.mxu0 0
        %2555 = vmatprep.subr.bf16.mxu0 0
        %2556 = vmatpush1.bf16.msra.mxu0 0
        %2557 = vmatprep.subr.bf16.mxu0 0
        %2558 = vmatpush1.bf16.msra.mxu0 0
        %2559 = vmatprep.subr.bf16.mxu0 0
        %2560 = vmatpush1.bf16.msra.mxu0 0
        %2561 = vmatprep.subr.bf16.mxu0 0
        %2562 = vmatpush1.bf16.msra.mxu0 0
        %2563 = vmatprep.subr.bf16.mxu0 0
        %2564 = vmatpush1.bf16.msra.mxu0 0
        %2565 = vmatprep.subr.bf16.mxu0 0
        %2566 = vmatpush1.bf16.msra.mxu0 0
        %2567 = vmatprep.subr.bf16.mxu0 0
        %2568 = vmatpush1.bf16.msra.mxu0 0
        %2569 = vmatprep.subr.bf16.mxu0 0
        %2570 = vmatpush1.bf16.msra.mxu0 0
        %2571 = vmatprep.subr.bf16.mxu0 0
        %2572 = vmatpush1.bf16.msra.mxu0 0
        %2573 = vmatprep.subr.bf16.mxu0 0
        %2574 = vmatpush1.bf16.msra.mxu0 0
        %2575 = vmatprep.mubr.bf16.mxu0 0
        %2576 = vmatmul.mubr.bf16.gmra.mrb[0].mxu0 %v2496
        %v2577 = vpop.f32.mrb[0].mxu0
        %v2578 = vadd.f32 %v2482, %v2577
        %v2579 = vpop.f32.mrb[0].mxu0
        %v2580 = vpop.f32.mrb[0].mxu0
        %v2581 = vadd.f32 %v2482, %v2580
        %v2582 = vpop.f32.mrb[0].mxu0
        %2583 = vmatprep.mubr.bf16.mxu0 0
        %2584 = vmatmul.mubr.bf16.gmra.mrb[0].mxu0 %v2499
        %v2585 = vpop.f32.mrb[0].mxu0
        %v2586 = vadd.f32 %v2482, %v2585
        %v2587 = vpop.f32.mrb[0].mxu0
        %v2588 = vpop.f32.mrb[0].mxu0
        %v2589 = vadd.f32 %v2482, %v2588
        %v2590 = vpop.f32.mrb[0].mxu0
        %2591 = vmatprep.mubr.bf16.mxu0 0
        %2592 = vmatmul.mubr.bf16.gmra.mrb[0].mxu0 %v2502
        %v2593 = vpop.f32.mrb[0].mxu0
        %v2594 = vadd.f32 %v2482, %v2593
        %v2595 = vpop.f32.mrb[0].mxu0
        %v2596 = vpop.f32.mrb[0].mxu0
        %v2597 = vadd.f32 %v2482, %v2596
        %v2598 = vpop.f32.mrb[0].mxu0
        %2599 = vmatprep.mubr.bf16.mxu0 0
        %2600 = vmatmul.mubr.bf16.gmra.mrb[0].mxu0 %v2505
        %v2601 = vpop.f32.mrb[0].mxu0
        %v2602 = vadd.f32 %v2482, %v2601
        %v2603 = vpop.f32.mrb[0].mxu0
        %v2604 = vpop.f32.mrb[0].mxu0
        %v2605 = vadd.f32 %v2482, %v2604
        %v2606 = vpop.f32.mrb[0].mxu0
        %2607 = vmatprep.mubr.bf16.mxu0 0
        %2608 = vmatmul.mubr.bf16.gmra.mrb[0].mxu0 %v2508
        %v2609 = vpop.f32.mrb[0].mxu0
        %v2610 = vadd.f32 %v2482, %v2609
        %v2611 = vpop.f32.mrb[0].mxu0
        %v2612 = vpop.f32.mrb[0].mxu0
        %v2613 = vadd.f32 %v2482, %v2612
        %v2614 = vpop.f32.mrb[0].mxu0
        %2615 = vmatprep.mubr.bf16.mxu0 0
        %2616 = vmatmul.mubr.bf16.gmra.mrb[0].mxu0 %v2511
        %v2617 = vpop.f32.mrb[0].mxu0
        %v2618 = vadd.f32 %v2482, %v2617
        %v2619 = vpop.f32.mrb[0].mxu0
        %v2620 = vpop.f32.mrb[0].mxu0
        %v2621 = vadd.f32 %v2482, %v2620
        %v2622 = vpop.f32.mrb[0].mxu0
        %2623 = vmatprep.mubr.bf16.mxu0 0
        %2624 = vmatmul.mubr.bf16.gmra.mrb[0].mxu0 %v2514
        %v2625 = vpop.f32.mrb[0].mxu0
        %v2626 = vadd.f32 %v2482, %v2625
        %v2627 = vpop.f32.mrb[0].mxu0
        %v2628 = vpop.f32.mrb[0].mxu0
        %v2629 = vadd.f32 %v2482, %v2628
        %v2630 = vpop.f32.mrb[0].mxu0
        %2631 = vmatprep.mubr.bf16.mxu0 0
        %2632 = vmatmul.mubr.bf16.gmra.mrb[0].mxu0 %v2517
        %v2633 = vpop.f32.mrb[0].mxu0
        %v2634 = vadd.f32 %v2482, %v2633
        %v2635 = vpop.f32.mrb[0].mxu0
        %v2636 = vpop.f32.mrb[0].mxu0
        %v2637 = vadd.f32 %v2482, %v2636
        %v2638 = vpop.f32.mrb[0].mxu0
        %2639 = vmatprep.mubr.bf16.mxu0 0
        %2640 = vmatmul.mubr.bf16.gmra.mrb[0].mxu0 %v2520
        %v2641 = vpop.f32.mrb[0].mxu0
        %v2642 = vadd.f32 %v2482, %v2641
        %v2643 = vpop.f32.mrb[0].mxu0
        %v2644 = vpop.f32.mrb[0].mxu0
        %v2645 = vadd.f32 %v2482, %v2644
        %v2646 = vpop.f32.mrb[0].mxu0
        %2647 = vmatprep.mubr.bf16.mxu0 0
        %2648 = vmatmul.mubr.bf16.gmra.mrb[0].mxu0 %v2523
        %v2649 = vpop.f32.mrb[0].mxu0
        %v2650 = vadd.f32 %v2482, %v2649
        %v2651 = vpop.f32.mrb[0].mxu0
        %v2652 = vpop.f32.mrb[0].mxu0
        %v2653 = vadd.f32 %v2482, %v2652
        %v2654 = vpop.f32.mrb[0].mxu0
        %2655 = vmatprep.mubr.bf16.mxu0 0
        %2656 = vmatmul.mubr.bf16.gmra.mrb[0].mxu0 %v2526
        %v2657 = vpop.f32.mrb[0].mxu0
        %v2658 = vadd.f32 %v2482, %v2657
        %v2659 = vpop.f32.mrb[0].mxu0
        %v2660 = vpop.f32.mrb[0].mxu0
        %v2661 = vadd.f32 %v2482, %v2660
        %v2662 = vpop.f32.mrb[0].mxu0
        %2663 = vmatprep.mubr.bf16.mxu0 0
        %2664 = vmatmul.mubr.bf16.gmra.mrb[0].mxu0 %v2529
        %v2665 = vpop.f32.mrb[0].mxu0
        %v2666 = vadd.f32 %v2482, %v2665
        %v2667 = vpop.f32.mrb[0].mxu0
        %v2668 = vpop.f32.mrb[0].mxu0
        %v2669 = vadd.f32 %v2482, %v2668
        %v2670 = vpop.f32.mrb[0].mxu0
        %2671 = vmatprep.mubr.bf16.mxu0 0
        %2672 = vmatmul.mubr.bf16.gmra.mrb[0].mxu0 %v2532
        %v2673 = vpop.f32.mrb[0].mxu0
        %v2674 = vadd.f32 %v2482, %v2673
        %v2675 = vpop.f32.mrb[0].mxu0
        %v2676 = vpop.f32.mrb[0].mxu0
        %v2677 = vadd.f32 %v2482, %v2676
        %v2678 = vpop.f32.mrb[0].mxu0
        %2679 = vmatprep.mubr.bf16.mxu0 0
        %2680 = vmatmul.mubr.bf16.gmra.mrb[0].mxu0 %v2535
        %v2681 = vpop.f32.mrb[0].mxu0
        %v2682 = vadd.f32 %v2482, %v2681
        %v2683 = vpop.f32.mrb[0].mxu0
        %v2684 = vpop.f32.mrb[0].mxu0
        %v2685 = vadd.f32 %v2482, %v2684
        %v2686 = vpop.f32.mrb[0].mxu0
        %2687 = vmatprep.mubr.bf16.mxu0 0
        %2688 = vmatmul.mubr.bf16.gmra.mrb[0].mxu0 %v2538
        %v2689 = vpop.f32.mrb[0].mxu0
        %v2690 = vadd.f32 %v2482, %v2689
        %v2691 = vpop.f32.mrb[0].mxu0
        %v2692 = vpop.f32.mrb[0].mxu0
        %v2693 = vadd.f32 %v2482, %v2692
        %v2694 = vpop.f32.mrb[0].mxu0
        %2695 = vmatprep.mubr.bf16.mxu0 0
        %2696 = vmatmul.mubr.bf16.gmra.mrb[0].mxu0 %v2541
        %v2697 = vpop.f32.mrb[0].mxu0
        %v2698 = vadd.f32 %v2482, %v2697
        %v2699 = vpop.f32.mrb[0].mxu0
        %v2700 = vpop.f32.mrb[0].mxu0
        %v2701 = vadd.f32 %v2482, %v2700
        %v2702 = vpop.f32.mrb[0].mxu0
        %2703 = vdwg.mxu0
        %v2704 = vmax.f32 %v2578, 0.0
        %v2705 = vmax.f32 %v2581, 0.0
        %v2706 = vmax.f32 %v2586, 0.0
        %v2707 = vmax.f32 %v2589, 0.0
        %v2708 = vmax.f32 %v2594, 0.0
        %v2709 = vmax.f32 %v2597, 0.0
        %v2710 = vmax.f32 %v2602, 0.0
        %v2711 = vmax.f32 %v2605, 0.0
        %v2712 = vmax.f32 %v2610, 0.0
        %v2713 = vmax.f32 %v2613, 0.0
        %v2714 = vmax.f32 %v2618, 0.0
        %v2715 = vmax.f32 %v2621, 0.0
        %v2716 = vmax.f32 %v2626, 0.0
        %v2717 = vmax.f32 %v2629, 0.0
        %v2718 = vmax.f32 %v2634, 0.0
        %v2719 = vmax.f32 %v2637, 0.0
        %v2720 = vmax.f32 %v2642, 0.0
        %v2721 = vmax.f32 %v2645, 0.0
        %v2722 = vmax.f32 %v2650, 0.0
        %v2723 = vmax.f32 %v2653, 0.0
        %v2724 = vmax.f32 %v2658, 0.0
        %v2725 = vmax.f32 %v2661, 0.0
        %v2726 = vmax.f32 %v2666, 0.0
        %v2727 = vmax.f32 %v2669, 0.0
        %v2728 = vmax.f32 %v2674, 0.0
        %v2729 = vmax.f32 %v2677, 0.0
        %v2730 = vmax.f32 %v2682, 0.0
        %v2731 = vmax.f32 %v2685, 0.0
        %v2732 = vmax.f32 %v2690, 0.0
        %v2733 = vmax.f32 %v2693, 0.0
        %v2734 = vmax.f32 %v2698, 0.0
        %v2735 = vmax.f32 %v2701, 0.0
        %v2736 = vpack.c.bf16 %v2705, %v2704
        %v2737 = vpack.c.bf16 %v2707, %v2706
        %v2738 = vpack.c.bf16 %v2709, %v2708
        %v2739 = vpack.c.bf16 %v2711, %v2710
        %v2740 = vpack.c.bf16 %v2713, %v2712
        %v2741 = vpack.c.bf16 %v2715, %v2714
        %v2742 = vpack.c.bf16 %v2717, %v2716
        %v2743 = vpack.c.bf16 %v2719, %v2718
        %v2744 = vpack.c.bf16 %v2721, %v2720
        %v2745 = vpack.c.bf16 %v2723, %v2722
        %v2746 = vpack.c.bf16 %v2725, %v2724
        %v2747 = vpack.c.bf16 %v2727, %v2726
        %v2748 = vpack.c.bf16 %v2729, %v2728
        %v2749 = vpack.c.bf16 %v2731, %v2730
        %v2750 = vpack.c.bf16 %v2733, %v2732
        %v2751 = vpack.c.bf16 %v2735, %v2734
        %v2752 = vld [vmem:[%s8] sm:$0xf]
        %v2753 = vld [vmem:[%s8 + $0x4] sm:$0xf]
        %v2754 = vld [vmem:[%s8 + $0x8] sm:$0xf]
        %v2755 = vld [vmem:[%s8 + $0xc] sm:$0xf]
        %v2756 = vld [vmem:[%s8 + $0x10] sm:$0xf]
        %v2757 = vld [vmem:[%s8 + $0x14] sm:$0xf]
        %v2758 = vld [vmem:[%s8 + $0x18] sm:$0xf]
        %v2759 = vld [vmem:[%s8 + $0x1c] sm:$0xf]
        %v2760 = vlaneseq
        %v2761 = vshrl.u32 %v2760, 7
        %v2762 = vsub.s32 7, %v2761
        %v2763 = vrot.slane %v522, %v2762
        %v2772 = vunpack.c.l.b16 %v2752
        %v2773 = vunpack.c.l.b16 %v2753
        %v2774 = vunpack.c.l.b16 %v2754
        %v2775 = vunpack.c.l.b16 %v2755
        %v2776 = vunpack.c.l.b16 %v2756
        %v2777 = vunpack.c.l.b16 %v2757
        %v2778 = vunpack.c.l.b16 %v2758
        %v2779 = vunpack.c.l.b16 %v2759
        %v2780 = vpack.c.b16 %v2773, %v2772
        %v2781 = vpack.c.b16 %v2775, %v2774
        %v2782 = vpack.c.b16 %v2777, %v2776
        %v2783 = vpack.c.b16 %v2779, %v2778
        %v2789 = vsel %vm1701, %v2736, 0
        %v2792 = vsel %vm1701, %v2737, 0
        %v2795 = vsel %vm1701, %v2738, 0
        %v2798 = vsel %vm1701, %v2739, 0
        %v2801 = vsel %vm1701, %v2740, 0
        %v2804 = vsel %vm1701, %v2741, 0
        %v2807 = vsel %vm1701, %v2742, 0
        %v2810 = vsel %vm1701, %v2743, 0
        %v2813 = vsel %vm1701, %v2744, 0
        %v2816 = vsel %vm1701, %v2745, 0
        %v2819 = vsel %vm1701, %v2746, 0
        %v2822 = vsel %vm1701, %v2747, 0
        %v2825 = vsel %vm1701, %v2748, 0
        %v2828 = vsel %vm1701, %v2749, 0
        %v2831 = vsel %vm1701, %v2750, 0
        %v2834 = vsel %vm1701, %v2751, 0
        %2836 = vmatprep.subr.bf16.mxu0 0
        %2837 = vmatpush1.bf16.msra.mxu0 %v2780
        %2838 = vmatprep.subr.bf16.mxu0 0
        %2839 = vmatpush1.bf16.msra.mxu0 %v2781
        %2840 = vmatprep.subr.bf16.mxu0 0
        %2841 = vmatpush1.bf16.msra.mxu0 %v2782
        %2842 = vmatprep.subr.bf16.mxu0 0
        %2843 = vmatpush1.bf16.msra.mxu0 %v2783
        %2844 = vmatprep.subr.bf16.mxu0 0
        %2845 = vmatpush1.bf16.msra.mxu0 0
        %2846 = vmatprep.subr.bf16.mxu0 0
        %2847 = vmatpush1.bf16.msra.mxu0 0
        %2848 = vmatprep.subr.bf16.mxu0 0
        %2849 = vmatpush1.bf16.msra.mxu0 0
        %2850 = vmatprep.subr.bf16.mxu0 0
        %2851 = vmatpush1.bf16.msra.mxu0 0
        %2852 = vmatprep.subr.bf16.mxu0 0
        %2853 = vmatpush1.bf16.msra.mxu0 0
        %2854 = vmatprep.subr.bf16.mxu0 0
        %2855 = vmatpush1.bf16.msra.mxu0 0
        %2856 = vmatprep.subr.bf16.mxu0 0
        %2857 = vmatpush1.bf16.msra.mxu0 0
        %2858 = vmatprep.subr.bf16.mxu0 0
        %2859 = vmatpush1.bf16.msra.mxu0 0
        %2860 = vmatprep.subr.bf16.mxu0 0
        %2861 = vmatpush1.bf16.msra.mxu0 0
        %2862 = vmatprep.subr.bf16.mxu0 0
        %2863 = vmatpush1.bf16.msra.mxu0 0
        %2864 = vmatprep.subr.bf16.mxu0 0
        %2865 = vmatpush1.bf16.msra.mxu0 0
        %2866 = vmatprep.subr.bf16.mxu0 0
        %2867 = vmatpush1.bf16.msra.mxu0 0
        %2868 = vmatprep.mubr.bf16.mxu0 0
        %2869 = vmatmul.mubr.bf16.gmra.mrb[0].mxu0 %v2789
        %v2870 = vpop.f32.mrb[0].mxu0
        %v2871 = vadd.f32 %v2763, %v2870
        %v2872 = vpop.f32.mrb[0].mxu0
        %v2873 = vpop.f32.mrb[0].mxu0
        %v2874 = vadd.f32 %v2763, %v2873
        %v2875 = vpop.f32.mrb[0].mxu0
        %2876 = vmatprep.mubr.bf16.mxu0 0
        %2877 = vmatmul.mubr.bf16.gmra.mrb[0].mxu0 %v2792
        %v2878 = vpop.f32.mrb[0].mxu0
        %v2879 = vadd.f32 %v2763, %v2878
        %v2880 = vpop.f32.mrb[0].mxu0
        %v2881 = vpop.f32.mrb[0].mxu0
        %v2882 = vadd.f32 %v2763, %v2881
        %v2883 = vpop.f32.mrb[0].mxu0
        %2884 = vmatprep.mubr.bf16.mxu0 0
        %2885 = vmatmul.mubr.bf16.gmra.mrb[0].mxu0 %v2795
        %v2886 = vpop.f32.mrb[0].mxu0
        %v2887 = vadd.f32 %v2763, %v2886
        %v2888 = vpop.f32.mrb[0].mxu0
        %v2889 = vpop.f32.mrb[0].mxu0
        %v2890 = vadd.f32 %v2763, %v2889
        %v2891 = vpop.f32.mrb[0].mxu0
        %2892 = vmatprep.mubr.bf16.mxu0 0
        %2893 = vmatmul.mubr.bf16.gmra.mrb[0].mxu0 %v2798
        %v2894 = vpop.f32.mrb[0].mxu0
        %v2895 = vadd.f32 %v2763, %v2894
        %v2896 = vpop.f32.mrb[0].mxu0
        %v2897 = vpop.f32.mrb[0].mxu0
        %v2898 = vadd.f32 %v2763, %v2897
        %v2899 = vpop.f32.mrb[0].mxu0
        %2900 = vmatprep.mubr.bf16.mxu0 0
        %2901 = vmatmul.mubr.bf16.gmra.mrb[0].mxu0 %v2801
        %v2902 = vpop.f32.mrb[0].mxu0
        %v2903 = vadd.f32 %v2763, %v2902
        %v2904 = vpop.f32.mrb[0].mxu0
        %v2905 = vpop.f32.mrb[0].mxu0
        %v2906 = vadd.f32 %v2763, %v2905
        %v2907 = vpop.f32.mrb[0].mxu0
        %2908 = vmatprep.mubr.bf16.mxu0 0
        %2909 = vmatmul.mubr.bf16.gmra.mrb[0].mxu0 %v2804
        %v2910 = vpop.f32.mrb[0].mxu0
        %v2911 = vadd.f32 %v2763, %v2910
        %v2912 = vpop.f32.mrb[0].mxu0
        %v2913 = vpop.f32.mrb[0].mxu0
        %v2914 = vadd.f32 %v2763, %v2913
        %v2915 = vpop.f32.mrb[0].mxu0
        %2916 = vmatprep.mubr.bf16.mxu0 0
        %2917 = vmatmul.mubr.bf16.gmra.mrb[0].mxu0 %v2807
        %v2918 = vpop.f32.mrb[0].mxu0
        %v2919 = vadd.f32 %v2763, %v2918
        %v2920 = vpop.f32.mrb[0].mxu0
        %v2921 = vpop.f32.mrb[0].mxu0
        %v2922 = vadd.f32 %v2763, %v2921
        %v2923 = vpop.f32.mrb[0].mxu0
        %2924 = vmatprep.mubr.bf16.mxu0 0
        %2925 = vmatmul.mubr.bf16.gmra.mrb[0].mxu0 %v2810
        %v2926 = vpop.f32.mrb[0].mxu0
        %v2927 = vadd.f32 %v2763, %v2926
        %v2928 = vpop.f32.mrb[0].mxu0
        %v2929 = vpop.f32.mrb[0].mxu0
        %v2930 = vadd.f32 %v2763, %v2929
        %v2931 = vpop.f32.mrb[0].mxu0
        %2932 = vmatprep.mubr.bf16.mxu0 0
        %2933 = vmatmul.mubr.bf16.gmra.mrb[0].mxu0 %v2813
        %v2934 = vpop.f32.mrb[0].mxu0
        %v2935 = vadd.f32 %v2763, %v2934
        %v2936 = vpop.f32.mrb[0].mxu0
        %v2937 = vpop.f32.mrb[0].mxu0
        %v2938 = vadd.f32 %v2763, %v2937
        %v2939 = vpop.f32.mrb[0].mxu0
        %2940 = vmatprep.mubr.bf16.mxu0 0
        %2941 = vmatmul.mubr.bf16.gmra.mrb[0].mxu0 %v2816
        %v2942 = vpop.f32.mrb[0].mxu0
        %v2943 = vadd.f32 %v2763, %v2942
        %v2944 = vpop.f32.mrb[0].mxu0
        %v2945 = vpop.f32.mrb[0].mxu0
        %v2946 = vadd.f32 %v2763, %v2945
        %v2947 = vpop.f32.mrb[0].mxu0
        %2948 = vmatprep.mubr.bf16.mxu0 0
        %2949 = vmatmul.mubr.bf16.gmra.mrb[0].mxu0 %v2819
        %v2950 = vpop.f32.mrb[0].mxu0
        %v2951 = vadd.f32 %v2763, %v2950
        %v2952 = vpop.f32.mrb[0].mxu0
        %v2953 = vpop.f32.mrb[0].mxu0
        %v2954 = vadd.f32 %v2763, %v2953
        %v2955 = vpop.f32.mrb[0].mxu0
        %2956 = vmatprep.mubr.bf16.mxu0 0
        %2957 = vmatmul.mubr.bf16.gmra.mrb[0].mxu0 %v2822
        %v2958 = vpop.f32.mrb[0].mxu0
        %v2959 = vadd.f32 %v2763, %v2958
        %v2960 = vpop.f32.mrb[0].mxu0
        %v2961 = vpop.f32.mrb[0].mxu0
        %v2962 = vadd.f32 %v2763, %v2961
        %v2963 = vpop.f32.mrb[0].mxu0
        %2964 = vmatprep.mubr.bf16.mxu0 0
        %2965 = vmatmul.mubr.bf16.gmra.mrb[0].mxu0 %v2825
        %v2966 = vpop.f32.mrb[0].mxu0
        %v2967 = vadd.f32 %v2763, %v2966
        %v2968 = vpop.f32.mrb[0].mxu0
        %v2969 = vpop.f32.mrb[0].mxu0
        %v2970 = vadd.f32 %v2763, %v2969
        %v2971 = vpop.f32.mrb[0].mxu0
        %2972 = vmatprep.mubr.bf16.mxu0 0
        %2973 = vmatmul.mubr.bf16.gmra.mrb[0].mxu0 %v2828
        %v2974 = vpop.f32.mrb[0].mxu0
        %v2975 = vadd.f32 %v2763, %v2974
        %v2976 = vpop.f32.mrb[0].mxu0
        %v2977 = vpop.f32.mrb[0].mxu0
        %v2978 = vadd.f32 %v2763, %v2977
        %v2979 = vpop.f32.mrb[0].mxu0
        %2980 = vmatprep.mubr.bf16.mxu0 0
        %2981 = vmatmul.mubr.bf16.gmra.mrb[0].mxu0 %v2831
        %v2982 = vpop.f32.mrb[0].mxu0
        %v2983 = vadd.f32 %v2763, %v2982
        %v2984 = vpop.f32.mrb[0].mxu0
        %v2985 = vpop.f32.mrb[0].mxu0
        %v2986 = vadd.f32 %v2763, %v2985
        %v2987 = vpop.f32.mrb[0].mxu0
        %2988 = vmatprep.mubr.bf16.mxu0 0
        %2989 = vmatmul.mubr.bf16.gmra.mrb[0].mxu0 %v2834
        %v2990 = vpop.f32.mrb[0].mxu0
        %v2991 = vadd.f32 %v2763, %v2990
        %v2992 = vpop.f32.mrb[0].mxu0
        %v2993 = vpop.f32.mrb[0].mxu0
        %v2994 = vadd.f32 %v2763, %v2993
        %v2995 = vpop.f32.mrb[0].mxu0
        %2996 = vdwg.mxu0
        %v2997 = vmax.f32 %v2871, 0.0
        %v2998 = vmax.f32 %v2874, 0.0
        %v2999 = vmax.f32 %v2879, 0.0
        %v3000 = vmax.f32 %v2882, 0.0
        %v3001 = vmax.f32 %v2887, 0.0
        %v3002 = vmax.f32 %v2890, 0.0
        %v3003 = vmax.f32 %v2895, 0.0
        %v3004 = vmax.f32 %v2898, 0.0
        %v3005 = vmax.f32 %v2903, 0.0
        %v3006 = vmax.f32 %v2906, 0.0
        %v3007 = vmax.f32 %v2911, 0.0
        %v3008 = vmax.f32 %v2914, 0.0
        %v3009 = vmax.f32 %v2919, 0.0
        %v3010 = vmax.f32 %v2922, 0.0
        %v3011 = vmax.f32 %v2927, 0.0
        %v3012 = vmax.f32 %v2930, 0.0
        %v3013 = vmax.f32 %v2935, 0.0
        %v3014 = vmax.f32 %v2938, 0.0
        %v3015 = vmax.f32 %v2943, 0.0
        %v3016 = vmax.f32 %v2946, 0.0
        %v3017 = vmax.f32 %v2951, 0.0
        %v3018 = vmax.f32 %v2954, 0.0
        %v3019 = vmax.f32 %v2959, 0.0
        %v3020 = vmax.f32 %v2962, 0.0
        %v3021 = vmax.f32 %v2967, 0.0
        %v3022 = vmax.f32 %v2970, 0.0
        %v3023 = vmax.f32 %v2975, 0.0
        %v3024 = vmax.f32 %v2978, 0.0
        %v3025 = vmax.f32 %v2983, 0.0
        %v3026 = vmax.f32 %v2986, 0.0
        %v3027 = vmax.f32 %v2991, 0.0
        %v3028 = vmax.f32 %v2994, 0.0
        %v3029 = vpack.c.bf16 %v2998, %v2997
        %v3030 = vpack.c.bf16 %v3000, %v2999
        %v3031 = vpack.c.bf16 %v3002, %v3001
        %v3032 = vpack.c.bf16 %v3004, %v3003
        %v3033 = vpack.c.bf16 %v3006, %v3005
        %v3034 = vpack.c.bf16 %v3008, %v3007
        %v3035 = vpack.c.bf16 %v3010, %v3009
        %v3036 = vpack.c.bf16 %v3012, %v3011
        %v3037 = vpack.c.bf16 %v3014, %v3013
        %v3038 = vpack.c.bf16 %v3016, %v3015
        %v3039 = vpack.c.bf16 %v3018, %v3017
        %v3040 = vpack.c.bf16 %v3020, %v3019
        %v3041 = vpack.c.bf16 %v3022, %v3021
        %v3042 = vpack.c.bf16 %v3024, %v3023
        %v3043 = vpack.c.bf16 %v3026, %v3025
        %v3044 = vpack.c.bf16 %v3028, %v3027
        %v3045 = vld [vmem:[#allocation10] sm:$0xff]
        %v3046 = vld [vmem:[#allocation10 + $0x8] sm:$0xff]
        %v3047 = vld [vmem:[#allocation10 + $0x10] sm:$0xff]
        %v3048 = vld [vmem:[#allocation10 + $0x18] sm:$0xff]
        %v3049 = vld [vmem:[#allocation10 + $0x20] sm:$0xff]
        %v3050 = vld [vmem:[#allocation10 + $0x28] sm:$0xff]
        %v3051 = vld [vmem:[#allocation10 + $0x30] sm:$0xff]
        %v3052 = vld [vmem:[#allocation10 + $0x38] sm:$0xff]
        %v3053 = vld [vmem:[#allocation10 + $0x40] sm:$0xff]
        %v3054 = vld [vmem:[#allocation10 + $0x48] sm:$0xff]
        %v3055 = vld [vmem:[#allocation10 + $0x50] sm:$0xff]
        %v3056 = vld [vmem:[#allocation10 + $0x58] sm:$0xff]
        %v3057 = vld [vmem:[#allocation10 + $0x60] sm:$0xff]
        %v3058 = vld [vmem:[#allocation10 + $0x68] sm:$0xff]
        %v3059 = vld [vmem:[#allocation10 + $0x70] sm:$0xff]
        %v3060 = vld [vmem:[#allocation10 + $0x78] sm:$0xff]
        %v3061 = vlaneseq
        %v3062 = vshrl.u32 %v3061, 7
        %v3063 = vsub.s32 0, %v3062
        %v3064 = vrot.slane %v524, %v3063
        %v3065 = vlaneseq
        %v3066 = vshrl.u32 %v3065, 7
        %v3067 = vsub.s32 0, %v3066
        %v3068 = vrot.slane %v525, %v3067
        %v3085 = vunpack.c.l.b16 %v3045
        %v3086 = vunpack.c.h.b16 %v3045
        %v3087 = vunpack.c.l.b16 %v3046
        %v3088 = vunpack.c.h.b16 %v3046
        %v3089 = vunpack.c.l.b16 %v3047
        %v3090 = vunpack.c.h.b16 %v3047
        %v3091 = vunpack.c.l.b16 %v3048
        %v3092 = vunpack.c.h.b16 %v3048
        %v3093 = vunpack.c.l.b16 %v3049
        %v3094 = vunpack.c.h.b16 %v3049
        %v3095 = vunpack.c.l.b16 %v3050
        %v3096 = vunpack.c.h.b16 %v3050
        %v3097 = vunpack.c.l.b16 %v3051
        %v3098 = vunpack.c.h.b16 %v3051
        %v3099 = vunpack.c.l.b16 %v3052
        %v3100 = vunpack.c.h.b16 %v3052
        %v3101 = vunpack.c.l.b16 %v3053
        %v3102 = vunpack.c.h.b16 %v3053
        %v3103 = vunpack.c.l.b16 %v3054
        %v3104 = vunpack.c.h.b16 %v3054
        %v3105 = vunpack.c.l.b16 %v3055
        %v3106 = vunpack.c.h.b16 %v3055
        %v3107 = vunpack.c.l.b16 %v3056
        %v3108 = vunpack.c.h.b16 %v3056
        %v3109 = vunpack.c.l.b16 %v3057
        %v3110 = vunpack.c.h.b16 %v3057
        %v3111 = vunpack.c.l.b16 %v3058
        %v3112 = vunpack.c.h.b16 %v3058
        %v3113 = vunpack.c.l.b16 %v3059
        %v3114 = vunpack.c.h.b16 %v3059
        %v3115 = vunpack.c.l.b16 %v3060
        %v3116 = vunpack.c.h.b16 %v3060
        %v3117 = vpack.c.b16 %v3087, %v3085
        %v3118 = vpack.c.b16 %v3088, %v3086
        %v3119 = vpack.c.b16 %v3091, %v3089
        %v3120 = vpack.c.b16 %v3092, %v3090
        %v3121 = vpack.c.b16 %v3095, %v3093
        %v3122 = vpack.c.b16 %v3096, %v3094
        %v3123 = vpack.c.b16 %v3099, %v3097
        %v3124 = vpack.c.b16 %v3100, %v3098
        %v3125 = vpack.c.b16 %v3103, %v3101
        %v3126 = vpack.c.b16 %v3104, %v3102
        %v3127 = vpack.c.b16 %v3107, %v3105
        %v3128 = vpack.c.b16 %v3108, %v3106
        %v3129 = vpack.c.b16 %v3111, %v3109
        %v3130 = vpack.c.b16 %v3112, %v3110
        %v3131 = vpack.c.b16 %v3115, %v3113
        %v3132 = vpack.c.b16 %v3116, %v3114
        %3149 = vmatprep.subr.bf16.mxu0 %v3118
        %3150 = vmatpush1.bf16.msra.mxu0 %v3117
        %3151 = vmatprep.subr.bf16.mxu0 %v3120
        %3152 = vmatpush1.bf16.msra.mxu0 %v3119
        %3153 = vmatprep.subr.bf16.mxu0 %v3122
        %3154 = vmatpush1.bf16.msra.mxu0 %v3121
        %3155 = vmatprep.subr.bf16.mxu0 %v3124
        %3156 = vmatpush1.bf16.msra.mxu0 %v3123
        %3157 = vmatprep.subr.bf16.mxu0 %v3126
        %3158 = vmatpush1.bf16.msra.mxu0 %v3125
        %3159 = vmatprep.subr.bf16.mxu0 %v3128
        %3160 = vmatpush1.bf16.msra.mxu0 %v3127
        %3161 = vmatprep.subr.bf16.mxu0 %v3130
        %3162 = vmatpush1.bf16.msra.mxu0 %v3129
        %3163 = vmatprep.subr.bf16.mxu0 %v3132
        %3164 = vmatpush1.bf16.msra.mxu0 %v3131
        %3165 = vmatprep.subr.bf16.mxu0 0
        %3166 = vmatpush1.bf16.msra.mxu0 0
        %3167 = vmatprep.subr.bf16.mxu0 0
        %3168 = vmatpush1.bf16.msra.mxu0 0
        %3169 = vmatprep.subr.bf16.mxu0 0
        %3170 = vmatpush1.bf16.msra.mxu0 0
        %3171 = vmatprep.subr.bf16.mxu0 0
        %3172 = vmatpush1.bf16.msra.mxu0 0
        %3173 = vmatprep.subr.bf16.mxu0 0
        %3174 = vmatpush1.bf16.msra.mxu0 0
        %3175 = vmatprep.subr.bf16.mxu0 0
        %3176 = vmatpush1.bf16.msra.mxu0 0
        %3177 = vmatprep.subr.bf16.mxu0 0
        %3178 = vmatpush1.bf16.msra.mxu0 0
        %3179 = vmatprep.subr.bf16.mxu0 0
        %3180 = vmatpush1.bf16.msra.mxu0 0
        %3181 = vmatprep.mubr.bf16.mxu0 0
        %3182 = vmatmul.mubr.bf16.gmra.mrb[0].mxu0 %v3029
        %v3183 = vpop.f32.mrb[0].mxu0
        %v3184 = vadd.f32 %v3064, %v3183
        %v3185 = vpop.f32.mrb[0].mxu0
        %v3186 = vadd.f32 %v3068, %v3185
        %v3187 = vpop.f32.mrb[0].mxu0
        %v3188 = vadd.f32 %v3064, %v3187
        %v3189 = vpop.f32.mrb[0].mxu0
        %v3190 = vadd.f32 %v3068, %v3189
        %3191 = vmatprep.mubr.bf16.mxu0 0
        %3192 = vmatmul.mubr.bf16.gmra.mrb[0].mxu0 %v3030
        %v3193 = vpop.f32.mrb[0].mxu0
        %v3194 = vadd.f32 %v3064, %v3193
        %v3195 = vpop.f32.mrb[0].mxu0
        %v3196 = vadd.f32 %v3068, %v3195
        %v3197 = vpop.f32.mrb[0].mxu0
        %v3198 = vadd.f32 %v3064, %v3197
        %v3199 = vpop.f32.mrb[0].mxu0
        %v3200 = vadd.f32 %v3068, %v3199
        %3201 = vmatprep.mubr.bf16.mxu0 0
        %3202 = vmatmul.mubr.bf16.gmra.mrb[0].mxu0 %v3031
        %v3203 = vpop.f32.mrb[0].mxu0
        %v3204 = vadd.f32 %v3064, %v3203
        %v3205 = vpop.f32.mrb[0].mxu0
        %v3206 = vadd.f32 %v3068, %v3205
        %v3207 = vpop.f32.mrb[0].mxu0
        %v3208 = vadd.f32 %v3064, %v3207
        %v3209 = vpop.f32.mrb[0].mxu0
        %v3210 = vadd.f32 %v3068, %v3209
        %3211 = vmatprep.mubr.bf16.mxu0 0
        %3212 = vmatmul.mubr.bf16.gmra.mrb[0].mxu0 %v3032
        %v3213 = vpop.f32.mrb[0].mxu0
        %v3214 = vadd.f32 %v3064, %v3213
        %v3215 = vpop.f32.mrb[0].mxu0
        %v3216 = vadd.f32 %v3068, %v3215
        %v3217 = vpop.f32.mrb[0].mxu0
        %v3218 = vadd.f32 %v3064, %v3217
        %v3219 = vpop.f32.mrb[0].mxu0
        %v3220 = vadd.f32 %v3068, %v3219
        %3221 = vmatprep.mubr.bf16.mxu0 0
        %3222 = vmatmul.mubr.bf16.gmra.mrb[0].mxu0 %v3033
        %v3223 = vpop.f32.mrb[0].mxu0
        %v3224 = vadd.f32 %v3064, %v3223
        %v3225 = vpop.f32.mrb[0].mxu0
        %v3226 = vadd.f32 %v3068, %v3225
        %v3227 = vpop.f32.mrb[0].mxu0
        %v3228 = vadd.f32 %v3064, %v3227
        %v3229 = vpop.f32.mrb[0].mxu0
        %v3230 = vadd.f32 %v3068, %v3229
        %3231 = vmatprep.mubr.bf16.mxu0 0
        %3232 = vmatmul.mubr.bf16.gmra.mrb[0].mxu0 %v3034
        %v3233 = vpop.f32.mrb[0].mxu0
        %v3234 = vadd.f32 %v3064, %v3233
        %v3235 = vpop.f32.mrb[0].mxu0
        %v3236 = vadd.f32 %v3068, %v3235
        %v3237 = vpop.f32.mrb[0].mxu0
        %v3238 = vadd.f32 %v3064, %v3237
        %v3239 = vpop.f32.mrb[0].mxu0
        %v3240 = vadd.f32 %v3068, %v3239
        %3241 = vmatprep.mubr.bf16.mxu0 0
        %3242 = vmatmul.mubr.bf16.gmra.mrb[0].mxu0 %v3035
        %v3243 = vpop.f32.mrb[0].mxu0
        %v3244 = vadd.f32 %v3064, %v3243
        %v3245 = vpop.f32.mrb[0].mxu0
        %v3246 = vadd.f32 %v3068, %v3245
        %v3247 = vpop.f32.mrb[0].mxu0
        %v3248 = vadd.f32 %v3064, %v3247
        %v3249 = vpop.f32.mrb[0].mxu0
        %v3250 = vadd.f32 %v3068, %v3249
        %3251 = vmatprep.mubr.bf16.mxu0 0
        %3252 = vmatmul.mubr.bf16.gmra.mrb[0].mxu0 %v3036
        %v3253 = vpop.f32.mrb[0].mxu0
        %v3254 = vadd.f32 %v3064, %v3253
        %v3255 = vpop.f32.mrb[0].mxu0
        %v3256 = vadd.f32 %v3068, %v3255
        %v3257 = vpop.f32.mrb[0].mxu0
        %v3258 = vadd.f32 %v3064, %v3257
        %v3259 = vpop.f32.mrb[0].mxu0
        %v3260 = vadd.f32 %v3068, %v3259
        %3261 = vmatprep.mubr.bf16.mxu0 0
        %3262 = vmatmul.mubr.bf16.gmra.mrb[0].mxu0 %v3037
        %v3263 = vpop.f32.mrb[0].mxu0
        %v3264 = vadd.f32 %v3064, %v3263
        %v3265 = vpop.f32.mrb[0].mxu0
        %v3266 = vadd.f32 %v3068, %v3265
        %v3267 = vpop.f32.mrb[0].mxu0
        %v3268 = vadd.f32 %v3064, %v3267
        %v3269 = vpop.f32.mrb[0].mxu0
        %v3270 = vadd.f32 %v3068, %v3269
        %3271 = vmatprep.mubr.bf16.mxu0 0
        %3272 = vmatmul.mubr.bf16.gmra.mrb[0].mxu0 %v3038
        %v3273 = vpop.f32.mrb[0].mxu0
        %v3274 = vadd.f32 %v3064, %v3273
        %v3275 = vpop.f32.mrb[0].mxu0
        %v3276 = vadd.f32 %v3068, %v3275
        %v3277 = vpop.f32.mrb[0].mxu0
        %v3278 = vadd.f32 %v3064, %v3277
        %v3279 = vpop.f32.mrb[0].mxu0
        %v3280 = vadd.f32 %v3068, %v3279
        %3281 = vmatprep.mubr.bf16.mxu0 0
        %3282 = vmatmul.mubr.bf16.gmra.mrb[0].mxu0 %v3039
        %v3283 = vpop.f32.mrb[0].mxu0
        %v3284 = vadd.f32 %v3064, %v3283
        %v3285 = vpop.f32.mrb[0].mxu0
        %v3286 = vadd.f32 %v3068, %v3285
        %v3287 = vpop.f32.mrb[0].mxu0
        %v3288 = vadd.f32 %v3064, %v3287
        %v3289 = vpop.f32.mrb[0].mxu0
        %v3290 = vadd.f32 %v3068, %v3289
        %3291 = vmatprep.mubr.bf16.mxu0 0
        %3292 = vmatmul.mubr.bf16.gmra.mrb[0].mxu0 %v3040
        %v3293 = vpop.f32.mrb[0].mxu0
        %v3294 = vadd.f32 %v3064, %v3293
        %v3295 = vpop.f32.mrb[0].mxu0
        %v3296 = vadd.f32 %v3068, %v3295
        %v3297 = vpop.f32.mrb[0].mxu0
        %v3298 = vadd.f32 %v3064, %v3297
        %v3299 = vpop.f32.mrb[0].mxu0
        %v3300 = vadd.f32 %v3068, %v3299
        %3301 = vmatprep.mubr.bf16.mxu0 0
        %3302 = vmatmul.mubr.bf16.gmra.mrb[0].mxu0 %v3041
        %v3303 = vpop.f32.mrb[0].mxu0
        %v3304 = vadd.f32 %v3064, %v3303
        %v3305 = vpop.f32.mrb[0].mxu0
        %v3306 = vadd.f32 %v3068, %v3305
        %v3307 = vpop.f32.mrb[0].mxu0
        %v3308 = vadd.f32 %v3064, %v3307
        %v3309 = vpop.f32.mrb[0].mxu0
        %v3310 = vadd.f32 %v3068, %v3309
        %3311 = vmatprep.mubr.bf16.mxu0 0
        %3312 = vmatmul.mubr.bf16.gmra.mrb[0].mxu0 %v3042
        %v3313 = vpop.f32.mrb[0].mxu0
        %v3314 = vadd.f32 %v3064, %v3313
        %v3315 = vpop.f32.mrb[0].mxu0
        %v3316 = vadd.f32 %v3068, %v3315
        %v3317 = vpop.f32.mrb[0].mxu0
        %v3318 = vadd.f32 %v3064, %v3317
        %v3319 = vpop.f32.mrb[0].mxu0
        %v3320 = vadd.f32 %v3068, %v3319
        %3321 = vmatprep.mubr.bf16.mxu0 0
        %3322 = vmatmul.mubr.bf16.gmra.mrb[0].mxu0 %v3043
        %v3323 = vpop.f32.mrb[0].mxu0
        %v3324 = vadd.f32 %v3064, %v3323
        %v3325 = vpop.f32.mrb[0].mxu0
        %v3326 = vadd.f32 %v3068, %v3325
        %v3327 = vpop.f32.mrb[0].mxu0
        %v3328 = vadd.f32 %v3064, %v3327
        %v3329 = vpop.f32.mrb[0].mxu0
        %v3330 = vadd.f32 %v3068, %v3329
        %3331 = vmatprep.mubr.bf16.mxu0 0
        %3332 = vmatmul.mubr.bf16.gmra.mrb[0].mxu0 %v3044
        %v3333 = vpop.f32.mrb[0].mxu0
        %v3334 = vadd.f32 %v3064, %v3333
        %v3335 = vpop.f32.mrb[0].mxu0
        %v3336 = vadd.f32 %v3068, %v3335
        %v3337 = vpop.f32.mrb[0].mxu0
        %v3338 = vadd.f32 %v3064, %v3337
        %v3339 = vpop.f32.mrb[0].mxu0
        %v3340 = vadd.f32 %v3068, %v3339
        %3341 = vdwg.mxu0
        %v3342 = vmax.f32 %v3184, 0.0
        %v3343 = vmax.f32 %v3186, 0.0
        %v3344 = vmax.f32 %v3188, 0.0
        %v3345 = vmax.f32 %v3190, 0.0
        %v3346 = vmax.f32 %v3194, 0.0
        %v3347 = vmax.f32 %v3196, 0.0
        %v3348 = vmax.f32 %v3198, 0.0
        %v3349 = vmax.f32 %v3200, 0.0
        %v3350 = vmax.f32 %v3204, 0.0
        %v3351 = vmax.f32 %v3206, 0.0
        %v3352 = vmax.f32 %v3208, 0.0
        %v3353 = vmax.f32 %v3210, 0.0
        %v3354 = vmax.f32 %v3214, 0.0
        %v3355 = vmax.f32 %v3216, 0.0
        %v3356 = vmax.f32 %v3218, 0.0
        %v3357 = vmax.f32 %v3220, 0.0
        %v3358 = vmax.f32 %v3224, 0.0
        %v3359 = vmax.f32 %v3226, 0.0
        %v3360 = vmax.f32 %v3228, 0.0
        %v3361 = vmax.f32 %v3230, 0.0
        %v3362 = vmax.f32 %v3234, 0.0
        %v3363 = vmax.f32 %v3236, 0.0
        %v3364 = vmax.f32 %v3238, 0.0
        %v3365 = vmax.f32 %v3240, 0.0
        %v3366 = vmax.f32 %v3244, 0.0
        %v3367 = vmax.f32 %v3246, 0.0
        %v3368 = vmax.f32 %v3248, 0.0
        %v3369 = vmax.f32 %v3250, 0.0
        %v3370 = vmax.f32 %v3254, 0.0
        %v3371 = vmax.f32 %v3256, 0.0
        %v3372 = vmax.f32 %v3258, 0.0
        %v3373 = vmax.f32 %v3260, 0.0
        %v3374 = vmax.f32 %v3264, 0.0
        %v3375 = vmax.f32 %v3266, 0.0
        %v3376 = vmax.f32 %v3268, 0.0
        %v3377 = vmax.f32 %v3270, 0.0
        %v3378 = vmax.f32 %v3274, 0.0
        %v3379 = vmax.f32 %v3276, 0.0
        %v3380 = vmax.f32 %v3278, 0.0
        %v3381 = vmax.f32 %v3280, 0.0
        %v3382 = vmax.f32 %v3284, 0.0
        %v3383 = vmax.f32 %v3286, 0.0
        %v3384 = vmax.f32 %v3288, 0.0
        %v3385 = vmax.f32 %v3290, 0.0
        %v3386 = vmax.f32 %v3294, 0.0
        %v3387 = vmax.f32 %v3296, 0.0
        %v3388 = vmax.f32 %v3298, 0.0
        %v3389 = vmax.f32 %v3300, 0.0
        %v3390 = vmax.f32 %v3304, 0.0
        %v3391 = vmax.f32 %v3306, 0.0
        %v3392 = vmax.f32 %v3308, 0.0
        %v3393 = vmax.f32 %v3310, 0.0
        %v3394 = vmax.f32 %v3314, 0.0
        %v3395 = vmax.f32 %v3316, 0.0
        %v3396 = vmax.f32 %v3318, 0.0
        %v3397 = vmax.f32 %v3320, 0.0
        %v3398 = vmax.f32 %v3324, 0.0
        %v3399 = vmax.f32 %v3326, 0.0
        %v3400 = vmax.f32 %v3328, 0.0
        %v3401 = vmax.f32 %v3330, 0.0
        %v3402 = vmax.f32 %v3334, 0.0
        %v3403 = vmax.f32 %v3336, 0.0
        %v3404 = vmax.f32 %v3338, 0.0
        %v3405 = vmax.f32 %v3340, 0.0
        %v3406 = vpack.c.bf16 %v3344, %v3342
        %v3407 = vpack.c.bf16 %v3345, %v3343
        %v3408 = vpack.c.bf16 %v3348, %v3346
        %v3409 = vpack.c.bf16 %v3349, %v3347
        %v3410 = vpack.c.bf16 %v3352, %v3350
        %v3411 = vpack.c.bf16 %v3353, %v3351
        %v3412 = vpack.c.bf16 %v3356, %v3354
        %v3413 = vpack.c.bf16 %v3357, %v3355
        %v3414 = vpack.c.bf16 %v3360, %v3358
        %v3415 = vpack.c.bf16 %v3361, %v3359
        %v3416 = vpack.c.bf16 %v3364, %v3362
        %v3417 = vpack.c.bf16 %v3365, %v3363
        %v3418 = vpack.c.bf16 %v3368, %v3366
        %v3419 = vpack.c.bf16 %v3369, %v3367
        %v3420 = vpack.c.bf16 %v3372, %v3370
        %v3421 = vpack.c.bf16 %v3373, %v3371
        %v3422 = vpack.c.bf16 %v3376, %v3374
        %v3423 = vpack.c.bf16 %v3377, %v3375
        %v3424 = vpack.c.bf16 %v3380, %v3378
        %v3425 = vpack.c.bf16 %v3381, %v3379
        %v3426 = vpack.c.bf16 %v3384, %v3382
        %v3427 = vpack.c.bf16 %v3385, %v3383
        %v3428 = vpack.c.bf16 %v3388, %v3386
        %v3429 = vpack.c.bf16 %v3389, %v3387
        %v3430 = vpack.c.bf16 %v3392, %v3390
        %v3431 = vpack.c.bf16 %v3393, %v3391
        %v3432 = vpack.c.bf16 %v3396, %v3394
        %v3433 = vpack.c.bf16 %v3397, %v3395
        %v3434 = vpack.c.bf16 %v3400, %v3398
        %v3435 = vpack.c.bf16 %v3401, %v3399
        %v3436 = vpack.c.bf16 %v3404, %v3402
        %v3437 = vpack.c.bf16 %v3405, %v3403
        %v3438 = vld [vmem:[#allocation11] sm:$0xf]
        %v3439 = vld [vmem:[#allocation11 + $0x4] sm:$0xf]
        %v3440 = vld [vmem:[#allocation11 + $0x8] sm:$0xf]
        %v3441 = vld [vmem:[#allocation11 + $0xc] sm:$0xf]
        %v3442 = vld [vmem:[#allocation11 + $0x10] sm:$0xf]
        %v3443 = vld [vmem:[#allocation11 + $0x14] sm:$0xf]
        %v3444 = vld [vmem:[#allocation11 + $0x18] sm:$0xf]
        %v3445 = vld [vmem:[#allocation11 + $0x1c] sm:$0xf]
        %v3446 = vld [vmem:[#allocation11 + $0x20] sm:$0xf]
        %v3447 = vld [vmem:[#allocation11 + $0x24] sm:$0xf]
        %v3448 = vld [vmem:[#allocation11 + $0x28] sm:$0xf]
        %v3449 = vld [vmem:[#allocation11 + $0x2c] sm:$0xf]
        %v3450 = vld [vmem:[#allocation11 + $0x30] sm:$0xf]
        %v3451 = vld [vmem:[#allocation11 + $0x34] sm:$0xf]
        %v3452 = vld [vmem:[#allocation11 + $0x38] sm:$0xf]
        %v3453 = vld [vmem:[#allocation11 + $0x3c] sm:$0xf]
        %v3454 = vld [vmem:[#allocation11 + $0x40] sm:$0xf]
        %v3455 = vld [vmem:[#allocation11 + $0x44] sm:$0xf]
        %v3456 = vld [vmem:[#allocation11 + $0x48] sm:$0xf]
        %v3457 = vld [vmem:[#allocation11 + $0x4c] sm:$0xf]
        %v3458 = vld [vmem:[#allocation11 + $0x50] sm:$0xf]
        %v3459 = vld [vmem:[#allocation11 + $0x54] sm:$0xf]
        %v3460 = vld [vmem:[#allocation11 + $0x58] sm:$0xf]
        %v3461 = vld [vmem:[#allocation11 + $0x5c] sm:$0xf]
        %v3462 = vld [vmem:[#allocation11 + $0x60] sm:$0xf]
        %v3463 = vld [vmem:[#allocation11 + $0x64] sm:$0xf]
        %v3464 = vld [vmem:[#allocation11 + $0x68] sm:$0xf]
        %v3465 = vld [vmem:[#allocation11 + $0x6c] sm:$0xf]
        %v3466 = vld [vmem:[#allocation11 + $0x70] sm:$0xf]
        %v3467 = vld [vmem:[#allocation11 + $0x74] sm:$0xf]
        %v3468 = vld [vmem:[#allocation11 + $0x78] sm:$0xf]
        %v3469 = vld [vmem:[#allocation11 + $0x7c] sm:$0xf]
        %v3470 = vlaneseq
        %v3471 = vshrl.u32 %v3470, 7
        %v3472 = vsub.s32 1, %v3471
        %v3473 = vrot.slane %v524, %v3472
        %v3506 = vunpack.c.l.b16 %v3438
        %v3507 = vunpack.c.l.b16 %v3439
        %v3508 = vunpack.c.l.b16 %v3440
        %v3509 = vunpack.c.l.b16 %v3441
        %v3510 = vunpack.c.l.b16 %v3442
        %v3511 = vunpack.c.l.b16 %v3443
        %v3512 = vunpack.c.l.b16 %v3444
        %v3513 = vunpack.c.l.b16 %v3445
        %v3514 = vunpack.c.l.b16 %v3446
        %v3515 = vunpack.c.l.b16 %v3447
        %v3516 = vunpack.c.l.b16 %v3448
        %v3517 = vunpack.c.l.b16 %v3449
        %v3518 = vunpack.c.l.b16 %v3450
        %v3519 = vunpack.c.l.b16 %v3451
        %v3520 = vunpack.c.l.b16 %v3452
        %v3521 = vunpack.c.l.b16 %v3453
        %v3522 = vunpack.c.l.b16 %v3454
        %v3523 = vunpack.c.l.b16 %v3455
        %v3524 = vunpack.c.l.b16 %v3456
        %v3525 = vunpack.c.l.b16 %v3457
        %v3526 = vunpack.c.l.b16 %v3458
        %v3527 = vunpack.c.l.b16 %v3459
        %v3528 = vunpack.c.l.b16 %v3460
        %v3529 = vunpack.c.l.b16 %v3461
        %v3530 = vunpack.c.l.b16 %v3462
        %v3531 = vunpack.c.l.b16 %v3463
        %v3532 = vunpack.c.l.b16 %v3464
        %v3533 = vunpack.c.l.b16 %v3465
        %v3534 = vunpack.c.l.b16 %v3466
        %v3535 = vunpack.c.l.b16 %v3467
        %v3536 = vunpack.c.l.b16 %v3468
        %v3537 = vunpack.c.l.b16 %v3469
        %v3538 = vpack.c.b16 %v3507, %v3506
        %v3539 = vpack.c.b16 %v3509, %v3508
        %v3540 = vpack.c.b16 %v3511, %v3510
        %v3541 = vpack.c.b16 %v3513, %v3512
        %v3542 = vpack.c.b16 %v3515, %v3514
        %v3543 = vpack.c.b16 %v3517, %v3516
        %v3544 = vpack.c.b16 %v3519, %v3518
        %v3545 = vpack.c.b16 %v3521, %v3520
        %v3546 = vpack.c.b16 %v3523, %v3522
        %v3547 = vpack.c.b16 %v3525, %v3524
        %v3548 = vpack.c.b16 %v3527, %v3526
        %v3549 = vpack.c.b16 %v3529, %v3528
        %v3550 = vpack.c.b16 %v3531, %v3530
        %v3551 = vpack.c.b16 %v3533, %v3532
        %v3552 = vpack.c.b16 %v3535, %v3534
        %v3553 = vpack.c.b16 %v3537, %v3536
        %3570 = vmatprep.subr.bf16.mxu0 0
        %3571 = vmatpush1.bf16.msra.mxu0 %v3538
        %3572 = vmatprep.subr.bf16.mxu0 0
        %3573 = vmatpush1.bf16.msra.mxu0 %v3539
        %3574 = vmatprep.subr.bf16.mxu0 0
        %3575 = vmatpush1.bf16.msra.mxu0 %v3540
        %3576 = vmatprep.subr.bf16.mxu0 0
        %3577 = vmatpush1.bf16.msra.mxu0 %v3541
        %3578 = vmatprep.subr.bf16.mxu0 0
        %3579 = vmatpush1.bf16.msra.mxu0 %v3542
        %3580 = vmatprep.subr.bf16.mxu0 0
        %3581 = vmatpush1.bf16.msra.mxu0 %v3543
        %3582 = vmatprep.subr.bf16.mxu0 0
        %3583 = vmatpush1.bf16.msra.mxu0 %v3544
        %3584 = vmatprep.subr.bf16.mxu0 0
        %3585 = vmatpush1.bf16.msra.mxu0 %v3545
        %3586 = vmatprep.subr.bf16.mxu0 0
        %3587 = vmatpush1.bf16.msra.mxu0 %v3546
        %3588 = vmatprep.subr.bf16.mxu0 0
        %3589 = vmatpush1.bf16.msra.mxu0 %v3547
        %3590 = vmatprep.subr.bf16.mxu0 0
        %3591 = vmatpush1.bf16.msra.mxu0 %v3548
        %3592 = vmatprep.subr.bf16.mxu0 0
        %3593 = vmatpush1.bf16.msra.mxu0 %v3549
        %3594 = vmatprep.subr.bf16.mxu0 0
        %3595 = vmatpush1.bf16.msra.mxu0 %v3550
        %3596 = vmatprep.subr.bf16.mxu0 0
        %3597 = vmatpush1.bf16.msra.mxu0 %v3551
        %3598 = vmatprep.subr.bf16.mxu0 0
        %3599 = vmatpush1.bf16.msra.mxu0 %v3552
        %3600 = vmatprep.subr.bf16.mxu0 0
        %3601 = vmatpush1.bf16.msra.mxu0 %v3553
        %3602 = vmatprep.mubr.bf16.mxu0 %v3407
        %3603 = vmatmul.mubr.bf16.gmra.mrb[0].mxu0 %v3406
        %v3604 = vpop.f32.mrb[0].mxu0
        %v3605 = vadd.f32 %v3473, %v3604
        %v3606 = vpop.f32.mrb[0].mxu0
        %v3607 = vpop.f32.mrb[0].mxu0
        %v3608 = vadd.f32 %v3473, %v3607
        %v3609 = vpop.f32.mrb[0].mxu0
        %3610 = vmatprep.mubr.bf16.mxu0 %v3409
        %3611 = vmatmul.mubr.bf16.gmra.mrb[0].mxu0 %v3408
        %v3612 = vpop.f32.mrb[0].mxu0
        %v3613 = vadd.f32 %v3473, %v3612
        %v3614 = vpop.f32.mrb[0].mxu0
        %v3615 = vpop.f32.mrb[0].mxu0
        %v3616 = vadd.f32 %v3473, %v3615
        %v3617 = vpop.f32.mrb[0].mxu0
        %3618 = vmatprep.mubr.bf16.mxu0 %v3411
        %3619 = vmatmul.mubr.bf16.gmra.mrb[0].mxu0 %v3410
        %v3620 = vpop.f32.mrb[0].mxu0
        %v3621 = vadd.f32 %v3473, %v3620
        %v3622 = vpop.f32.mrb[0].mxu0
        %v3623 = vpop.f32.mrb[0].mxu0
        %v3624 = vadd.f32 %v3473, %v3623
        %v3625 = vpop.f32.mrb[0].mxu0
        %3626 = vmatprep.mubr.bf16.mxu0 %v3413
        %3627 = vmatmul.mubr.bf16.gmra.mrb[0].mxu0 %v3412
        %v3628 = vpop.f32.mrb[0].mxu0
        %v3629 = vadd.f32 %v3473, %v3628
        %v3630 = vpop.f32.mrb[0].mxu0
        %v3631 = vpop.f32.mrb[0].mxu0
        %v3632 = vadd.f32 %v3473, %v3631
        %v3633 = vpop.f32.mrb[0].mxu0
        %3634 = vmatprep.mubr.bf16.mxu0 %v3415
        %3635 = vmatmul.mubr.bf16.gmra.mrb[0].mxu0 %v3414
        %v3636 = vpop.f32.mrb[0].mxu0
        %v3637 = vadd.f32 %v3473, %v3636
        %v3638 = vpop.f32.mrb[0].mxu0
        %v3639 = vpop.f32.mrb[0].mxu0
        %v3640 = vadd.f32 %v3473, %v3639
        %v3641 = vpop.f32.mrb[0].mxu0
        %3642 = vmatprep.mubr.bf16.mxu0 %v3417
        %3643 = vmatmul.mubr.bf16.gmra.mrb[0].mxu0 %v3416
        %v3644 = vpop.f32.mrb[0].mxu0
        %v3645 = vadd.f32 %v3473, %v3644
        %v3646 = vpop.f32.mrb[0].mxu0
        %v3647 = vpop.f32.mrb[0].mxu0
        %v3648 = vadd.f32 %v3473, %v3647
        %v3649 = vpop.f32.mrb[0].mxu0
        %3650 = vmatprep.mubr.bf16.mxu0 %v3419
        %3651 = vmatmul.mubr.bf16.gmra.mrb[0].mxu0 %v3418
        %v3652 = vpop.f32.mrb[0].mxu0
        %v3653 = vadd.f32 %v3473, %v3652
        %v3654 = vpop.f32.mrb[0].mxu0
        %v3655 = vpop.f32.mrb[0].mxu0
        %v3656 = vadd.f32 %v3473, %v3655
        %v3657 = vpop.f32.mrb[0].mxu0
        %3658 = vmatprep.mubr.bf16.mxu0 %v3421
        %3659 = vmatmul.mubr.bf16.gmra.mrb[0].mxu0 %v3420
        %v3660 = vpop.f32.mrb[0].mxu0
        %v3661 = vadd.f32 %v3473, %v3660
        %v3662 = vpop.f32.mrb[0].mxu0
        %v3663 = vpop.f32.mrb[0].mxu0
        %v3664 = vadd.f32 %v3473, %v3663
        %v3665 = vpop.f32.mrb[0].mxu0
        %3666 = vmatprep.mubr.bf16.mxu0 %v3423
        %3667 = vmatmul.mubr.bf16.gmra.mrb[0].mxu0 %v3422
        %v3668 = vpop.f32.mrb[0].mxu0
        %v3669 = vadd.f32 %v3473, %v3668
        %v3670 = vpop.f32.mrb[0].mxu0
        %v3671 = vpop.f32.mrb[0].mxu0
        %v3672 = vadd.f32 %v3473, %v3671
        %v3673 = vpop.f32.mrb[0].mxu0
        %3674 = vmatprep.mubr.bf16.mxu0 %v3425
        %3675 = vmatmul.mubr.bf16.gmra.mrb[0].mxu0 %v3424
        %v3676 = vpop.f32.mrb[0].mxu0
        %v3677 = vadd.f32 %v3473, %v3676
        %v3678 = vpop.f32.mrb[0].mxu0
        %v3679 = vpop.f32.mrb[0].mxu0
        %v3680 = vadd.f32 %v3473, %v3679
        %v3681 = vpop.f32.mrb[0].mxu0
        %3682 = vmatprep.mubr.bf16.mxu0 %v3427
        %3683 = vmatmul.mubr.bf16.gmra.mrb[0].mxu0 %v3426
        %v3684 = vpop.f32.mrb[0].mxu0
        %v3685 = vadd.f32 %v3473, %v3684
        %v3686 = vpop.f32.mrb[0].mxu0
        %v3687 = vpop.f32.mrb[0].mxu0
        %v3688 = vadd.f32 %v3473, %v3687
        %v3689 = vpop.f32.mrb[0].mxu0
        %3690 = vmatprep.mubr.bf16.mxu0 %v3429
        %3691 = vmatmul.mubr.bf16.gmra.mrb[0].mxu0 %v3428
        %v3692 = vpop.f32.mrb[0].mxu0
        %v3693 = vadd.f32 %v3473, %v3692
        %v3694 = vpop.f32.mrb[0].mxu0
        %v3695 = vpop.f32.mrb[0].mxu0
        %v3696 = vadd.f32 %v3473, %v3695
        %v3697 = vpop.f32.mrb[0].mxu0
        %3698 = vmatprep.mubr.bf16.mxu0 %v3431
        %3699 = vmatmul.mubr.bf16.gmra.mrb[0].mxu0 %v3430
        %v3700 = vpop.f32.mrb[0].mxu0
        %v3701 = vadd.f32 %v3473, %v3700
        %v3702 = vpop.f32.mrb[0].mxu0
        %v3703 = vpop.f32.mrb[0].mxu0
        %v3704 = vadd.f32 %v3473, %v3703
        %v3705 = vpop.f32.mrb[0].mxu0
        %3706 = vmatprep.mubr.bf16.mxu0 %v3433
        %3707 = vmatmul.mubr.bf16.gmra.mrb[0].mxu0 %v3432
        %v3708 = vpop.f32.mrb[0].mxu0
        %v3709 = vadd.f32 %v3473, %v3708
        %v3710 = vpop.f32.mrb[0].mxu0
        %v3711 = vpop.f32.mrb[0].mxu0
        %v3712 = vadd.f32 %v3473, %v3711
        %v3713 = vpop.f32.mrb[0].mxu0
        %3714 = vmatprep.mubr.bf16.mxu0 %v3435
        %3715 = vmatmul.mubr.bf16.gmra.mrb[0].mxu0 %v3434
        %v3716 = vpop.f32.mrb[0].mxu0
        %v3717 = vadd.f32 %v3473, %v3716
        %v3718 = vpop.f32.mrb[0].mxu0
        %v3719 = vpop.f32.mrb[0].mxu0
        %v3720 = vadd.f32 %v3473, %v3719
        %v3721 = vpop.f32.mrb[0].mxu0
        %3722 = vmatprep.mubr.bf16.mxu0 %v3437
        %3723 = vmatmul.mubr.bf16.gmra.mrb[0].mxu0 %v3436
        %v3724 = vpop.f32.mrb[0].mxu0
        %v3725 = vadd.f32 %v3473, %v3724
        %v3726 = vpop.f32.mrb[0].mxu0
        %v3727 = vpop.f32.mrb[0].mxu0
        %v3728 = vadd.f32 %v3473, %v3727
        %v3729 = vpop.f32.mrb[0].mxu0
        %3730 = vdwg.mxu0
        %v3731 = vxor.u32 %v3605, 2147483648
        %v3732 = vxor.u32 %v3608, 2147483648
        %v3733 = vxor.u32 %v3613, 2147483648
        %v3734 = vxor.u32 %v3616, 2147483648
        %v3735 = vxor.u32 %v3621, 2147483648
        %v3736 = vxor.u32 %v3624, 2147483648
        %v3737 = vxor.u32 %v3629, 2147483648
        %v3738 = vxor.u32 %v3632, 2147483648
        %v3739 = vxor.u32 %v3637, 2147483648
        %v3740 = vxor.u32 %v3640, 2147483648
        %v3741 = vxor.u32 %v3645, 2147483648
        %v3742 = vxor.u32 %v3648, 2147483648
        %v3743 = vxor.u32 %v3653, 2147483648
        %v3744 = vxor.u32 %v3656, 2147483648
        %v3745 = vxor.u32 %v3661, 2147483648
        %v3746 = vxor.u32 %v3664, 2147483648
        %v3747 = vxor.u32 %v3669, 2147483648
        %v3748 = vxor.u32 %v3672, 2147483648
        %v3749 = vxor.u32 %v3677, 2147483648
        %v3750 = vxor.u32 %v3680, 2147483648
        %v3751 = vxor.u32 %v3685, 2147483648
        %v3752 = vxor.u32 %v3688, 2147483648
        %v3753 = vxor.u32 %v3693, 2147483648
        %v3754 = vxor.u32 %v3696, 2147483648
        %v3755 = vxor.u32 %v3701, 2147483648
        %v3756 = vxor.u32 %v3704, 2147483648
        %v3757 = vxor.u32 %v3709, 2147483648
        %v3758 = vxor.u32 %v3712, 2147483648
        %v3759 = vxor.u32 %v3717, 2147483648
        %v3760 = vxor.u32 %v3720, 2147483648
        %v3761 = vxor.u32 %v3725, 2147483648
        %v3762 = vxor.u32 %v3728, 2147483648
        %v3763 = vmul.f32 %v3731, 1.442695
        %v3764 = vpow.pop %v3763
        %v3765 = vmul.f32 %v3732, 1.442695
        %v3766 = vpow.pop %v3765
        %v3767 = vmul.f32 %v3733, 1.442695
        %v3768 = vpow.pop %v3767
        %v3769 = vmul.f32 %v3734, 1.442695
        %v3770 = vpow.pop %v3769
        %v3771 = vmul.f32 %v3735, 1.442695
        %v3772 = vpow.pop %v3771
        %v3773 = vmul.f32 %v3736, 1.442695
        %v3774 = vpow.pop %v3773
        %v3775 = vmul.f32 %v3737, 1.442695
        %v3776 = vpow.pop %v3775
        %v3777 = vmul.f32 %v3738, 1.442695
        %v3778 = vpow.pop %v3777
        %v3779 = vmul.f32 %v3739, 1.442695
        %v3780 = vpow.pop %v3779
        %v3781 = vmul.f32 %v3740, 1.442695
        %v3782 = vpow.pop %v3781
        %v3783 = vmul.f32 %v3741, 1.442695
        %v3784 = vpow.pop %v3783
        %v3785 = vmul.f32 %v3742, 1.442695
        %v3786 = vpow.pop %v3785
        %v3787 = vmul.f32 %v3743, 1.442695
        %v3788 = vpow.pop %v3787
        %v3789 = vmul.f32 %v3744, 1.442695
        %v3790 = vpow.pop %v3789
        %v3791 = vmul.f32 %v3745, 1.442695
        %v3792 = vpow.pop %v3791
        %v3793 = vmul.f32 %v3746, 1.442695
        %v3794 = vpow.pop %v3793
        %v3795 = vmul.f32 %v3747, 1.442695
        %v3796 = vpow.pop %v3795
        %v3797 = vmul.f32 %v3748, 1.442695
        %v3798 = vpow.pop %v3797
        %v3799 = vmul.f32 %v3749, 1.442695
        %v3800 = vpow.pop %v3799
        %v3801 = vmul.f32 %v3750, 1.442695
        %v3802 = vpow.pop %v3801
        %v3803 = vmul.f32 %v3751, 1.442695
        %v3804 = vpow.pop %v3803
        %v3805 = vmul.f32 %v3752, 1.442695
        %v3806 = vpow.pop %v3805
        %v3807 = vmul.f32 %v3753, 1.442695
        %v3808 = vpow.pop %v3807
        %v3809 = vmul.f32 %v3754, 1.442695
        %v3810 = vpow.pop %v3809
        %v3811 = vmul.f32 %v3755, 1.442695
        %v3812 = vpow.pop %v3811
        %v3813 = vmul.f32 %v3756, 1.442695
        %v3814 = vpow.pop %v3813
        %v3815 = vmul.f32 %v3757, 1.442695
        %v3816 = vpow.pop %v3815
        %v3817 = vmul.f32 %v3758, 1.442695
        %v3818 = vpow.pop %v3817
        %v3819 = vmul.f32 %v3759, 1.442695
        %v3820 = vpow.pop %v3819
        %v3821 = vmul.f32 %v3760, 1.442695
        %v3822 = vpow.pop %v3821
        %v3823 = vmul.f32 %v3761, 1.442695
        %v3824 = vpow.pop %v3823
        %v3825 = vmul.f32 %v3762, 1.442695
        %v3826 = vpow.pop %v3825
        %v3827 = vadd.f32 %v3764, 1.0
        %v3828 = vadd.f32 %v3766, 1.0
        %v3829 = vadd.f32 %v3768, 1.0
        %v3830 = vadd.f32 %v3770, 1.0
        %v3831 = vadd.f32 %v3772, 1.0
        %v3832 = vadd.f32 %v3774, 1.0
        %v3833 = vadd.f32 %v3776, 1.0
        %v3834 = vadd.f32 %v3778, 1.0
        %v3835 = vadd.f32 %v3780, 1.0
        %v3836 = vadd.f32 %v3782, 1.0
        %v3837 = vadd.f32 %v3784, 1.0
        %v3838 = vadd.f32 %v3786, 1.0
        %v3839 = vadd.f32 %v3788, 1.0
        %v3840 = vadd.f32 %v3790, 1.0
        %v3841 = vadd.f32 %v3792, 1.0
        %v3842 = vadd.f32 %v3794, 1.0
        %v3843 = vadd.f32 %v3796, 1.0
        %v3844 = vadd.f32 %v3798, 1.0
        %v3845 = vadd.f32 %v3800, 1.0
        %v3846 = vadd.f32 %v3802, 1.0
        %v3847 = vadd.f32 %v3804, 1.0
        %v3848 = vadd.f32 %v3806, 1.0
        %v3849 = vadd.f32 %v3808, 1.0
        %v3850 = vadd.f32 %v3810, 1.0
        %v3851 = vadd.f32 %v3812, 1.0
        %v3852 = vadd.f32 %v3814, 1.0
        %v3853 = vadd.f32 %v3816, 1.0
        %v3854 = vadd.f32 %v3818, 1.0
        %v3855 = vadd.f32 %v3820, 1.0
        %v3856 = vadd.f32 %v3822, 1.0
        %v3857 = vadd.f32 %v3824, 1.0
        %v3858 = vadd.f32 %v3826, 1.0
        %v3859 = vrcp.pop %v3827
        %v3860 = vmul.f32 1.0, %v3859
        %v3861 = vrcp.pop %v3828
        %v3862 = vmul.f32 1.0, %v3861
        %v3863 = vrcp.pop %v3829
        %v3864 = vmul.f32 1.0, %v3863
        %v3865 = vrcp.pop %v3830
        %v3866 = vmul.f32 1.0, %v3865
        %v3867 = vrcp.pop %v3831
        %v3868 = vmul.f32 1.0, %v3867
        %v3869 = vrcp.pop %v3832
        %v3870 = vmul.f32 1.0, %v3869
        %v3871 = vrcp.pop %v3833
        %v3872 = vmul.f32 1.0, %v3871
        %v3873 = vrcp.pop %v3834
        %v3874 = vmul.f32 1.0, %v3873
        %v3875 = vrcp.pop %v3835
        %v3876 = vmul.f32 1.0, %v3875
        %v3877 = vrcp.pop %v3836
        %v3878 = vmul.f32 1.0, %v3877
        %v3879 = vrcp.pop %v3837
        %v3880 = vmul.f32 1.0, %v3879
        %v3881 = vrcp.pop %v3838
        %v3882 = vmul.f32 1.0, %v3881
        %v3883 = vrcp.pop %v3839
        %v3884 = vmul.f32 1.0, %v3883
        %v3885 = vrcp.pop %v3840
        %v3886 = vmul.f32 1.0, %v3885
        %v3887 = vrcp.pop %v3841
        %v3888 = vmul.f32 1.0, %v3887
        %v3889 = vrcp.pop %v3842
        %v3890 = vmul.f32 1.0, %v3889
        %v3891 = vrcp.pop %v3843
        %v3892 = vmul.f32 1.0, %v3891
        %v3893 = vrcp.pop %v3844
        %v3894 = vmul.f32 1.0, %v3893
        %v3895 = vrcp.pop %v3845
        %v3896 = vmul.f32 1.0, %v3895
        %v3897 = vrcp.pop %v3846
        %v3898 = vmul.f32 1.0, %v3897
        %v3899 = vrcp.pop %v3847
        %v3900 = vmul.f32 1.0, %v3899
        %v3901 = vrcp.pop %v3848
        %v3902 = vmul.f32 1.0, %v3901
        %v3903 = vrcp.pop %v3849
        %v3904 = vmul.f32 1.0, %v3903
        %v3905 = vrcp.pop %v3850
        %v3906 = vmul.f32 1.0, %v3905
        %v3907 = vrcp.pop %v3851
        %v3908 = vmul.f32 1.0, %v3907
        %v3909 = vrcp.pop %v3852
        %v3910 = vmul.f32 1.0, %v3909
        %v3911 = vrcp.pop %v3853
        %v3912 = vmul.f32 1.0, %v3911
        %v3913 = vrcp.pop %v3854
        %v3914 = vmul.f32 1.0, %v3913
        %v3915 = vrcp.pop %v3855
        %v3916 = vmul.f32 1.0, %v3915
        %v3917 = vrcp.pop %v3856
        %v3918 = vmul.f32 1.0, %v3917
        %v3919 = vrcp.pop %v3857
        %v3920 = vmul.f32 1.0, %v3919
        %v3921 = vrcp.pop %v3858
        %v3922 = vmul.f32 1.0, %v3921
        %3923 = vst [vmem:[%s518] sm:$0xff] %v3860
        %3924 = vst [vmem:[%s518 + $0x8] sm:$0xff] %v3862
        %3925 = vst [vmem:[%s518 + $0x10] sm:$0xff] %v3864
        %3926 = vst [vmem:[%s518 + $0x18] sm:$0xff] %v3866
        %3927 = vst [vmem:[%s518 + $0x20] sm:$0xff] %v3868
        %3928 = vst [vmem:[%s518 + $0x28] sm:$0xff] %v3870
        %3929 = vst [vmem:[%s518 + $0x30] sm:$0xff] %v3872
        %3930 = vst [vmem:[%s518 + $0x38] sm:$0xff] %v3874
        %3931 = vst [vmem:[%s518 + $0x40] sm:$0xff] %v3876
        %3932 = vst [vmem:[%s518 + $0x48] sm:$0xff] %v3878
        %3933 = vst [vmem:[%s518 + $0x50] sm:$0xff] %v3880
        %3934 = vst [vmem:[%s518 + $0x58] sm:$0xff] %v3882
        %3935 = vst [vmem:[%s518 + $0x60] sm:$0xff] %v3884
        %3936 = vst [vmem:[%s518 + $0x68] sm:$0xff] %v3886
        %3937 = vst [vmem:[%s518 + $0x70] sm:$0xff] %v3888
        %3938 = vst [vmem:[%s518 + $0x78] sm:$0xff] %v3890
        %3939 = vst [vmem:[%s518 + $0x80] sm:$0xff] %v3892
        %3940 = vst [vmem:[%s518 + $0x88] sm:$0xff] %v3894
        %3941 = vst [vmem:[%s518 + $0x90] sm:$0xff] %v3896
        %3942 = vst [vmem:[%s518 + $0x98] sm:$0xff] %v3898
        %3943 = vst [vmem:[%s518 + $0xa0] sm:$0xff] %v3900
        %3944 = vst [vmem:[%s518 + $0xa8] sm:$0xff] %v3902
        %3945 = vst [vmem:[%s518 + $0xb0] sm:$0xff] %v3904
        %3946 = vst [vmem:[%s518 + $0xb8] sm:$0xff] %v3906
        %3947 = vst [vmem:[%s518 + $0xc0] sm:$0xff] %v3908
        %3948 = vst [vmem:[%s518 + $0xc8] sm:$0xff] %v3910
        %3949 = vst [vmem:[%s518 + $0xd0] sm:$0xff] %v3912
        %3950 = vst [vmem:[%s518 + $0xd8] sm:$0xff] %v3914
        %3951 = vst [vmem:[%s518 + $0xe0] sm:$0xff] %v3916
        %3952 = vst [vmem:[%s518 + $0xe8] sm:$0xff] %v3918
        %3953 = vst [vmem:[%s518 + $0xf0] sm:$0xff] %v3920
        %3954 = vst [vmem:[%s518 + $0xf8] sm:$0xff] %v3922
        %s3955 = sand.u32 %s297, 1
        %s3956 = scalar_lea.sflag [#allocation4], %s3955
        %s3957 = sand.u32 %s297, 1
        %s3958 = smul.addr %s3957, 256
        %s3959 = scalar_lea.vmem [#allocation14], %s3958
        // Predicated region
        $region97: #{tpu_custom_call.1} parent=67 // pred_check
          %p3960 = pneg %p307
        $region98: #{tpu_custom_call.1} parent=67 // pred_check_branch
          %3962 = sbr.rel (%p3960) target = $region100
        $region99: #{tpu_custom_call.1} parent=67 // pred_region
          %s3963 = smul.u32 32, %s32
          %s3965 = ssub.s32 4096, 4096
          %3966 = vsyncadd %s3956, %s3965
          %s3967 = smul.addr %s3963, 128
          %s3968 = scalar_lea.hbm %s12, %s3967
          %s3969 = sshll.u32 %s3959, 4
          %s3970 = int_to_ptr.vmem [resolvable:$true] %s3969
          %3975 = dma.vmem_to_hbm [thread:$0]  %s3970, 4096, %s3968, %s3956, 128, 128, 8
        $region100: #{tpu_custom_call.1} parent=67 // pred_fallthru
          _
      $region68: #{tpu_custom_call.1} parent=5 // pred_fallthru
        _
      %p3976 = scmp.le.s32.totalorder 2, %s27
      // Predicated region
      $region101: #{tpu_custom_call.1} parent=5 // pred_check
        %p3977 = pneg %p3976
      $region102: #{tpu_custom_call.1} parent=5 // pred_check_branch
        %3979 = sbr.rel (%p3977) target = $region104
      $region103: #{tpu_custom_call.1} parent=5 // pred_region
        %s3980 = ssub.s32 %s27, 2
        // Predicated region
        $region105: #{tpu_custom_call.1} parent=103 // pred_check
          %p3981 = pneg %p313
        $region106: #{tpu_custom_call.1} parent=103 // pred_check_branch
          %3983 = sbr.rel (%p3981) target = $region108
        $region107: #{tpu_custom_call.1} parent=103 // pred_region
          %s3984 = sand.u32 %s298, 1
          %s3985 = scalar_lea.sflag [#allocation4], %s3984
          %s3986 = sand.u32 %s298, 1
          %s3987 = smul.addr %s3986, 256
          %s3988 = scalar_lea.vmem [#allocation14], %s3987
          %3989 = dma.done %s3985, 4096
        $region108: #{tpu_custom_call.1} parent=103 // pred_fallthru
          _
      $region104: #{tpu_custom_call.1} parent=5 // pred_fallthru
        _
    $region6: #{tpu_custom_call.1} parent=1 // loop_footer
      %s31 = sadd.s32 1, %s27
    $region7: #{tpu_custom_call.1} parent=1 // loop_footer_branch
      %26 = sbr.rel target = $region3
    $region8: #{tpu_custom_call.1} parent=1 // loop_exit
      _
    %3990 = vsyncpa [#allocation3], 1
    %s3991 = scalar_lea.sflag [#allocation3], 1
    %3992 = vsyncpa %s3991, 1
    %3993 = vsyncpa [#allocation6], 1
    %3994 = vsyncpa [#allocation9], 1
    %3995 = vsyncpa [#allocation12], 1
    %3996 = vsyncpa [#allocation4], 1
    %s3997 = scalar_lea.sflag [#allocation4], 1
    %3998 = vsyncpa %s3997, 1

</llo_original>
